<compile_context>
chip_gen: v5e
topology: v5e:2x2
jax: 0.10.0
libtpu: 0.0.40
codegen_flags: <defaults>
</compile_context>

<pallas_src>
import functools

import jax
import jax.numpy as jnp
from jax import lax
from jax.experimental import pallas as pl
from jax.experimental.pallas import tpu as pltpu

EPS = 1e-5


def _instance_norm(y, eps):
    """Per-channel InstanceNorm over spatial rows (axis 0); two-pass, f32."""
    inv_n = 1.0 / y.shape[0]
    mean = jnp.sum(y, axis=0, keepdims=True) * inv_n
    d = y - mean
    var = jnp.sum(d * d, axis=0, keepdims=True) * inv_n
    return d * lax.rsqrt(var + eps)


# ---------------------------------------------------------------------------
# Fused Pallas kernel (one sample per grid step)
# ---------------------------------------------------------------------------
def _bottleneck_kernel(*refs, H, W, stride, proj, eps):
    # Static argument list depends on (proj, stride); unpack accordingly.
    x_ref, w1_ref, w2_ref, w3_ref = refs[:4]
    i = 4
    ws_ref = None
    sel_ref = None
    if proj:
        ws_ref = refs[i]; i += 1
    if stride != 1:
        sel_ref = refs[i]; i += 1
    o_ref, y1p_ref = refs[i], refs[i + 1]

    f32, bf16 = jnp.float32, jnp.bfloat16
    L = H * W
    Cp = w1_ref.shape[1]
    Ho, Wo = H // stride, W // stride

    x = x_ref[0]                                              # (L, Cin)

    # ---- conv1 (1x1) + InstanceNorm + ReLU (K = Cin is tiny; keep f32) -----
    y1 = jnp.dot(x, w1_ref[...], preferred_element_type=f32)  # (L, Cp) f32
    y1 = jnp.maximum(_instance_norm(y1, eps), 0.0)

    # ---- zero-padded conv1 output -> persistent VMEM scratch ---------------
    y1p_ref[...] = jnp.zeros_like(y1p_ref)
    y1p_ref[1:H + 1, 1:W + 1, :] = y1.reshape(H, W, Cp)
    y1p = y1p_ref[...].astype(bf16)                           # (H+2, W+2, Cp)

    # ---- conv2 (3x3, pad=1, stride) as ONE deep-K im2col matmul ------------
    if stride == 1:
        taps = [y1p[dh:dh + H, dw:dw + W, :].reshape(L, Cp)
                for dh in range(3) for dw in range(3)]
    else:
        # stride == 2: fold the H-direction stride into the taps for free via
        # a leading-dim reshape (row 2*oh + dh); halves conv2 FLOPs.
        y1pr = y1p.reshape((H + 2) // 2, 2, W + 2, Cp)
        rows = (y1pr[0:Ho, 0], y1pr[0:Ho, 1], y1pr[1:Ho + 1, 0])   # dh = 0,1,2
        taps = [rows[dh][:, dw:dw + W, :].reshape(Ho * W, Cp)
                for dh in range(3) for dw in range(3)]
    slab = jnp.concatenate(taps, axis=1)                      # (M, 9*Cp) bf16
    z = jnp.dot(slab, w2_ref[...], preferred_element_type=f32)  # (M, Cp) f32

    if stride != 1:
        # W-direction stride: tiny batched 0/1 selection matmul (K = W).
        z = jnp.einsum("hkw,hwc->hkc", sel_ref[...], z.reshape(Ho, W, Cp),
                       preferred_element_type=f32).reshape(Ho * Wo, Cp)
    y2 = jnp.maximum(_instance_norm(z, eps), 0.0)             # (Lo, Cp)

    # ---- conv3 (1x1) + InstanceNorm (bf16 operands, f32 accumulate) --------
    y3 = _instance_norm(
        jnp.dot(y2.astype(bf16), w3_ref[...], preferred_element_type=f32), eps)

    # ---- shortcut -----------------------------------------------------------
    if proj:
        s_full = jnp.dot(x, ws_ref[...], preferred_element_type=f32)   # (L, Cp)
        if stride != 1:
            s_hw = s_full.reshape(Ho, stride, W, Cp)[:, 0]             # (Ho, W, Cp)
            sc = jnp.einsum("hkw,hwc->hkc", sel_ref[...], s_hw,
                            preferred_element_type=f32).reshape(Ho * Wo, Cp)
        else:
            sc = s_full
        sc = _instance_norm(sc, eps)
    else:
        # Identity shortcut: plain cast + channel zero-pad (no MXU pass).
        Cin = x.shape[1]
        sc = x.astype(f32)
        if Cin < Cp:
            sc = jnp.concatenate([sc, jnp.zeros((L, Cp - Cin), f32)], axis=1)

    # ---- residual add + ReLU, lane-dense (Lo, 128) store --------------------
    o_ref[0] = jnp.maximum(y3 + sc, 0.0).astype(o_ref.dtype)


# ---------------------------------------------------------------------------
# Wrapper: weight packing (tiny, constant) + single pallas_call
# ---------------------------------------------------------------------------
def _round_up(x, m):
    return (x + m - 1) // m * m


def bottleneck_forward(x_nchw, params, stride, eps=EPS):
    """Pallas implementation of Bottleneck.forward. Input/output are NCHW."""
    N, Cin, H, W = x_nchw.shape
    planes = params["w1"].shape[0]
    Cexp = params["w3"].shape[0]
    # TODO(synk): general strides / odd spatial sizes would need a different
    # subsample scheme; ResNet bottlenecks use stride in {1, 2} on even dims.
    assert stride in (1, 2), "only stride 1 or 2 supported"
    assert H % stride == 0 and W % stride == 0
    Ho, Wo = H // stride, W // stride
    L, Lo = H * W, Ho * Wo
    Cp = max(128, _round_up(max(Cin, planes, Cexp), 128))     # lane-dense pad
    in_dt = x_nchw.dtype
    f32, bf16 = jnp.float32, jnp.bfloat16

    # ---- conv weights -> zero-padded matmul form.  Padded channels stay
    # exactly zero through IN/ReLU, so the pad is purely a layout device. ----
    w1 = params["w1"].reshape(planes, Cin).T
    w1p = jnp.zeros((Cin, Cp), f32).at[:, :planes].set(w1.astype(f32))

    w2 = jnp.transpose(params["w2"], (2, 3, 1, 0)).reshape(9, planes, planes)
    w2p = jnp.zeros((9, Cp, Cp), bf16).at[:, :planes, :planes].set(
        w2.astype(bf16)).reshape(9 * Cp, Cp)                  # im2col weight slab

    w3 = params["w3"].reshape(Cexp, planes).T
    w3p = jnp.zeros((Cp, Cp), bf16).at[:planes, :Cexp].set(w3.astype(bf16))

    proj = (stride != 1) or (Cin != Cexp)

    # Input pre-transposed ONCE (amortized over the batch) to (N, L, Cin) so the
    # in-kernel matmuls contract on the minor dim (no per-step transpose).
    x_t = jnp.transpose(x_nchw, (0, 2, 3, 1)).reshape(N, L, Cin)

    args = [x_t, w1p, w2p, w3p]
    in_specs = [
        pl.BlockSpec((1, L, Cin), lambda n: (n, 0, 0)),
        pl.BlockSpec((Cin, Cp), lambda n: (0, 0)),
        pl.BlockSpec((9 * Cp, Cp), lambda n: (0, 0)),
        pl.BlockSpec((Cp, Cp), lambda n: (0, 0)),
    ]
    if proj:
        ws = params["ws"].reshape(Cexp, Cin).T
        wsp = jnp.zeros((Cin, Cp), f32).at[:, :Cexp].set(ws.astype(f32))
        args.append(wsp)
        in_specs.append(pl.BlockSpec((Cin, Cp), lambda n: (0, 0)))
    if stride != 1:
        # (Ho, Wo, W) 0/1 selector picking column stride*k (broadcast over rows).
        sel = (jnp.arange(W, dtype=jnp.int32)[None, :] ==
               stride * jnp.arange(Wo, dtype=jnp.int32)[:, None]).astype(f32)
        sel_b = jnp.broadcast_to(sel[None], (Ho, Wo, W))
        args.append(sel_b)
        in_specs.append(pl.BlockSpec((Ho, Wo, W), lambda n: (0, 0, 0)))

    kern = functools.partial(_bottleneck_kernel, H=H, W=W, stride=stride,
                             proj=proj, eps=eps)
    out_p = pl.pallas_call(
        kern,
        out_shape=jax.ShapeDtypeStruct((N, Lo, Cp), in_dt),
        grid=(N,),
        in_specs=in_specs,
        out_specs=pl.BlockSpec((1, Lo, Cp), lambda n: (n, 0, 0)),
        scratch_shapes=[pltpu.VMEM((H + 2, W + 2, Cp), f32)],
        compiler_params=pltpu.CompilerParams(
            dimension_semantics=("parallel",),
            vmem_limit_bytes=64 * 1024 * 1024),
    )(*args)

    out = out_p[:, :, :Cexp]                                  # drop channel pad
    return jnp.transpose(out, (0, 2, 1)).reshape(N, Cexp, Ho, Wo)


# ---------------------------------------------------------------------------
# Pure-JAX f32 reference (matches PyTorch semantics) for verification
# ---------------------------------------------------------------------------
def _ref_instance_norm(y_nhwc, eps=EPS):
    mean = jnp.mean(y_nhwc, axis=(1, 2), keepdims=True)
    var = jnp.mean((y_nhwc - mean) ** 2, axis=(1, 2), keepdims=True)
    return (y_nhwc - mean) / jnp.sqrt(var + eps)


def _ref_conv(x_nhwc, w_oihw, stride=1, pad=0):
    return lax.conv_general_dilated(
        x_nhwc, w_oihw, (stride, stride), [(pad, pad), (pad, pad)],
        dimension_numbers=("NHWC", "OIHW", "NHWC"))


def bottleneck_reference(x_nchw, params, stride):
    Cin = x_nchw.shape[1]
    Cexp = params["w3"].shape[0]
    x = jnp.transpose(x_nchw, (0, 2, 3, 1))
    o = jax.nn.relu(_ref_instance_norm(_ref_conv(x, params["w1"])))
    o = jax.nn.relu(_ref_instance_norm(_ref_conv(o, params["w2"], stride, 1)))
    o = _ref_instance_norm(_ref_conv(o, params["w3"]))
    if stride != 1 or Cin != Cexp:
        sc = _ref_instance_norm(_ref_conv(x, params["ws"], stride))
    else:
        sc = x
    o = jax.nn.relu(o + sc)
    return jnp.transpose(o, (0, 3, 1, 2))


# ---------------------------------------------------------------------------
if __name__ == "__main__":
    # Shapes consistent with the module: batch=2, in_planes=4, planes=4,
    # spatial 16x16, stride=2  ->  shortcut is conv1x1(stride=2) + InstanceNorm.
    N, in_planes, planes, H, W = 2, 4, 4, 16, 16
    stride = 2
    expansion = 4

    key = jax.random.PRNGKey(0)
    k1, k2, k3, k4, kx = jax.random.split(key, 5)

    params = {
        "w1": 0.2 * jax.random.normal(k1, (planes, in_planes, 1, 1), jnp.float32),
        "w2": 0.2 * jax.random.normal(k2, (planes, planes, 3, 3), jnp.float32),
        "w3": 0.2 * jax.random.normal(k3, (expansion * planes, planes, 1, 1), jnp.float32),
        "ws": 0.2 * jax.random.normal(k4, (expansion * planes, in_planes, 1, 1), jnp.float32),
    }
    x = jax.random.normal(kx, (N, in_planes, H, W), jnp.float32)

    out = jax.block_until_ready(bottleneck_forward(x, params, stride))
    ref = jax.block_until_ready(bottleneck_reference(x, params, stride))

    assert out.shape == (N, expansion * planes, H // stride, W // stride), out.shape
    assert bool(jnp.all(jnp.isfinite(out)))
    # conv2/conv3 feed the MXU bf16 operands (f32 accumulation), so compare to
    # the pure-f32 reference with a quantization-aware tolerance.
    max_err = float(jnp.max(jnp.abs(out - ref)))
    assert jnp.allclose(out, ref, atol=5e-2, rtol=5e-2), max_err
    print("KERNEL_OK")
</pallas_src>

<mosaic_0001>
module attributes {stable_mosaic.version = 11 : i64} {
  func.func @_bottleneck_kernel(%arg0: i32, %arg1: memref<1x256x4xf32, #tpu.memory_space<vmem>>, %arg2: memref<4x128xf32, #tpu.memory_space<vmem>>, %arg3: memref<1152x128xbf16, #tpu.memory_space<vmem>>, %arg4: memref<128x128xbf16, #tpu.memory_space<vmem>>, %arg5: memref<4x128xf32, #tpu.memory_space<vmem>>, %arg6: memref<8x8x16xf32, #tpu.memory_space<vmem>>, %arg7: memref<1x64x128xf32, #tpu.memory_space<vmem>>, %arg8: memref<18x18x128xf32, #tpu.memory_space<vmem>>) attributes {dimension_semantics = [#tpu.dimension_semantics<parallel>], iteration_bounds = array<i64: 2>, scalar_prefetch = 0 : i64, scratch_operands = 1 : i64, tpu.core_type = #tpu.core_type<tc>, window_params = [{transform_indices = @transform_0, window_bounds = array<i64: 1, 256, 4>}, {pipeline_mode = #tpu.pipeline_mode<synchronous>, transform_indices = @transform_1, window_bounds = array<i64: 4, 128>}, {pipeline_mode = #tpu.pipeline_mode<synchronous>, transform_indices = @transform_2, window_bounds = array<i64: 1152, 128>}, {pipeline_mode = #tpu.pipeline_mode<synchronous>, transform_indices = @transform_3, window_bounds = array<i64: 128, 128>}, {pipeline_mode = #tpu.pipeline_mode<synchronous>, transform_indices = @transform_4, window_bounds = array<i64: 4, 128>}, {pipeline_mode = #tpu.pipeline_mode<synchronous>, transform_indices = @transform_5, window_bounds = array<i64: 8, 8, 16>}, {transform_indices = @transform_6, window_bounds = array<i64: 1, 64, 128>}]} {
    %c0 = arith.constant 0 : index
    %c0_0 = arith.constant 0 : index
    %c0_1 = arith.constant 0 : index
    %0 = vector.load %arg1[%c0, %c0_0, %c0_1] : memref<1x256x4xf32, #tpu.memory_space<vmem>>, vector<1x256x4xf32>
    %1 = vector.shape_cast %0 : vector<1x256x4xf32> to vector<256x4xf32>
    %c0_2 = arith.constant 0 : index
    %c0_3 = arith.constant 0 : index
    %2 = vector.load %arg2[%c0_2, %c0_3] : memref<4x128xf32, #tpu.memory_space<vmem>>, vector<4x128xf32>
    %cst = arith.constant dense<0.000000e+00> : vector<256x128xf32>
    %3 = tpu.matmul %1, %2, %cst {dimension_numbers = #tpu.dot_dimension_numbers<[1], [0], [0], [1], [0, 0, 1, 1], [], []>} : vector<256x4xf32>, vector<4x128xf32>, vector<256x128xf32> -> vector<256x128xf32>
    %cst_4 = arith.constant dense<0.000000e+00> : vector<128xf32>
    %4 = vector.multi_reduction <add>, %3, %cst_4 [0] : vector<256x128xf32> to vector<128xf32>
    %5 = vector.shape_cast %4 : vector<128xf32> to vector<1x128xf32>
    %cst_5 = arith.constant 3.906250e-03 : f32
    %6 = vector.broadcast %cst_5 : f32 to vector<1x128xf32>
    %7 = arith.mulf %5, %6 : vector<1x128xf32>
    %8 = vector.broadcast %7 : vector<1x128xf32> to vector<256x128xf32>
    %9 = arith.subf %3, %8 : vector<256x128xf32>
    %10 = arith.mulf %9, %9 : vector<256x128xf32>
    %cst_6 = arith.constant dense<0.000000e+00> : vector<128xf32>
    %11 = vector.multi_reduction <add>, %10, %cst_6 [0] : vector<256x128xf32> to vector<128xf32>
    %12 = vector.shape_cast %11 : vector<128xf32> to vector<1x128xf32>
    %cst_7 = arith.constant 3.906250e-03 : f32
    %13 = vector.broadcast %cst_7 : f32 to vector<1x128xf32>
    %14 = arith.mulf %12, %13 : vector<1x128xf32>
    %cst_8 = arith.constant 9.99999974E-6 : f32
    %15 = vector.broadcast %cst_8 : f32 to vector<1x128xf32>
    %16 = arith.addf %14, %15 : vector<1x128xf32>
    %17 = math.rsqrt %16 : vector<1x128xf32>
    %18 = vector.broadcast %17 : vector<1x128xf32> to vector<256x128xf32>
    %19 = arith.mulf %9, %18 : vector<256x128xf32>
    %cst_9 = arith.constant 0.000000e+00 : f32
    %20 = vector.broadcast %cst_9 : f32 to vector<256x128xf32>
    %21 = arith.maximumf %19, %20 : vector<256x128xf32>
    %cst_10 = arith.constant 0.000000e+00 : f32
    %22 = vector.broadcast %cst_10 : f32 to vector<18x18x128xf32>
    %c0_11 = arith.constant 0 : index
    %c0_12 = arith.constant 0 : index
    %c0_13 = arith.constant 0 : index
    %23 = vector.load %arg8[%c0_11, %c0_12, %c0_13] : memref<18x18x128xf32, #tpu.memory_space<vmem>>, vector<18x18x128xf32>
    tpu.vector_store %arg8[%c0_11, %c0_12, %c0_13], %22 {strides = array<i32>} : memref<18x18x128xf32, #tpu.memory_space<vmem>>, vector<18x18x128xf32>,
    %24 = vector.shape_cast %21 : vector<256x128xf32> to vector<16x16x128xf32>
    %c1 = arith.constant 1 : index
    %c1_14 = arith.constant 1 : index
    %c0_15 = arith.constant 0 : index
    %25 = vector.load %arg8[%c1, %c1_14, %c0_15] : memref<18x18x128xf32, #tpu.memory_space<vmem>>, vector<16x16x128xf32>
    tpu.vector_store %arg8[%c1, %c1_14, %c0_15], %24 {strides = array<i32>} : memref<18x18x128xf32, #tpu.memory_space<vmem>>, vector<16x16x128xf32>,
    %c0_16 = arith.constant 0 : index
    %c0_17 = arith.constant 0 : index
    %c0_18 = arith.constant 0 : index
    %26 = vector.load %arg8[%c0_16, %c0_17, %c0_18] : memref<18x18x128xf32, #tpu.memory_space<vmem>>, vector<18x18x128xf32>
    %27 = arith.truncf %26 : vector<18x18x128xf32> to vector<18x18x128xbf16>
    %28 = vector.shape_cast %27 : vector<18x18x128xbf16> to vector<9x2x18x128xbf16>
    %29 = vector.extract_strided_slice %28 {offsets = [0, 0, 0, 0], sizes = [8, 1, 18, 128], strides = [1, 1, 1, 1]} : vector<9x2x18x128xbf16> to vector<8x1x18x128xbf16>
    %30 = vector.shape_cast %29 : vector<8x1x18x128xbf16> to vector<8x18x128xbf16>
    %31 = vector.extract_strided_slice %28 {offsets = [0, 1, 0, 0], sizes = [8, 1, 18, 128], strides = [1, 1, 1, 1]} : vector<9x2x18x128xbf16> to vector<8x1x18x128xbf16>
    %32 = vector.shape_cast %31 : vector<8x1x18x128xbf16> to vector<8x18x128xbf16>
    %33 = vector.extract_strided_slice %28 {offsets = [1, 0, 0, 0], sizes = [8, 1, 18, 128], strides = [1, 1, 1, 1]} : vector<9x2x18x128xbf16> to vector<8x1x18x128xbf16>
    %34 = vector.shape_cast %33 : vector<8x1x18x128xbf16> to vector<8x18x128xbf16>
    %35 = vector.extract_strided_slice %30 {offsets = [0, 0, 0], sizes = [8, 16, 128], strides = [1, 1, 1]} : vector<8x18x128xbf16> to vector<8x16x128xbf16>
    %36 = vector.shape_cast %35 : vector<8x16x128xbf16> to vector<128x128xbf16>
    %37 = vector.extract_strided_slice %30 {offsets = [0, 1, 0], sizes = [8, 16, 128], strides = [1, 1, 1]} : vector<8x18x128xbf16> to vector<8x16x128xbf16>
    %38 = vector.shape_cast %37 : vector<8x16x128xbf16> to vector<128x128xbf16>
    %39 = vector.extract_strided_slice %30 {offsets = [0, 2, 0], sizes = [8, 16, 128], strides = [1, 1, 1]} : vector<8x18x128xbf16> to vector<8x16x128xbf16>
    %40 = vector.shape_cast %39 : vector<8x16x128xbf16> to vector<128x128xbf16>
    %41 = vector.extract_strided_slice %32 {offsets = [0, 0, 0], sizes = [8, 16, 128], strides = [1, 1, 1]} : vector<8x18x128xbf16> to vector<8x16x128xbf16>
    %42 = vector.shape_cast %41 : vector<8x16x128xbf16> to vector<128x128xbf16>
    %43 = vector.extract_strided_slice %32 {offsets = [0, 1, 0], sizes = [8, 16, 128], strides = [1, 1, 1]} : vector<8x18x128xbf16> to vector<8x16x128xbf16>
    %44 = vector.shape_cast %43 : vector<8x16x128xbf16> to vector<128x128xbf16>
    %45 = vector.extract_strided_slice %32 {offsets = [0, 2, 0], sizes = [8, 16, 128], strides = [1, 1, 1]} : vector<8x18x128xbf16> to vector<8x16x128xbf16>
    %46 = vector.shape_cast %45 : vector<8x16x128xbf16> to vector<128x128xbf16>
    %47 = vector.extract_strided_slice %34 {offsets = [0, 0, 0], sizes = [8, 16, 128], strides = [1, 1, 1]} : vector<8x18x128xbf16> to vector<8x16x128xbf16>
    %48 = vector.shape_cast %47 : vector<8x16x128xbf16> to vector<128x128xbf16>
    %49 = vector.extract_strided_slice %34 {offsets = [0, 1, 0], sizes = [8, 16, 128], strides = [1, 1, 1]} : vector<8x18x128xbf16> to vector<8x16x128xbf16>
    %50 = vector.shape_cast %49 : vector<8x16x128xbf16> to vector<128x128xbf16>
    %51 = vector.extract_strided_slice %34 {offsets = [0, 2, 0], sizes = [8, 16, 128], strides = [1, 1, 1]} : vector<8x18x128xbf16> to vector<8x16x128xbf16>
    %52 = vector.shape_cast %51 : vector<8x16x128xbf16> to vector<128x128xbf16>
    %53 = tpu.concatenate %36, %38, %40, %42, %44, %46, %48, %50, %52 in 1 : vector<128x128xbf16>, vector<128x128xbf16>, vector<128x128xbf16>, vector<128x128xbf16>, vector<128x128xbf16>, vector<128x128xbf16>, vector<128x128xbf16>, vector<128x128xbf16>, vector<128x128xbf16> -> vector<128x1152xbf16>
    %c0_19 = arith.constant 0 : index
    %c0_20 = arith.constant 0 : index
    %54 = vector.load %arg3[%c0_19, %c0_20] : memref<1152x128xbf16, #tpu.memory_space<vmem>>, vector<1152x128xbf16>
    %cst_21 = arith.constant dense<0.000000e+00> : vector<128x128xf32>
    %55 = tpu.matmul %53, %54, %cst_21 {dimension_numbers = #tpu.dot_dimension_numbers<[1], [0], [0], [1], [0, 0, 1, 1], [], []>} : vector<128x1152xbf16>, vector<1152x128xbf16>, vector<128x128xf32> -> vector<128x128xf32>
    %c0_22 = arith.constant 0 : index
    %c0_23 = arith.constant 0 : index
    %c0_24 = arith.constant 0 : index
    %56 = vector.load %arg6[%c0_22, %c0_23, %c0_24] : memref<8x8x16xf32, #tpu.memory_space<vmem>>, vector<8x8x16xf32>
    %57 = vector.shape_cast %55 : vector<128x128xf32> to vector<8x16x128xf32>
    "tpu.trace_start"() <{level = 10 : i32, message = "hkw,hwc->hkc"}> : () -> ()
    %cst_25 = arith.constant dense<0.000000e+00> : vector<8x8x128xf32>
    %58 = tpu.matmul %56, %57, %cst_25 {dimension_numbers = #tpu.dot_dimension_numbers<[2], [1], [1], [2], [0, 0, 0, 1, 1, 2], [0], [0]>} : vector<8x8x16xf32>, vector<8x16x128xf32>, vector<8x8x128xf32> -> vector<8x8x128xf32>
    "tpu.trace_stop"() : () -> ()
    %59 = vector.shape_cast %58 : vector<8x8x128xf32> to vector<64x128xf32>
    %cst_26 = arith.constant dense<0.000000e+00> : vector<128xf32>
    %60 = vector.multi_reduction <add>, %59, %cst_26 [0] : vector<64x128xf32> to vector<128xf32>
    %61 = vector.shape_cast %60 : vector<128xf32> to vector<1x128xf32>
    %cst_27 = arith.constant 1.562500e-02 : f32
    %62 = vector.broadcast %cst_27 : f32 to vector<1x128xf32>
    %63 = arith.mulf %61, %62 : vector<1x128xf32>
    %64 = vector.broadcast %63 : vector<1x128xf32> to vector<64x128xf32>
    %65 = arith.subf %59, %64 : vector<64x128xf32>
    %66 = arith.mulf %65, %65 : vector<64x128xf32>
    %cst_28 = arith.constant dense<0.000000e+00> : vector<128xf32>
    %67 = vector.multi_reduction <add>, %66, %cst_28 [0] : vector<64x128xf32> to vector<128xf32>
    %68 = vector.shape_cast %67 : vector<128xf32> to vector<1x128xf32>
    %cst_29 = arith.constant 1.562500e-02 : f32
    %69 = vector.broadcast %cst_29 : f32 to vector<1x128xf32>
    %70 = arith.mulf %68, %69 : vector<1x128xf32>
    %cst_30 = arith.constant 9.99999974E-6 : f32
    %71 = vector.broadcast %cst_30 : f32 to vector<1x128xf32>
    %72 = arith.addf %70, %71 : vector<1x128xf32>
    %73 = math.rsqrt %72 : vector<1x128xf32>
    %74 = vector.broadcast %73 : vector<1x128xf32> to vector<64x128xf32>
    %75 = arith.mulf %65, %74 : vector<64x128xf32>
    %cst_31 = arith.constant 0.000000e+00 : f32
    %76 = vector.broadcast %cst_31 : f32 to vector<64x128xf32>
    %77 = arith.maximumf %75, %76 : vector<64x128xf32>
    %78 = arith.truncf %77 : vector<64x128xf32> to vector<64x128xbf16>
    %c0_32 = arith.constant 0 : index
    %c0_33 = arith.constant 0 : index
    %79 = vector.load %arg4[%c0_32, %c0_33] : memref<128x128xbf16, #tpu.memory_space<vmem>>, vector<128x128xbf16>
    %cst_34 = arith.constant dense<0.000000e+00> : vector<64x128xf32>
    %80 = tpu.matmul %78, %79, %cst_34 {dimension_numbers = #tpu.dot_dimension_numbers<[1], [0], [0], [1], [0, 0, 1, 1], [], []>} : vector<64x128xbf16>, vector<128x128xbf16>, vector<64x128xf32> -> vector<64x128xf32>
    %cst_35 = arith.constant dense<0.000000e+00> : vector<128xf32>
    %81 = vector.multi_reduction <add>, %80, %cst_35 [0] : vector<64x128xf32> to vector<128xf32>
    %82 = vector.shape_cast %81 : vector<128xf32> to vector<1x128xf32>
    %cst_36 = arith.constant 1.562500e-02 : f32
    %83 = vector.broadcast %cst_36 : f32 to vector<1x128xf32>
    %84 = arith.mulf %82, %83 : vector<1x128xf32>
    %85 = vector.broadcast %84 : vector<1x128xf32> to vector<64x128xf32>
    %86 = arith.subf %80, %85 : vector<64x128xf32>
    %87 = arith.mulf %86, %86 : vector<64x128xf32>
    %cst_37 = arith.constant dense<0.000000e+00> : vector<128xf32>
    %88 = vector.multi_reduction <add>, %87, %cst_37 [0] : vector<64x128xf32> to vector<128xf32>
    %89 = vector.shape_cast %88 : vector<128xf32> to vector<1x128xf32>
    %cst_38 = arith.constant 1.562500e-02 : f32
    %90 = vector.broadcast %cst_38 : f32 to vector<1x128xf32>
    %91 = arith.mulf %89, %90 : vector<1x128xf32>
    %cst_39 = arith.constant 9.99999974E-6 : f32
    %92 = vector.broadcast %cst_39 : f32 to vector<1x128xf32>
    %93 = arith.addf %91, %92 : vector<1x128xf32>
    %94 = math.rsqrt %93 : vector<1x128xf32>
    %95 = vector.broadcast %94 : vector<1x128xf32> to vector<64x128xf32>
    %96 = arith.mulf %86, %95 : vector<64x128xf32>
    %c0_40 = arith.constant 0 : index
    %c0_41 = arith.constant 0 : index
    %97 = vector.load %arg5[%c0_40, %c0_41] : memref<4x128xf32, #tpu.memory_space<vmem>>, vector<4x128xf32>
    %cst_42 = arith.constant dense<0.000000e+00> : vector<256x128xf32>
    %98 = tpu.matmul %1, %97, %cst_42 {dimension_numbers = #tpu.dot_dimension_numbers<[1], [0], [0], [1], [0, 0, 1, 1], [], []>} : vector<256x4xf32>, vector<4x128xf32>, vector<256x128xf32> -> vector<256x128xf32>
    %99 = vector.shape_cast %98 : vector<256x128xf32> to vector<8x2x16x128xf32>
    %100 = vector.extract_strided_slice %99 {offsets = [0, 0, 0, 0], sizes = [8, 1, 16, 128], strides = [1, 1, 1, 1]} : vector<8x2x16x128xf32> to vector<8x1x16x128xf32>
    %101 = vector.shape_cast %100 : vector<8x1x16x128xf32> to vector<8x16x128xf32>
    %c0_43 = arith.constant 0 : index
    %c0_44 = arith.constant 0 : index
    %c0_45 = arith.constant 0 : index
    %102 = vector.load %arg6[%c0_43, %c0_44, %c0_45] : memref<8x8x16xf32, #tpu.memory_space<vmem>>, vector<8x8x16xf32>
    "tpu.trace_start"() <{level = 10 : i32, message = "hkw,hwc->hkc"}> : () -> ()
    %cst_46 = arith.constant dense<0.000000e+00> : vector<8x8x128xf32>
    %103 = tpu.matmul %102, %101, %cst_46 {dimension_numbers = #tpu.dot_dimension_numbers<[2], [1], [1], [2], [0, 0, 0, 1, 1, 2], [0], [0]>} : vector<8x8x16xf32>, vector<8x16x128xf32>, vector<8x8x128xf32> -> vector<8x8x128xf32>
    "tpu.trace_stop"() : () -> ()
    %104 = vector.shape_cast %103 : vector<8x8x128xf32> to vector<64x128xf32>
    %cst_47 = arith.constant dense<0.000000e+00> : vector<128xf32>
    %105 = vector.multi_reduction <add>, %104, %cst_47 [0] : vector<64x128xf32> to vector<128xf32>
    %106 = vector.shape_cast %105 : vector<128xf32> to vector<1x128xf32>
    %cst_48 = arith.constant 1.562500e-02 : f32
    %107 = vector.broadcast %cst_48 : f32 to vector<1x128xf32>
    %108 = arith.mulf %106, %107 : vector<1x128xf32>
    %109 = vector.broadcast %108 : vector<1x128xf32> to vector<64x128xf32>
    %110 = arith.subf %104, %109 : vector<64x128xf32>
    %111 = arith.mulf %110, %110 : vector<64x128xf32>
    %cst_49 = arith.constant dense<0.000000e+00> : vector<128xf32>
    %112 = vector.multi_reduction <add>, %111, %cst_49 [0] : vector<64x128xf32> to vector<128xf32>
    %113 = vector.shape_cast %112 : vector<128xf32> to vector<1x128xf32>
    %cst_50 = arith.constant 1.562500e-02 : f32
    %114 = vector.broadcast %cst_50 : f32 to vector<1x128xf32>
    %115 = arith.mulf %113, %114 : vector<1x128xf32>
    %cst_51 = arith.constant 9.99999974E-6 : f32
    %116 = vector.broadcast %cst_51 : f32 to vector<1x128xf32>
    %117 = arith.addf %115, %116 : vector<1x128xf32>
    %118 = math.rsqrt %117 : vector<1x128xf32>
    %119 = vector.broadcast %118 : vector<1x128xf32> to vector<64x128xf32>
    %120 = arith.mulf %110, %119 : vector<64x128xf32>
    %121 = arith.addf %96, %120 : vector<64x128xf32>
    %cst_52 = arith.constant 0.000000e+00 : f32
    %122 = vector.broadcast %cst_52 : f32 to vector<64x128xf32>
    %123 = arith.maximumf %121, %122 : vector<64x128xf32>
    %c0_53 = arith.constant 0 : index
    %c0_54 = arith.constant 0 : index
    %c0_55 = arith.constant 0 : index
    %124 = vector.load %arg7[%c0_53, %c0_54, %c0_55] : memref<1x64x128xf32, #tpu.memory_space<vmem>>, vector<1x64x128xf32>
    %125 = vector.shape_cast %124 : vector<1x64x128xf32> to vector<64x128xf32>
    %126 = vector.shape_cast %123 : vector<64x128xf32> to vector<1x64x128xf32>
    tpu.vector_store %arg7[%c0_53, %c0_54, %c0_55], %126 {strides = array<i32>} : memref<1x64x128xf32, #tpu.memory_space<vmem>>, vector<1x64x128xf32>,
    return
  }
  func.func @transform_0(%arg0: i32) -> (i32, i32, i32) {
    %c0_i32 = arith.constant 0 : i32
    %c0_i32_0 = arith.constant 0 : i32
    %c0_i32_1 = arith.constant 0 : i32
    return %arg0, %c0_i32, %c0_i32_0 : i32, i32, i32
  }
  func.func @transform_1(%arg0: i32) -> (i32, i32) {
    %c0_i32 = arith.constant 0 : i32
    %c0_i32_0 = arith.constant 0 : i32
    %c0_i32_1 = arith.constant 0 : i32
    return %c0_i32, %c0_i32_0 : i32, i32
  }
  func.func @transform_2(%arg0: i32) -> (i32, i32) {
    %c0_i32 = arith.constant 0 : i32
    %c0_i32_0 = arith.constant 0 : i32
    %c0_i32_1 = arith.constant 0 : i32
    return %c0_i32, %c0_i32_0 : i32, i32
  }
  func.func @transform_3(%arg0: i32) -> (i32, i32) {
    %c0_i32 = arith.constant 0 : i32
    %c0_i32_0 = arith.constant 0 : i32
    %c0_i32_1 = arith.constant 0 : i32
    return %c0_i32, %c0_i32_0 : i32, i32
  }
  func.func @transform_4(%arg0: i32) -> (i32, i32) {
    %c0_i32 = arith.constant 0 : i32
    %c0_i32_0 = arith.constant 0 : i32
    %c0_i32_1 = arith.constant 0 : i32
    return %c0_i32, %c0_i32_0 : i32, i32
  }
  func.func @transform_5(%arg0: i32) -> (i32, i32, i32) {
    %c0_i32 = arith.constant 0 : i32
    %c0_i32_0 = arith.constant 0 : i32
    %c0_i32_1 = arith.constant 0 : i32
    %c0_i32_2 = arith.constant 0 : i32
    return %c0_i32, %c0_i32_0, %c0_i32_1 : i32, i32, i32
  }
  func.func @transform_6(%arg0: i32) -> (i32, i32, i32) {
    %c0_i32 = arith.constant 0 : i32
    %c0_i32_0 = arith.constant 0 : i32
    %c0_i32_1 = arith.constant 0 : i32
    return %arg0, %c0_i32, %c0_i32_0 : i32, i32, i32
  }
}

</mosaic_0001>

<llo_original>
// kernel: tpu_custom_call.1
$region0: #{tpu_custom_call.1}
  #allocation0 [shape = 'u32[]', space=smem, size = 0x4, offset = 0x4, fixed_abs, tag = 'smem constant byte address 0x4 - core index']
  #allocation1 [shape = 'u32[72,128]{1,0:T(1,128)}', space=vmem, size = 0x9000, scoped, tag = 'internal scratch']
  #allocation2 [shape = 'f32[18,18,128]{2,1,0:T(8,128)}', space=vmem, size = 0x36000, scoped, tag = 'scratch operand']
  %s0 = inlined_call_operand.vmem [shape: f32[2,256,4], index: 0, kind: input, shape index: {}]
  %s1 = inlined_call_operand.vmem [shape: f32[4,128], index: 1, kind: input, shape index: {}]
  %s2 = inlined_call_operand.hbm [shape: bf16[1152,128], index: 2, kind: input, shape index: {}]
  %s3 = inlined_call_operand.vmem [shape: bf16[128,128], index: 3, kind: input, shape index: {}]
  %s4 = inlined_call_operand.vmem [shape: f32[4,128], index: 4, kind: input, shape index: {}]
  %s5 = inlined_call_operand.vmem [shape: f32[8,8,16], index: 5, kind: input, shape index: {}]
  %s6 = inlined_call_operand.hbm [shape: f32[2,64,128], index: 6, kind: output, shape index: {}]
  %s7 = sld [smem:[#allocation0]]
  $region61: #{tpu_custom_call.1} parent=0
    _
  %s9 = ssub.s32 1, %s7
  %s10 = scalar_select 0, %s9, %s7
  $region1: #{tpu_custom_call.1} parent=0
    #allocation3 [shape = 'u8[294912]{0}', space=vmem, size = 0x48000, scoped, tag = 'input window, operand 2, single buffered']
    #allocation4 [shape = 's32[2]{0}', space=sflag, size = 0x8, scoped, tag = 'scoped memory for tpu_custom_call.1']
    #allocation5 [shape = 's32[2]{0}', space=sflag, size = 0x8, scoped, tag = 'scoped memory for tpu_custom_call.1']
    #allocation6 [shape = 'u8[65536]{0}', space=vmem, size = 0x10000, scoped, tag = 'output window, operand 0']
    %11 = vsyncpa [#allocation4], 0
    %12 = vsyncpa [#allocation5], 0
    %s13 = scalar_lea.sflag [#allocation5], 1
    %14 = vsyncpa %s13, 0
    loop: start=0, step=1, limit=4
    $region2: #{tpu_custom_call.1} parent=1 // loop_pre_header
      _
    $region3: #{tpu_custom_call.1} parent=1 // loop_header
      %s16 = sphi 0, %s20
      %p17 = scmp.ge.s32.totalorder %s16, 4
      %s26 = sphi 0, %s28
      %s29 = sphi 0, %s26
      %s30 = sphi 0, %s29
      %s46 = sphi 0, %s30
      %s50 = sphi 0, %s50
      %s52 = sphi 0, %s50
      %s53 = sphi 0, %s52
      %s67 = sphi 0, %s53
      %s71 = sphi 0, %s71
      %s73 = sphi 0, %s71
      %s74 = sphi 0, %s73
      %s88 = sphi 0, %s74
      %s92 = sphi 0, %s92
      %s94 = sphi 0, %s92
      %s95 = sphi 0, %s94
      %s109 = sphi 0, %s95
      %s113 = sphi 0, %s113
      %s115 = sphi 0, %s113
      %s116 = sphi 0, %s115
      %s130 = sphi 0, %s116
      %s134 = sphi 0, %s134
      %s136 = sphi 0, %s134
      %s137 = sphi 0, %s136
      %s151 = sphi 0, %s137
      %s157 = sphi 0, %s159
      %s160 = sphi 0, %s157
      %s161 = sphi 0, %s160
      %s177 = sphi 0, %s161
    $region4: #{tpu_custom_call.1} parent=1 // loop_header_branch
      %19 = sbr.rel (%p17) target = $region8
    $region5: #{tpu_custom_call.1} parent=1 // loop_body
      %s21 = ssub.s32 %s16, 1
      %s22 = ssub.s32 %s16, 2
      %s23 = sadd.s32 %s16, 1
      %s24 = ssub.s32 %s16, %s23
      %p25 = scmp.eq.s32.totalorder %s24, 0
      %s27 = sadd.s32 %s26, 1
      %s28 = scalar_select %p25, %s26, %s27
      %p31 = pneg %p25
      %p32 = scmp.eq.s32.totalorder %s16, 1
      %p33 = por %p31, %p32
      %p34 = scmp.ne.s32.totalorder %s26, %s29
      %p35 = scmp.eq.s32.totalorder %s16, 0
      %p36 = por %p34, %p35
      %p37 = scmp.ne.s32.totalorder %s26, %s29
      %p38 = scmp.eq.s32.totalorder %s21, 1
      %p39 = por %p37, %p38
      %p40 = scmp.ne.s32.totalorder %s29, %s30
      %p41 = scmp.eq.s32.totalorder %s21, 0
      %p42 = por %p40, %p41
      %p43 = scmp.ne.s32.totalorder %s29, %s30
      %p44 = scmp.eq.s32.totalorder %s22, 1
      %p45 = por %p43, %p44
      %p47 = scmp.ne.s32.totalorder %s30, %s46
      %p48 = scmp.eq.s32.totalorder %s22, 0
      %p49 = por %p47, %p48
      %s51 = sadd.s32 %s50, 1
      %p54 = scmp.eq.s32.totalorder %s16, 1
      %p55 = scmp.ne.s32.totalorder %s50, %s52
      %p56 = scmp.eq.s32.totalorder %s16, 0
      %p57 = por %p55, %p56
      %p58 = scmp.ne.s32.totalorder %s50, %s52
      %p59 = scmp.eq.s32.totalorder %s21, 1
      %p60 = por %p58, %p59
      %p61 = scmp.ne.s32.totalorder %s52, %s53
      %p62 = scmp.eq.s32.totalorder %s21, 0
      %p63 = por %p61, %p62
      %p64 = scmp.ne.s32.totalorder %s52, %s53
      %p65 = scmp.eq.s32.totalorder %s22, 1
      %p66 = por %p64, %p65
      %p68 = scmp.ne.s32.totalorder %s53, %s67
      %p69 = scmp.eq.s32.totalorder %s22, 0
      %p70 = por %p68, %p69
      %s72 = sadd.s32 %s71, 1
      %p75 = scmp.eq.s32.totalorder %s16, 1
      %p76 = scmp.ne.s32.totalorder %s71, %s73
      %p77 = scmp.eq.s32.totalorder %s16, 0
      %p78 = por %p76, %p77
      %p79 = scmp.ne.s32.totalorder %s71, %s73
      %p80 = scmp.eq.s32.totalorder %s21, 1
      %p81 = por %p79, %p80
      %p82 = scmp.ne.s32.totalorder %s73, %s74
      %p83 = scmp.eq.s32.totalorder %s21, 0
      %p84 = por %p82, %p83
      %p85 = scmp.ne.s32.totalorder %s73, %s74
      %p86 = scmp.eq.s32.totalorder %s22, 1
      %p87 = por %p85, %p86
      %p89 = scmp.ne.s32.totalorder %s74, %s88
      %p90 = scmp.eq.s32.totalorder %s22, 0
      %p91 = por %p89, %p90
      %s93 = sadd.s32 %s92, 1
      %p96 = scmp.eq.s32.totalorder %s16, 1
      %p97 = scmp.ne.s32.totalorder %s92, %s94
      %p98 = scmp.eq.s32.totalorder %s16, 0
      %p99 = por %p97, %p98
      %p100 = scmp.ne.s32.totalorder %s92, %s94
      %p101 = scmp.eq.s32.totalorder %s21, 1
      %p102 = por %p100, %p101
      %p103 = scmp.ne.s32.totalorder %s94, %s95
      %p104 = scmp.eq.s32.totalorder %s21, 0
      %p105 = por %p103, %p104
      %p106 = scmp.ne.s32.totalorder %s94, %s95
      %p107 = scmp.eq.s32.totalorder %s22, 1
      %p108 = por %p106, %p107
      %p110 = scmp.ne.s32.totalorder %s95, %s109
      %p111 = scmp.eq.s32.totalorder %s22, 0
      %p112 = por %p110, %p111
      %s114 = sadd.s32 %s113, 1
      %p117 = scmp.eq.s32.totalorder %s16, 1
      %p118 = scmp.ne.s32.totalorder %s113, %s115
      %p119 = scmp.eq.s32.totalorder %s16, 0
      %p120 = por %p118, %p119
      %p121 = scmp.ne.s32.totalorder %s113, %s115
      %p122 = scmp.eq.s32.totalorder %s21, 1
      %p123 = por %p121, %p122
      %p124 = scmp.ne.s32.totalorder %s115, %s116
      %p125 = scmp.eq.s32.totalorder %s21, 0
      %p126 = por %p124, %p125
      %p127 = scmp.ne.s32.totalorder %s115, %s116
      %p128 = scmp.eq.s32.totalorder %s22, 1
      %p129 = por %p127, %p128
      %p131 = scmp.ne.s32.totalorder %s116, %s130
      %p132 = scmp.eq.s32.totalorder %s22, 0
      %p133 = por %p131, %p132
      %s135 = sadd.s32 %s134, 1
      %p138 = scmp.eq.s32.totalorder %s16, 1
      %p139 = scmp.ne.s32.totalorder %s134, %s136
      %p140 = scmp.eq.s32.totalorder %s16, 0
      %p141 = por %p139, %p140
      %p142 = scmp.ne.s32.totalorder %s134, %s136
      %p143 = scmp.eq.s32.totalorder %s21, 1
      %p144 = por %p142, %p143
      %p145 = scmp.ne.s32.totalorder %s136, %s137
      %p146 = scmp.eq.s32.totalorder %s21, 0
      %p147 = por %p145, %p146
      %p148 = scmp.ne.s32.totalorder %s136, %s137
      %p149 = scmp.eq.s32.totalorder %s22, 1
      %p150 = por %p148, %p149
      %p152 = scmp.ne.s32.totalorder %s137, %s151
      %p153 = scmp.eq.s32.totalorder %s22, 0
      %p154 = por %p152, %p153
      %s155 = ssub.s32 %s16, %s23
      %p156 = scmp.eq.s32.totalorder %s155, 0
      %s158 = sadd.s32 %s157, 1
      %s159 = scalar_select %p156, %s157, %s158
      %p162 = pneg %p156
      %p163 = scmp.eq.s32.totalorder %s16, 1
      %p164 = por %p162, %p163
      %p165 = scmp.ne.s32.totalorder %s157, %s160
      %p166 = scmp.eq.s32.totalorder %s16, 0
      %p167 = por %p165, %p166
      %p168 = scmp.ne.s32.totalorder %s157, %s160
      %p169 = scmp.eq.s32.totalorder %s21, 1
      %p170 = por %p168, %p169
      %p171 = scmp.ne.s32.totalorder %s160, %s161
      %p172 = scmp.eq.s32.totalorder %s21, 0
      %p173 = por %p171, %p172
      %p174 = scmp.ne.s32.totalorder %s160, %s161
      %p175 = scmp.eq.s32.totalorder %s22, 1
      %p176 = por %p174, %p175
      %p178 = scmp.ne.s32.totalorder %s161, %s177
      %p179 = scmp.eq.s32.totalorder %s22, 0
      %p180 = por %p178, %p179
      %p181 = scmp.le.s32.totalorder 1, %s16
      %p182 = scmp.lt.s32.totalorder %s16, 3
      %p183 = pnand %p181, %p182
      %p184 = pneg %p183
      // Predicated region
      $region9: #{tpu_custom_call.1} parent=5 // pred_check
        _
      $region10: #{tpu_custom_call.1} parent=5 // pred_check_branch
        %186 = sbr.rel (%p183) target = $region12
      $region11: #{tpu_custom_call.1} parent=5 // pred_region
        %s187 = ssub.s32 %s16, 1
        // Predicated region
        $region13: #{tpu_custom_call.1} parent=11 // pred_check
          %p188 = pneg %p63
        $region14: #{tpu_custom_call.1} parent=11 // pred_check_branch
          %190 = sbr.rel (%p188) target = $region16
        $region15: #{tpu_custom_call.1} parent=11 // pred_region
          _
        $region16: #{tpu_custom_call.1} parent=11 // pred_fallthru
          _
        // Predicated region
        $region17: #{tpu_custom_call.1} parent=11 // pred_check
          %p191 = pneg %p84
        $region18: #{tpu_custom_call.1} parent=11 // pred_check_branch
          %193 = sbr.rel (%p191) target = $region20
        $region19: #{tpu_custom_call.1} parent=11 // pred_region
          %195 = vsyncadd [#allocation4], 0
          %s196 = sshll.u32 %s2, 4
          %s197 = int_to_ptr.hbm [resolvable:$true] %s196
          %s198 = sshll.u32 [#allocation3], 4
          %s199 = int_to_ptr.vmem [resolvable:$true] %s198
          %204 = dma.hbm_to_vmem [thread:$0]  %s197, 9216, %s199, [#allocation4], 64, 64, 4
        $region20: #{tpu_custom_call.1} parent=11 // pred_fallthru
          _
        // Predicated region
        $region21: #{tpu_custom_call.1} parent=11 // pred_check
          %p205 = pneg %p105
        $region22: #{tpu_custom_call.1} parent=11 // pred_check_branch
          %207 = sbr.rel (%p205) target = $region24
        $region23: #{tpu_custom_call.1} parent=11 // pred_region
          _
        $region24: #{tpu_custom_call.1} parent=11 // pred_fallthru
          _
        // Predicated region
        $region25: #{tpu_custom_call.1} parent=11 // pred_check
          %p208 = pneg %p126
        $region26: #{tpu_custom_call.1} parent=11 // pred_check_branch
          %210 = sbr.rel (%p208) target = $region28
        $region27: #{tpu_custom_call.1} parent=11 // pred_region
          _
        $region28: #{tpu_custom_call.1} parent=11 // pred_fallthru
          _
        // Predicated region
        $region29: #{tpu_custom_call.1} parent=11 // pred_check
          %p211 = pneg %p147
        $region30: #{tpu_custom_call.1} parent=11 // pred_check_branch
          %213 = sbr.rel (%p211) target = $region32
        $region31: #{tpu_custom_call.1} parent=11 // pred_region
          _
        $region32: #{tpu_custom_call.1} parent=11 // pred_fallthru
          _
      $region12: #{tpu_custom_call.1} parent=5 // pred_fallthru
        _
      %p214 = scmp.lt.s32.totalorder %s16, 2
      // Predicated region
      $region33: #{tpu_custom_call.1} parent=5 // pred_check
        %p215 = pneg %p214
      $region34: #{tpu_custom_call.1} parent=5 // pred_check_branch
        %217 = sbr.rel (%p215) target = $region36
      $region35: #{tpu_custom_call.1} parent=5 // pred_region
        // Predicated region
        $region37: #{tpu_custom_call.1} parent=35 // pred_check
          %p218 = pneg %p36
        $region38: #{tpu_custom_call.1} parent=35 // pred_check_branch
          %220 = sbr.rel (%p218) target = $region40
        $region39: #{tpu_custom_call.1} parent=35 // pred_region
          %p221 = scmp.lt.s32.totalorder %s16, 1
          %s222 = scalar_select %p221, %s16, 1
          %s223 = smul.addr %s222, 32
          %s224 = smul.addr %s223, 8
          %s225 = scalar_lea.vmem %s0, %s224
        $region40: #{tpu_custom_call.1} parent=35 // pred_fallthru
          _
      $region36: #{tpu_custom_call.1} parent=5 // pred_fallthru
        _
      %p226 = scmp.le.s32.totalorder 1, %s16
      %p227 = scmp.lt.s32.totalorder %s16, 3
      %p228 = pnand %p226, %p227
      %p229 = pneg %p228
      // Predicated region
      $region41: #{tpu_custom_call.1} parent=5 // pred_check
        _
      $region42: #{tpu_custom_call.1} parent=5 // pred_check_branch
        %231 = sbr.rel (%p228) target = $region44
      $region43: #{tpu_custom_call.1} parent=5 // pred_region
        %s232 = ssub.s32 %s16, 1
        // Predicated region
        $region45: #{tpu_custom_call.1} parent=43 // pred_check
          %p233 = pneg %p84
        $region46: #{tpu_custom_call.1} parent=43 // pred_check_branch
          %235 = sbr.rel (%p233) target = $region48
        $region47: #{tpu_custom_call.1} parent=43 // pred_region
          %237 = dma.done [#allocation4], 9216
        $region48: #{tpu_custom_call.1} parent=43 // pred_fallthru
          _
        %p238 = scmp.lt.s32.totalorder %s21, 1
        %s239 = scalar_select %p238, %s21, 1
        %s240 = smul.addr %s239, 32
        %s241 = smul.addr %s240, 8
        %s242 = scalar_lea.vmem %s0, %s241
        %p243 = pneg %p42
        %p244 = pneg %p39
        %p245 = pneg %p63
        %p246 = pneg %p60
        %p247 = pneg %p84
        %p248 = pneg %p81
        %p249 = pneg %p105
        %p250 = pneg %p102
        %p251 = pneg %p126
        %p252 = pneg %p123
        %p253 = pneg %p147
        %p254 = pneg %p144
        %p255 = pneg %p173
        %p256 = pneg %p170
        %s257 = sand.u32 %s160, 1
        %s258 = scalar_lea.sflag [#allocation5], %s257
        %s259 = sand.u32 %s160, 1
        %s260 = smul.addr %s259, 64
        %s261 = scalar_lea.vmem [#allocation6], %s260
        %p262 = scmp.lt.s32.totalorder %s21, 1
        %s263 = scalar_select %p262, %s21, 1
        %s264 = smul.addr %s263, 32
        %s265 = smul.addr %s264, 8
        %s266 = scalar_lea.vmem %s0, %s265
        %v267 = vld [vmem:[%s266] sm:$0xff]
        %v268 = vld [vmem:[%s266 + $0x8] sm:$0xff]
        %v269 = vld [vmem:[%s266 + $0x10] sm:$0xff]
        %v270 = vld [vmem:[%s266 + $0x18] sm:$0xff]
        %v271 = vld [vmem:[%s266 + $0x20] sm:$0xff]
        %v272 = vld [vmem:[%s266 + $0x28] sm:$0xff]
        %v273 = vld [vmem:[%s266 + $0x30] sm:$0xff]
        %v274 = vld [vmem:[%s266 + $0x38] sm:$0xff]
        %v275 = vld [vmem:[%s266 + $0x40] sm:$0xff]
        %v276 = vld [vmem:[%s266 + $0x48] sm:$0xff]
        %v277 = vld [vmem:[%s266 + $0x50] sm:$0xff]
        %v278 = vld [vmem:[%s266 + $0x58] sm:$0xff]
        %v279 = vld [vmem:[%s266 + $0x60] sm:$0xff]
        %v280 = vld [vmem:[%s266 + $0x68] sm:$0xff]
        %v281 = vld [vmem:[%s266 + $0x70] sm:$0xff]
        %v282 = vld [vmem:[%s266 + $0x78] sm:$0xff]
        %v283 = vld [vmem:[%s266 + $0x80] sm:$0xff]
        %v284 = vld [vmem:[%s266 + $0x88] sm:$0xff]
        %v285 = vld [vmem:[%s266 + $0x90] sm:$0xff]
        %v286 = vld [vmem:[%s266 + $0x98] sm:$0xff]
        %v287 = vld [vmem:[%s266 + $0xa0] sm:$0xff]
        %v288 = vld [vmem:[%s266 + $0xa8] sm:$0xff]
        %v289 = vld [vmem:[%s266 + $0xb0] sm:$0xff]
        %v290 = vld [vmem:[%s266 + $0xb8] sm:$0xff]
        %v291 = vld [vmem:[%s266 + $0xc0] sm:$0xff]
        %v292 = vld [vmem:[%s266 + $0xc8] sm:$0xff]
        %v293 = vld [vmem:[%s266 + $0xd0] sm:$0xff]
        %v294 = vld [vmem:[%s266 + $0xd8] sm:$0xff]
        %v295 = vld [vmem:[%s266 + $0xe0] sm:$0xff]
        %v296 = vld [vmem:[%s266 + $0xe8] sm:$0xff]
        %v297 = vld [vmem:[%s266 + $0xf0] sm:$0xff]
        %v298 = vld [vmem:[%s266 + $0xf8] sm:$0xff]
        %v299 = vld [vmem:[%s1] sm:$0xf]
        %vm300 = vcmask 31744
        %v302 = vsel %vm300, %v267, 0
        %v305 = vsel %vm300, %v268, 0
        %v308 = vsel %vm300, %v269, 0
        %v311 = vsel %vm300, %v270, 0
        %v314 = vsel %vm300, %v271, 0
        %v317 = vsel %vm300, %v272, 0
        %v320 = vsel %vm300, %v273, 0
        %v323 = vsel %vm300, %v274, 0
        %v326 = vsel %vm300, %v275, 0
        %v329 = vsel %vm300, %v276, 0
        %v332 = vsel %vm300, %v277, 0
        %v335 = vsel %vm300, %v278, 0
        %v338 = vsel %vm300, %v279, 0
        %v341 = vsel %vm300, %v280, 0
        %v344 = vsel %vm300, %v281, 0
        %v347 = vsel %vm300, %v282, 0
        %v350 = vsel %vm300, %v283, 0
        %v353 = vsel %vm300, %v284, 0
        %v356 = vsel %vm300, %v285, 0
        %v359 = vsel %vm300, %v286, 0
        %v362 = vsel %vm300, %v287, 0
        %v365 = vsel %vm300, %v288, 0
        %v368 = vsel %vm300, %v289, 0
        %v371 = vsel %vm300, %v290, 0
        %v374 = vsel %vm300, %v291, 0
        %v377 = vsel %vm300, %v292, 0
        %v380 = vsel %vm300, %v293, 0
        %v383 = vsel %vm300, %v294, 0
        %v386 = vsel %vm300, %v295, 0
        %v389 = vsel %vm300, %v296, 0
        %v392 = vsel %vm300, %v297, 0
        %v395 = vsel %vm300, %v298, 0
        %vm397 = vcmask 1043456
        %v399 = vsel %vm397, %v299, 0
        %401 = vmatpush.msra.mxu0 0.0
        %402 = vmatpush.msra.mxu0 0.0
        %403 = vmatpush.msra.mxu0 0.0
        %404 = vmatpush.msra.mxu0 0.0
        %405 = vmatpush.msra.mxu0 0.0
        %406 = vmatpush.msra.mxu0 0.0
        %407 = vmatpush.msra.mxu0 0.0
        %408 = vmatpush.msra.mxu0 0.0
        %409 = vmatpush.msra.mxu0 0.0
        %410 = vmatpush.msra.mxu0 0.0
        %411 = vmatpush.msra.mxu0 0.0
        %412 = vmatpush.msra.mxu0 0.0
        %413 = vmatpush.msra.mxu0 0.0
        %414 = vmatpush.msra.mxu0 0.0
        %415 = vmatpush.msra.mxu0 0.0
        %416 = vmatpush.msra.mxu0 %v399
        %417 = vmatmul.f32.gmra.mxu0 %v302
        %v418 = vpop.f32.mrf.mxu0
        %v419 = vadd.f32 0.0, %v418
        %420 = vmatmul.f32.gmra.mxu0 %v305
        %v421 = vpop.f32.mrf.mxu0
        %v422 = vadd.f32 0.0, %v421
        %423 = vmatmul.f32.gmra.mxu0 %v308
        %v424 = vpop.f32.mrf.mxu0
        %v425 = vadd.f32 0.0, %v424
        %426 = vmatmul.f32.gmra.mxu0 %v311
        %v427 = vpop.f32.mrf.mxu0
        %v428 = vadd.f32 0.0, %v427
        %429 = vmatmul.f32.gmra.mxu0 %v314
        %v430 = vpop.f32.mrf.mxu0
        %v431 = vadd.f32 0.0, %v430
        %432 = vmatmul.f32.gmra.mxu0 %v317
        %v433 = vpop.f32.mrf.mxu0
        %v434 = vadd.f32 0.0, %v433
        %435 = vmatmul.f32.gmra.mxu0 %v320
        %v436 = vpop.f32.mrf.mxu0
        %v437 = vadd.f32 0.0, %v436
        %438 = vmatmul.f32.gmra.mxu0 %v323
        %v439 = vpop.f32.mrf.mxu0
        %v440 = vadd.f32 0.0, %v439
        %441 = vmatmul.f32.gmra.mxu0 %v326
        %v442 = vpop.f32.mrf.mxu0
        %v443 = vadd.f32 0.0, %v442
        %444 = vmatmul.f32.gmra.mxu0 %v329
        %v445 = vpop.f32.mrf.mxu0
        %v446 = vadd.f32 0.0, %v445
        %447 = vmatmul.f32.gmra.mxu0 %v332
        %v448 = vpop.f32.mrf.mxu0
        %v449 = vadd.f32 0.0, %v448
        %450 = vmatmul.f32.gmra.mxu0 %v335
        %v451 = vpop.f32.mrf.mxu0
        %v452 = vadd.f32 0.0, %v451
        %453 = vmatmul.f32.gmra.mxu0 %v338
        %v454 = vpop.f32.mrf.mxu0
        %v455 = vadd.f32 0.0, %v454
        %456 = vmatmul.f32.gmra.mxu0 %v341
        %v457 = vpop.f32.mrf.mxu0
        %v458 = vadd.f32 0.0, %v457
        %459 = vmatmul.f32.gmra.mxu0 %v344
        %v460 = vpop.f32.mrf.mxu0
        %v461 = vadd.f32 0.0, %v460
        %462 = vmatmul.f32.gmra.mxu0 %v347
        %v463 = vpop.f32.mrf.mxu0
        %v464 = vadd.f32 0.0, %v463
        %465 = vmatmul.f32.gmra.mxu0 %v350
        %v466 = vpop.f32.mrf.mxu0
        %v467 = vadd.f32 0.0, %v466
        %468 = vmatmul.f32.gmra.mxu0 %v353
        %v469 = vpop.f32.mrf.mxu0
        %v470 = vadd.f32 0.0, %v469
        %471 = vmatmul.f32.gmra.mxu0 %v356
        %v472 = vpop.f32.mrf.mxu0
        %v473 = vadd.f32 0.0, %v472
        %474 = vmatmul.f32.gmra.mxu0 %v359
        %v475 = vpop.f32.mrf.mxu0
        %v476 = vadd.f32 0.0, %v475
        %477 = vmatmul.f32.gmra.mxu0 %v362
        %v478 = vpop.f32.mrf.mxu0
        %v479 = vadd.f32 0.0, %v478
        %480 = vmatmul.f32.gmra.mxu0 %v365
        %v481 = vpop.f32.mrf.mxu0
        %v482 = vadd.f32 0.0, %v481
        %483 = vmatmul.f32.gmra.mxu0 %v368
        %v484 = vpop.f32.mrf.mxu0
        %v485 = vadd.f32 0.0, %v484
        %486 = vmatmul.f32.gmra.mxu0 %v371
        %v487 = vpop.f32.mrf.mxu0
        %v488 = vadd.f32 0.0, %v487
        %489 = vmatmul.f32.gmra.mxu0 %v374
        %v490 = vpop.f32.mrf.mxu0
        %v491 = vadd.f32 0.0, %v490
        %492 = vmatmul.f32.gmra.mxu0 %v377
        %v493 = vpop.f32.mrf.mxu0
        %v494 = vadd.f32 0.0, %v493
        %495 = vmatmul.f32.gmra.mxu0 %v380
        %v496 = vpop.f32.mrf.mxu0
        %v497 = vadd.f32 0.0, %v496
        %498 = vmatmul.f32.gmra.mxu0 %v383
        %v499 = vpop.f32.mrf.mxu0
        %v500 = vadd.f32 0.0, %v499
        %501 = vmatmul.f32.gmra.mxu0 %v386
        %v502 = vpop.f32.mrf.mxu0
        %v503 = vadd.f32 0.0, %v502
        %504 = vmatmul.f32.gmra.mxu0 %v389
        %v505 = vpop.f32.mrf.mxu0
        %v506 = vadd.f32 0.0, %v505
        %507 = vmatmul.f32.gmra.mxu0 %v392
        %v508 = vpop.f32.mrf.mxu0
        %v509 = vadd.f32 0.0, %v508
        %510 = vmatmul.f32.gmra.mxu0 %v395
        %v511 = vpop.f32.mrf.mxu0
        %v512 = vadd.f32 0.0, %v511
        %513 = vdwg.mxu0
        %v514 = vadd.f32 %v419, %v422
        %v515 = vadd.f32 %v514, %v425
        %v516 = vadd.f32 %v515, %v428
        %v517 = vadd.f32 %v516, %v431
        %v518 = vadd.f32 %v517, %v434
        %v519 = vadd.f32 %v518, %v437
        %v520 = vadd.f32 %v519, %v440
        %v521 = vadd.f32 %v520, %v443
        %v522 = vadd.f32 %v521, %v446
        %v523 = vadd.f32 %v522, %v449
        %v524 = vadd.f32 %v523, %v452
        %v525 = vadd.f32 %v524, %v455
        %v526 = vadd.f32 %v525, %v458
        %v527 = vadd.f32 %v526, %v461
        %v528 = vadd.f32 %v527, %v464
        %v529 = vadd.f32 %v528, %v467
        %v530 = vadd.f32 %v529, %v470
        %v531 = vadd.f32 %v530, %v473
        %v532 = vadd.f32 %v531, %v476
        %v533 = vadd.f32 %v532, %v479
        %v534 = vadd.f32 %v533, %v482
        %v535 = vadd.f32 %v534, %v485
        %v536 = vadd.f32 %v535, %v488
        %v537 = vadd.f32 %v536, %v491
        %v538 = vadd.f32 %v537, %v494
        %v539 = vadd.f32 %v538, %v497
        %v540 = vadd.f32 %v539, %v500
        %v541 = vadd.f32 %v540, %v503
        %v542 = vadd.f32 %v541, %v506
        %v543 = vadd.f32 %v542, %v509
        %v544 = vadd.f32 %v543, %v512
        %v545 = vrot.slane %v544, 4
        %v546 = vadd.f32 %v544, %v545
        %v547 = vrot.slane %v546, 2
        %v548 = vadd.f32 %v546, %v547
        %v549 = vrot.slane %v548, 1
        %v550 = vadd.f32 %v548, %v549
        %v551 = vmul.f32 %v550, 0.00390625
        %v552 = vsub.f32 %v419, %v551
        %v553 = vsub.f32 %v422, %v551
        %v554 = vsub.f32 %v425, %v551
        %v555 = vsub.f32 %v428, %v551
        %v556 = vsub.f32 %v431, %v551
        %v557 = vsub.f32 %v434, %v551
        %v558 = vsub.f32 %v437, %v551
        %v559 = vsub.f32 %v440, %v551
        %v560 = vsub.f32 %v443, %v551
        %v561 = vsub.f32 %v446, %v551
        %v562 = vsub.f32 %v449, %v551
        %v563 = vsub.f32 %v452, %v551
        %v564 = vsub.f32 %v455, %v551
        %v565 = vsub.f32 %v458, %v551
        %v566 = vsub.f32 %v461, %v551
        %v567 = vsub.f32 %v464, %v551
        %v568 = vsub.f32 %v467, %v551
        %v569 = vsub.f32 %v470, %v551
        %v570 = vsub.f32 %v473, %v551
        %v571 = vsub.f32 %v476, %v551
        %v572 = vsub.f32 %v479, %v551
        %v573 = vsub.f32 %v482, %v551
        %v574 = vsub.f32 %v485, %v551
        %v575 = vsub.f32 %v488, %v551
        %v576 = vsub.f32 %v491, %v551
        %v577 = vsub.f32 %v494, %v551
        %v578 = vsub.f32 %v497, %v551
        %v579 = vsub.f32 %v500, %v551
        %v580 = vsub.f32 %v503, %v551
        %v581 = vsub.f32 %v506, %v551
        %v582 = vsub.f32 %v509, %v551
        %v583 = vsub.f32 %v512, %v551
        %v584 = vmul.f32 %v552, %v552
        %v585 = vmul.f32 %v553, %v553
        %v586 = vmul.f32 %v554, %v554
        %v587 = vmul.f32 %v555, %v555
        %v588 = vmul.f32 %v556, %v556
        %v589 = vmul.f32 %v557, %v557
        %v590 = vmul.f32 %v558, %v558
        %v591 = vmul.f32 %v559, %v559
        %v592 = vmul.f32 %v560, %v560
        %v593 = vmul.f32 %v561, %v561
        %v594 = vmul.f32 %v562, %v562
        %v595 = vmul.f32 %v563, %v563
        %v596 = vmul.f32 %v564, %v564
        %v597 = vmul.f32 %v565, %v565
        %v598 = vmul.f32 %v566, %v566
        %v599 = vmul.f32 %v567, %v567
        %v600 = vmul.f32 %v568, %v568
        %v601 = vmul.f32 %v569, %v569
        %v602 = vmul.f32 %v570, %v570
        %v603 = vmul.f32 %v571, %v571
        %v604 = vmul.f32 %v572, %v572
        %v605 = vmul.f32 %v573, %v573
        %v606 = vmul.f32 %v574, %v574
        %v607 = vmul.f32 %v575, %v575
        %v608 = vmul.f32 %v576, %v576
        %v609 = vmul.f32 %v577, %v577
        %v610 = vmul.f32 %v578, %v578
        %v611 = vmul.f32 %v579, %v579
        %v612 = vmul.f32 %v580, %v580
        %v613 = vmul.f32 %v581, %v581
        %v614 = vmul.f32 %v582, %v582
        %v615 = vmul.f32 %v583, %v583
        %v616 = vadd.f32 %v584, %v585
        %v617 = vadd.f32 %v616, %v586
        %v618 = vadd.f32 %v617, %v587
        %v619 = vadd.f32 %v618, %v588
        %v620 = vadd.f32 %v619, %v589
        %v621 = vadd.f32 %v620, %v590
        %v622 = vadd.f32 %v621, %v591
        %v623 = vadd.f32 %v622, %v592
        %v624 = vadd.f32 %v623, %v593
        %v625 = vadd.f32 %v624, %v594
        %v626 = vadd.f32 %v625, %v595
        %v627 = vadd.f32 %v626, %v596
        %v628 = vadd.f32 %v627, %v597
        %v629 = vadd.f32 %v628, %v598
        %v630 = vadd.f32 %v629, %v599
        %v631 = vadd.f32 %v630, %v600
        %v632 = vadd.f32 %v631, %v601
        %v633 = vadd.f32 %v632, %v602
        %v634 = vadd.f32 %v633, %v603
        %v635 = vadd.f32 %v634, %v604
        %v636 = vadd.f32 %v635, %v605
        %v637 = vadd.f32 %v636, %v606
        %v638 = vadd.f32 %v637, %v607
        %v639 = vadd.f32 %v638, %v608
        %v640 = vadd.f32 %v639, %v609
        %v641 = vadd.f32 %v640, %v610
        %v642 = vadd.f32 %v641, %v611
        %v643 = vadd.f32 %v642, %v612
        %v644 = vadd.f32 %v643, %v613
        %v645 = vadd.f32 %v644, %v614
        %v646 = vadd.f32 %v645, %v615
        %v647 = vrot.slane %v646, 4
        %v648 = vadd.f32 %v646, %v647
        %v649 = vrot.slane %v648, 2
        %v650 = vadd.f32 %v648, %v649
        %v651 = vrot.slane %v650, 1
        %v652 = vadd.f32 %v650, %v651
        %v653 = vmul.f32 %v652, 0.00390625
        %v654 = vadd.f32 %v653, 1e-05
        %v655 = vrsqrt.pop %v654
        %v656 = vmul.f32 %v655, %v654
        %v657 = vmul.f32 %v656, %v655
        %v658 = vmul.f32 0.5, %v657
        %v659 = vsub.f32 1.5, %v658
        %v660 = vmul.f32 %v655, %v659
        %vm661 = vweird.f32 %v654
        %vm662 = vweird.f32 %v655
        %vm663 = vmor %vm661, %vm662
        %v664 = vsel %vm663, %v655, %v660
        %v665 = vmul.f32 %v552, %v664
        %v666 = vmul.f32 %v553, %v664
        %v667 = vmul.f32 %v554, %v664
        %v668 = vmul.f32 %v555, %v664
        %v669 = vmul.f32 %v556, %v664
        %v670 = vmul.f32 %v557, %v664
        %v671 = vmul.f32 %v558, %v664
        %v672 = vmul.f32 %v559, %v664
        %v673 = vmul.f32 %v560, %v664
        %v674 = vmul.f32 %v561, %v664
        %v675 = vmul.f32 %v562, %v664
        %v676 = vmul.f32 %v563, %v664
        %v677 = vmul.f32 %v564, %v664
        %v678 = vmul.f32 %v565, %v664
        %v679 = vmul.f32 %v566, %v664
        %v680 = vmul.f32 %v567, %v664
        %v681 = vmul.f32 %v568, %v664
        %v682 = vmul.f32 %v569, %v664
        %v683 = vmul.f32 %v570, %v664
        %v684 = vmul.f32 %v571, %v664
        %v685 = vmul.f32 %v572, %v664
        %v686 = vmul.f32 %v573, %v664
        %v687 = vmul.f32 %v574, %v664
        %v688 = vmul.f32 %v575, %v664
        %v689 = vmul.f32 %v576, %v664
        %v690 = vmul.f32 %v577, %v664
        %v691 = vmul.f32 %v578, %v664
        %v692 = vmul.f32 %v579, %v664
        %v693 = vmul.f32 %v580, %v664
        %v694 = vmul.f32 %v581, %v664
        %v695 = vmul.f32 %v582, %v664
        %v696 = vmul.f32 %v583, %v664
        %v697 = vmax.f32 %v665, 0.0
        %v698 = vmax.f32 %v666, 0.0
        %v699 = vmax.f32 %v667, 0.0
        %v700 = vmax.f32 %v668, 0.0
        %v701 = vmax.f32 %v669, 0.0
        %v702 = vmax.f32 %v670, 0.0
        %v703 = vmax.f32 %v671, 0.0
        %v704 = vmax.f32 %v672, 0.0
        %v705 = vmax.f32 %v673, 0.0
        %v706 = vmax.f32 %v674, 0.0
        %v707 = vmax.f32 %v675, 0.0
        %v708 = vmax.f32 %v676, 0.0
        %v709 = vmax.f32 %v677, 0.0
        %v710 = vmax.f32 %v678, 0.0
        %v711 = vmax.f32 %v679, 0.0
        %v712 = vmax.f32 %v680, 0.0
        %v713 = vmax.f32 %v681, 0.0
        %v714 = vmax.f32 %v682, 0.0
        %v715 = vmax.f32 %v683, 0.0
        %v716 = vmax.f32 %v684, 0.0
        %v717 = vmax.f32 %v685, 0.0
        %v718 = vmax.f32 %v686, 0.0
        %v719 = vmax.f32 %v687, 0.0
        %v720 = vmax.f32 %v688, 0.0
        %v721 = vmax.f32 %v689, 0.0
        %v722 = vmax.f32 %v690, 0.0
        %v723 = vmax.f32 %v691, 0.0
        %v724 = vmax.f32 %v692, 0.0
        %v725 = vmax.f32 %v693, 0.0
        %v726 = vmax.f32 %v694, 0.0
        %v727 = vmax.f32 %v695, 0.0
        %v728 = vmax.f32 %v696, 0.0
        %729 = vst [vmem:[#allocation2] sm:$0xff] 0.0
        %730 = vst [vmem:[#allocation2 + $0x8] sm:$0xff] 0.0
        %731 = vst [vmem:[#allocation2 + $0x10] sm:$0x3] 0.0
        %732 = vst [vmem:[#allocation2 + $0x18] sm:$0xff] 0.0
        %733 = vst [vmem:[#allocation2 + $0x20] sm:$0xff] 0.0
        %734 = vst [vmem:[#allocation2 + $0x28] sm:$0x3] 0.0
        %735 = vst [vmem:[#allocation2 + $0x30] sm:$0xff] 0.0
        %736 = vst [vmem:[#allocation2 + $0x38] sm:$0xff] 0.0
        %737 = vst [vmem:[#allocation2 + $0x40] sm:$0x3] 0.0
        %738 = vst [vmem:[#allocation2 + $0x48] sm:$0xff] 0.0
        %739 = vst [vmem:[#allocation2 + $0x50] sm:$0xff] 0.0
        %740 = vst [vmem:[#allocation2 + $0x58] sm:$0x3] 0.0
        %741 = vst [vmem:[#allocation2 + $0x60] sm:$0xff] 0.0
        %742 = vst [vmem:[#allocation2 + $0x68] sm:$0xff] 0.0
        %743 = vst [vmem:[#allocation2 + $0x70] sm:$0x3] 0.0
        %744 = vst [vmem:[#allocation2 + $0x78] sm:$0xff] 0.0
        %745 = vst [vmem:[#allocation2 + $0x80] sm:$0xff] 0.0
        %746 = vst [vmem:[#allocation2 + $0x88] sm:$0x3] 0.0
        %747 = vst [vmem:[#allocation2 + $0x90] sm:$0xff] 0.0
        %748 = vst [vmem:[#allocation2 + $0x98] sm:$0xff] 0.0
        %749 = vst [vmem:[#allocation2 + $0xa0] sm:$0x3] 0.0
        %750 = vst [vmem:[#allocation2 + $0xa8] sm:$0xff] 0.0
        %751 = vst [vmem:[#allocation2 + $0xb0] sm:$0xff] 0.0
        %752 = vst [vmem:[#allocation2 + $0xb8] sm:$0x3] 0.0
        %753 = vst [vmem:[#allocation2 + $0xc0] sm:$0xff] 0.0
        %754 = vst [vmem:[#allocation2 + $0xc8] sm:$0xff] 0.0
        %755 = vst [vmem:[#allocation2 + $0xd0] sm:$0x3] 0.0
        %756 = vst [vmem:[#allocation2 + $0xd8] sm:$0xff] 0.0
        %757 = vst [vmem:[#allocation2 + $0xe0] sm:$0xff] 0.0
        %758 = vst [vmem:[#allocation2 + $0xe8] sm:$0x3] 0.0
        %759 = vst [vmem:[#allocation2 + $0xf0] sm:$0xff] 0.0
        %760 = vst [vmem:[#allocation2 + $0xf8] sm:$0xff] 0.0
        %761 = vst [vmem:[#allocation2 + $0x100] sm:$0x3] 0.0
        %762 = vst [vmem:[#allocation2 + $0x108] sm:$0xff] 0.0
        %763 = vst [vmem:[#allocation2 + $0x110] sm:$0xff] 0.0
        %764 = vst [vmem:[#allocation2 + $0x118] sm:$0x3] 0.0
        %765 = vst [vmem:[#allocation2 + $0x120] sm:$0xff] 0.0
        %766 = vst [vmem:[#allocation2 + $0x128] sm:$0xff] 0.0
        %767 = vst [vmem:[#allocation2 + $0x130] sm:$0x3] 0.0
        %768 = vst [vmem:[#allocation2 + $0x138] sm:$0xff] 0.0
        %769 = vst [vmem:[#allocation2 + $0x140] sm:$0xff] 0.0
        %770 = vst [vmem:[#allocation2 + $0x148] sm:$0x3] 0.0
        %771 = vst [vmem:[#allocation2 + $0x150] sm:$0xff] 0.0
        %772 = vst [vmem:[#allocation2 + $0x158] sm:$0xff] 0.0
        %773 = vst [vmem:[#allocation2 + $0x160] sm:$0x3] 0.0
        %774 = vst [vmem:[#allocation2 + $0x168] sm:$0xff] 0.0
        %775 = vst [vmem:[#allocation2 + $0x170] sm:$0xff] 0.0
        %776 = vst [vmem:[#allocation2 + $0x178] sm:$0x3] 0.0
        %777 = vst [vmem:[#allocation2 + $0x180] sm:$0xff] 0.0
        %778 = vst [vmem:[#allocation2 + $0x188] sm:$0xff] 0.0
        %779 = vst [vmem:[#allocation2 + $0x190] sm:$0x3] 0.0
        %780 = vst [vmem:[#allocation2 + $0x198] sm:$0xff] 0.0
        %781 = vst [vmem:[#allocation2 + $0x1a0] sm:$0xff] 0.0
        %782 = vst [vmem:[#allocation2 + $0x1a8] sm:$0x3] 0.0
        %s783 = scalar_lea.vmem [#allocation2], 24
        %784 = vst [vmem:[%s783 + $0x1] sm:$0xff] %v697
        %785 = vst [vmem:[%s783 + $0x9] sm:$0xff] %v698
        %786 = vst [vmem:[%s783 + $0x19] sm:$0xff] %v699
        %787 = vst [vmem:[%s783 + $0x21] sm:$0xff] %v700
        %788 = vst [vmem:[%s783 + $0x31] sm:$0xff] %v701
        %789 = vst [vmem:[%s783 + $0x39] sm:$0xff] %v702
        %790 = vst [vmem:[%s783 + $0x49] sm:$0xff] %v703
        %791 = vst [vmem:[%s783 + $0x51] sm:$0xff] %v704
        %792 = vst [vmem:[%s783 + $0x61] sm:$0xff] %v705
        %793 = vst [vmem:[%s783 + $0x69] sm:$0xff] %v706
        %794 = vst [vmem:[%s783 + $0x79] sm:$0xff] %v707
        %795 = vst [vmem:[%s783 + $0x81] sm:$0xff] %v708
        %796 = vst [vmem:[%s783 + $0x91] sm:$0xff] %v709
        %797 = vst [vmem:[%s783 + $0x99] sm:$0xff] %v710
        %798 = vst [vmem:[%s783 + $0xa9] sm:$0xff] %v711
        %799 = vst [vmem:[%s783 + $0xb1] sm:$0xff] %v712
        %800 = vst [vmem:[%s783 + $0xc1] sm:$0xff] %v713
        %801 = vst [vmem:[%s783 + $0xc9] sm:$0xff] %v714
        %802 = vst [vmem:[%s783 + $0xd9] sm:$0xff] %v715
        %803 = vst [vmem:[%s783 + $0xe1] sm:$0xff] %v716
        %804 = vst [vmem:[%s783 + $0xf1] sm:$0xff] %v717
        %805 = vst [vmem:[%s783 + $0xf9] sm:$0xff] %v718
        %806 = vst [vmem:[%s783 + $0x109] sm:$0xff] %v719
        %807 = vst [vmem:[%s783 + $0x111] sm:$0xff] %v720
        %808 = vst [vmem:[%s783 + $0x121] sm:$0xff] %v721
        %809 = vst [vmem:[%s783 + $0x129] sm:$0xff] %v722
        %810 = vst [vmem:[%s783 + $0x139] sm:$0xff] %v723
        %811 = vst [vmem:[%s783 + $0x141] sm:$0xff] %v724
        %812 = vst [vmem:[%s783 + $0x151] sm:$0xff] %v725
        %813 = vst [vmem:[%s783 + $0x159] sm:$0xff] %v726
        %814 = vst [vmem:[%s783 + $0x169] sm:$0xff] %v727
        %815 = vst [vmem:[%s783 + $0x171] sm:$0xff] %v728
        %v816 = vld [vmem:[#allocation2] sm:$0xff]
        %v817 = vld [vmem:[#allocation2 + $0x8] sm:$0xff]
        %v818 = vld [vmem:[#allocation2 + $0x10] sm:$0x3]
        %v819 = vld [vmem:[#allocation2 + $0x18] sm:$0xff]
        %v820 = vld [vmem:[#allocation2 + $0x20] sm:$0xff]
        %v821 = vld [vmem:[#allocation2 + $0x28] sm:$0x3]
        %v822 = vld [vmem:[#allocation2 + $0x30] sm:$0xff]
        %v823 = vld [vmem:[#allocation2 + $0x38] sm:$0xff]
        %v824 = vld [vmem:[#allocation2 + $0x40] sm:$0x3]
        %v825 = vld [vmem:[#allocation2 + $0x48] sm:$0xff]
        %v826 = vld [vmem:[#allocation2 + $0x50] sm:$0xff]
        %v827 = vld [vmem:[#allocation2 + $0x58] sm:$0x3]
        %v828 = vld [vmem:[#allocation2 + $0x60] sm:$0xff]
        %v829 = vld [vmem:[#allocation2 + $0x68] sm:$0xff]
        %v830 = vld [vmem:[#allocation2 + $0x70] sm:$0x3]
        %v831 = vld [vmem:[#allocation2 + $0x78] sm:$0xff]
        %v832 = vld [vmem:[#allocation2 + $0x80] sm:$0xff]
        %v833 = vld [vmem:[#allocation2 + $0x88] sm:$0x3]
        %v834 = vld [vmem:[#allocation2 + $0x90] sm:$0xff]
        %v835 = vld [vmem:[#allocation2 + $0x98] sm:$0xff]
        %v836 = vld [vmem:[#allocation2 + $0xa0] sm:$0x3]
        %v837 = vld [vmem:[#allocation2 + $0xa8] sm:$0xff]
        %v838 = vld [vmem:[#allocation2 + $0xb0] sm:$0xff]
        %v839 = vld [vmem:[#allocation2 + $0xb8] sm:$0x3]
        %v840 = vld [vmem:[#allocation2 + $0xc0] sm:$0xff]
        %v841 = vld [vmem:[#allocation2 + $0xc8] sm:$0xff]
        %v842 = vld [vmem:[#allocation2 + $0xd0] sm:$0x3]
        %v843 = vld [vmem:[#allocation2 + $0xd8] sm:$0xff]
        %v844 = vld [vmem:[#allocation2 + $0xe0] sm:$0xff]
        %v845 = vld [vmem:[#allocation2 + $0xe8] sm:$0x3]
        %v846 = vld [vmem:[#allocation2 + $0xf0] sm:$0xff]
        %v847 = vld [vmem:[#allocation2 + $0xf8] sm:$0xff]
        %v848 = vld [vmem:[#allocation2 + $0x100] sm:$0x3]
        %v849 = vld [vmem:[#allocation2 + $0x108] sm:$0xff]
        %v850 = vld [vmem:[#allocation2 + $0x110] sm:$0xff]
        %v851 = vld [vmem:[#allocation2 + $0x118] sm:$0x3]
        %v852 = vld [vmem:[#allocation2 + $0x120] sm:$0xff]
        %v853 = vld [vmem:[#allocation2 + $0x128] sm:$0xff]
        %v854 = vld [vmem:[#allocation2 + $0x130] sm:$0x3]
        %v855 = vld [vmem:[#allocation2 + $0x138] sm:$0xff]
        %v856 = vld [vmem:[#allocation2 + $0x140] sm:$0xff]
        %v857 = vld [vmem:[#allocation2 + $0x148] sm:$0x3]
        %v858 = vld [vmem:[#allocation2 + $0x150] sm:$0xff]
        %v859 = vld [vmem:[#allocation2 + $0x158] sm:$0xff]
        %v860 = vld [vmem:[#allocation2 + $0x160] sm:$0x3]
        %v861 = vld [vmem:[#allocation2 + $0x168] sm:$0xff]
        %v862 = vld [vmem:[#allocation2 + $0x170] sm:$0xff]
        %v863 = vld [vmem:[#allocation2 + $0x178] sm:$0x3]
        %v864 = vld [vmem:[#allocation2 + $0x180] sm:$0xff]
        %v865 = vld [vmem:[#allocation2 + $0x188] sm:$0xff]
        %v866 = vld [vmem:[#allocation2 + $0x190] sm:$0x3]
        %v867 = vpack.c.bf16 %v816, %v816
        %v868 = vpack.c.bf16 %v817, %v817
        %v869 = vpack.c.bf16 %v818, %v818
        %v870 = vpack.c.bf16 %v819, %v819
        %v871 = vpack.c.bf16 %v820, %v820
        %v872 = vpack.c.bf16 %v821, %v821
        %v873 = vpack.c.bf16 %v822, %v822
        %v874 = vpack.c.bf16 %v823, %v823
        %v875 = vpack.c.bf16 %v824, %v824
        %v876 = vpack.c.bf16 %v825, %v825
        %v877 = vpack.c.bf16 %v826, %v826
        %v878 = vpack.c.bf16 %v827, %v827
        %v879 = vpack.c.bf16 %v828, %v828
        %v880 = vpack.c.bf16 %v829, %v829
        %v881 = vpack.c.bf16 %v830, %v830
        %v882 = vpack.c.bf16 %v831, %v831
        %v883 = vpack.c.bf16 %v832, %v832
        %v884 = vpack.c.bf16 %v833, %v833
        %v885 = vpack.c.bf16 %v834, %v834
        %v886 = vpack.c.bf16 %v835, %v835
        %v887 = vpack.c.bf16 %v836, %v836
        %v888 = vpack.c.bf16 %v837, %v837
        %v889 = vpack.c.bf16 %v838, %v838
        %v890 = vpack.c.bf16 %v839, %v839
        %v891 = vpack.c.bf16 %v840, %v840
        %v892 = vpack.c.bf16 %v841, %v841
        %v893 = vpack.c.bf16 %v842, %v842
        %v894 = vpack.c.bf16 %v843, %v843
        %v895 = vpack.c.bf16 %v844, %v844
        %v896 = vpack.c.bf16 %v845, %v845
        %v897 = vpack.c.bf16 %v846, %v846
        %v898 = vpack.c.bf16 %v847, %v847
        %v899 = vpack.c.bf16 %v848, %v848
        %v900 = vpack.c.bf16 %v849, %v849
        %v901 = vpack.c.bf16 %v850, %v850
        %v902 = vpack.c.bf16 %v851, %v851
        %v903 = vpack.c.bf16 %v852, %v852
        %v904 = vpack.c.bf16 %v853, %v853
        %v905 = vpack.c.bf16 %v854, %v854
        %v906 = vpack.c.bf16 %v855, %v855
        %v907 = vpack.c.bf16 %v856, %v856
        %v908 = vpack.c.bf16 %v857, %v857
        %v909 = vpack.c.bf16 %v858, %v858
        %v910 = vpack.c.bf16 %v859, %v859
        %v911 = vpack.c.bf16 %v860, %v860
        %v912 = vpack.c.bf16 %v861, %v861
        %v913 = vpack.c.bf16 %v862, %v862
        %v914 = vpack.c.bf16 %v863, %v863
        %v915 = vpack.c.bf16 %v864, %v864
        %v916 = vpack.c.bf16 %v865, %v865
        %v917 = vpack.c.bf16 %v866, %v866
        %vm918 = vsmask.f32 3328
        %vm919 = vsmask.f32 7440
        %vm920 = vmor %vm918, %vm919
        %v922 = vshrl.u32 %v867, 16
        %v924 = vrot.slane %v922, 4
        %v925 = vshll.u32 %v867, 16
        %v927 = vrot.slane %v925, 5
        %v928 = vor.u32 %v924, %v927
        %v929 = vrot.slane %v928, 4
        %v931 = vshll.u32 %v868, 16
        %v933 = vrot.slane %v931, 5
        %v934 = vsel %vm920, %v929, %v933
        %v935 = vshrl.u32 %v868, 16
        %v937 = vrot.slane %v935, 4
        %v938 = vor.u32 %v937, %v933
        %v939 = vrot.slane %v938, 4
        %v941 = vshll.u32 %v869, 16
        %v943 = vrot.slane %v941, 5
        %v944 = vsel %vm920, %v939, %v943
        %v946 = vshrl.u32 %v873, 16
        %v948 = vrot.slane %v946, 4
        %v949 = vshll.u32 %v873, 16
        %v951 = vrot.slane %v949, 5
        %v952 = vor.u32 %v948, %v951
        %v953 = vrot.slane %v952, 4
        %v955 = vshll.u32 %v874, 16
        %v957 = vrot.slane %v955, 5
        %v958 = vsel %vm920, %v953, %v957
        %v959 = vshrl.u32 %v874, 16
        %v961 = vrot.slane %v959, 4
        %v962 = vor.u32 %v961, %v957
        %v963 = vrot.slane %v962, 4
        %v965 = vshll.u32 %v875, 16
        %v967 = vrot.slane %v965, 5
        %v968 = vsel %vm920, %v963, %v967
        %v970 = vshrl.u32 %v879, 16
        %v972 = vrot.slane %v970, 4
        %v973 = vshll.u32 %v879, 16
        %v975 = vrot.slane %v973, 5
        %v976 = vor.u32 %v972, %v975
        %v977 = vrot.slane %v976, 4
        %v979 = vshll.u32 %v880, 16
        %v981 = vrot.slane %v979, 5
        %v982 = vsel %vm920, %v977, %v981
        %v983 = vshrl.u32 %v880, 16
        %v985 = vrot.slane %v983, 4
        %v986 = vor.u32 %v985, %v981
        %v987 = vrot.slane %v986, 4
        %v989 = vshll.u32 %v881, 16
        %v991 = vrot.slane %v989, 5
        %v992 = vsel %vm920, %v987, %v991
        %v994 = vshrl.u32 %v885, 16
        %v996 = vrot.slane %v994, 4
        %v997 = vshll.u32 %v885, 16
        %v999 = vrot.slane %v997, 5
        %v1000 = vor.u32 %v996, %v999
        %v1001 = vrot.slane %v1000, 4
        %v1003 = vshll.u32 %v886, 16
        %v1005 = vrot.slane %v1003, 5
        %v1006 = vsel %vm920, %v1001, %v1005
        %v1007 = vshrl.u32 %v886, 16
        %v1009 = vrot.slane %v1007, 4
        %v1010 = vor.u32 %v1009, %v1005
        %v1011 = vrot.slane %v1010, 4
        %v1013 = vshll.u32 %v887, 16
        %v1015 = vrot.slane %v1013, 5
        %v1016 = vsel %vm920, %v1011, %v1015
        %v1018 = vshrl.u32 %v891, 16
        %v1020 = vrot.slane %v1018, 4
        %v1021 = vshll.u32 %v891, 16
        %v1023 = vrot.slane %v1021, 5
        %v1024 = vor.u32 %v1020, %v1023
        %v1025 = vrot.slane %v1024, 4
        %v1027 = vshll.u32 %v892, 16
        %v1029 = vrot.slane %v1027, 5
        %v1030 = vsel %vm920, %v1025, %v1029
        %v1031 = vshrl.u32 %v892, 16
        %v1033 = vrot.slane %v1031, 4
        %v1034 = vor.u32 %v1033, %v1029
        %v1035 = vrot.slane %v1034, 4
        %v1037 = vshll.u32 %v893, 16
        %v1039 = vrot.slane %v1037, 5
        %v1040 = vsel %vm920, %v1035, %v1039
        %v1042 = vshrl.u32 %v897, 16
        %v1044 = vrot.slane %v1042, 4
        %v1045 = vshll.u32 %v897, 16
        %v1047 = vrot.slane %v1045, 5
        %v1048 = vor.u32 %v1044, %v1047
        %v1049 = vrot.slane %v1048, 4
        %v1051 = vshll.u32 %v898, 16
        %v1053 = vrot.slane %v1051, 5
        %v1054 = vsel %vm920, %v1049, %v1053
        %v1055 = vshrl.u32 %v898, 16
        %v1057 = vrot.slane %v1055, 4
        %v1058 = vor.u32 %v1057, %v1053
        %v1059 = vrot.slane %v1058, 4
        %v1061 = vshll.u32 %v899, 16
        %v1063 = vrot.slane %v1061, 5
        %v1064 = vsel %vm920, %v1059, %v1063
        %v1066 = vshrl.u32 %v903, 16
        %v1068 = vrot.slane %v1066, 4
        %v1069 = vshll.u32 %v903, 16
        %v1071 = vrot.slane %v1069, 5
        %v1072 = vor.u32 %v1068, %v1071
        %v1073 = vrot.slane %v1072, 4
        %v1075 = vshll.u32 %v904, 16
        %v1077 = vrot.slane %v1075, 5
        %v1078 = vsel %vm920, %v1073, %v1077
        %v1079 = vshrl.u32 %v904, 16
        %v1081 = vrot.slane %v1079, 4
        %v1082 = vor.u32 %v1081, %v1077
        %v1083 = vrot.slane %v1082, 4
        %v1085 = vshll.u32 %v905, 16
        %v1087 = vrot.slane %v1085, 5
        %v1088 = vsel %vm920, %v1083, %v1087
        %v1090 = vshrl.u32 %v909, 16
        %v1092 = vrot.slane %v1090, 4
        %v1093 = vshll.u32 %v909, 16
        %v1095 = vrot.slane %v1093, 5
        %v1096 = vor.u32 %v1092, %v1095
        %v1097 = vrot.slane %v1096, 4
        %v1099 = vshll.u32 %v910, 16
        %v1101 = vrot.slane %v1099, 5
        %v1102 = vsel %vm920, %v1097, %v1101
        %v1103 = vshrl.u32 %v910, 16
        %v1105 = vrot.slane %v1103, 4
        %v1106 = vor.u32 %v1105, %v1101
        %v1107 = vrot.slane %v1106, 4
        %v1109 = vshll.u32 %v911, 16
        %v1111 = vrot.slane %v1109, 5
        %v1112 = vsel %vm920, %v1107, %v1111
        %vm1137 = vcmask 1042432
        %vm1138 = vcmask 1046532
        %vm1139 = vmor %vm1137, %vm1138
        %v1140 = vrot.slane %v867, 5
        %v1141 = vrot.slane %v1140, 4
        %v1142 = vrot.slane %v868, 5
        %v1143 = vsel %vm1139, %v1141, %v1142
        %v1144 = vrot.slane %v1142, 4
        %v1145 = vrot.slane %v869, 5
        %v1146 = vsel %vm1139, %v1144, %v1145
        %v1147 = vrot.slane %v873, 5
        %v1148 = vrot.slane %v1147, 4
        %v1149 = vrot.slane %v874, 5
        %v1150 = vsel %vm1139, %v1148, %v1149
        %v1151 = vrot.slane %v1149, 4
        %v1152 = vrot.slane %v875, 5
        %v1153 = vsel %vm1139, %v1151, %v1152
        %v1154 = vrot.slane %v879, 5
        %v1155 = vrot.slane %v1154, 4
        %v1156 = vrot.slane %v880, 5
        %v1157 = vsel %vm1139, %v1155, %v1156
        %v1158 = vrot.slane %v1156, 4
        %v1159 = vrot.slane %v881, 5
        %v1160 = vsel %vm1139, %v1158, %v1159
        %v1161 = vrot.slane %v885, 5
        %v1162 = vrot.slane %v1161, 4
        %v1163 = vrot.slane %v886, 5
        %v1164 = vsel %vm1139, %v1162, %v1163
        %v1165 = vrot.slane %v1163, 4
        %v1166 = vrot.slane %v887, 5
        %v1167 = vsel %vm1139, %v1165, %v1166
        %v1168 = vrot.slane %v891, 5
        %v1169 = vrot.slane %v1168, 4
        %v1170 = vrot.slane %v892, 5
        %v1171 = vsel %vm1139, %v1169, %v1170
        %v1172 = vrot.slane %v1170, 4
        %v1173 = vrot.slane %v893, 5
        %v1174 = vsel %vm1139, %v1172, %v1173
        %v1175 = vrot.slane %v897, 5
        %v1176 = vrot.slane %v1175, 4
        %v1177 = vrot.slane %v898, 5
        %v1178 = vsel %vm1139, %v1176, %v1177
        %v1179 = vrot.slane %v1177, 4
        %v1180 = vrot.slane %v899, 5
        %v1181 = vsel %vm1139, %v1179, %v1180
        %v1182 = vrot.slane %v903, 5
        %v1183 = vrot.slane %v1182, 4
        %v1184 = vrot.slane %v904, 5
        %v1185 = vsel %vm1139, %v1183, %v1184
        %v1186 = vrot.slane %v1184, 4
        %v1187 = vrot.slane %v905, 5
        %v1188 = vsel %vm1139, %v1186, %v1187
        %v1189 = vrot.slane %v909, 5
        %v1190 = vrot.slane %v1189, 4
        %v1191 = vrot.slane %v910, 5
        %v1192 = vsel %vm1139, %v1190, %v1191
        %v1193 = vrot.slane %v1191, 4
        %v1194 = vrot.slane %v911, 5
        %v1195 = vsel %vm1139, %v1193, %v1194
        %v1197 = vshrl.u32 %v870, 16
        %v1199 = vrot.slane %v1197, 4
        %v1200 = vshll.u32 %v870, 16
        %v1202 = vrot.slane %v1200, 5
        %v1203 = vor.u32 %v1199, %v1202
        %v1204 = vrot.slane %v1203, 4
        %v1206 = vshll.u32 %v871, 16
        %v1208 = vrot.slane %v1206, 5
        %v1209 = vsel %vm920, %v1204, %v1208
        %v1210 = vshrl.u32 %v871, 16
        %v1212 = vrot.slane %v1210, 4
        %v1213 = vor.u32 %v1212, %v1208
        %v1214 = vrot.slane %v1213, 4
        %v1216 = vshll.u32 %v872, 16
        %v1218 = vrot.slane %v1216, 5
        %v1219 = vsel %vm920, %v1214, %v1218
        %v1221 = vshrl.u32 %v876, 16
        %v1223 = vrot.slane %v1221, 4
        %v1224 = vshll.u32 %v876, 16
        %v1226 = vrot.slane %v1224, 5
        %v1227 = vor.u32 %v1223, %v1226
        %v1228 = vrot.slane %v1227, 4
        %v1230 = vshll.u32 %v877, 16
        %v1232 = vrot.slane %v1230, 5
        %v1233 = vsel %vm920, %v1228, %v1232
        %v1234 = vshrl.u32 %v877, 16
        %v1236 = vrot.slane %v1234, 4
        %v1237 = vor.u32 %v1236, %v1232
        %v1238 = vrot.slane %v1237, 4
        %v1240 = vshll.u32 %v878, 16
        %v1242 = vrot.slane %v1240, 5
        %v1243 = vsel %vm920, %v1238, %v1242
        %v1245 = vshrl.u32 %v882, 16
        %v1247 = vrot.slane %v1245, 4
        %v1248 = vshll.u32 %v882, 16
        %v1250 = vrot.slane %v1248, 5
        %v1251 = vor.u32 %v1247, %v1250
        %v1252 = vrot.slane %v1251, 4
        %v1254 = vshll.u32 %v883, 16
        %v1256 = vrot.slane %v1254, 5
        %v1257 = vsel %vm920, %v1252, %v1256
        %v1258 = vshrl.u32 %v883, 16
        %v1260 = vrot.slane %v1258, 4
        %v1261 = vor.u32 %v1260, %v1256
        %v1262 = vrot.slane %v1261, 4
        %v1264 = vshll.u32 %v884, 16
        %v1266 = vrot.slane %v1264, 5
        %v1267 = vsel %vm920, %v1262, %v1266
        %v1269 = vshrl.u32 %v888, 16
        %v1271 = vrot.slane %v1269, 4
        %v1272 = vshll.u32 %v888, 16
        %v1274 = vrot.slane %v1272, 5
        %v1275 = vor.u32 %v1271, %v1274
        %v1276 = vrot.slane %v1275, 4
        %v1278 = vshll.u32 %v889, 16
        %v1280 = vrot.slane %v1278, 5
        %v1281 = vsel %vm920, %v1276, %v1280
        %v1282 = vshrl.u32 %v889, 16
        %v1284 = vrot.slane %v1282, 4
        %v1285 = vor.u32 %v1284, %v1280
        %v1286 = vrot.slane %v1285, 4
        %v1288 = vshll.u32 %v890, 16
        %v1290 = vrot.slane %v1288, 5
        %v1291 = vsel %vm920, %v1286, %v1290
        %v1293 = vshrl.u32 %v894, 16
        %v1295 = vrot.slane %v1293, 4
        %v1296 = vshll.u32 %v894, 16
        %v1298 = vrot.slane %v1296, 5
        %v1299 = vor.u32 %v1295, %v1298
        %v1300 = vrot.slane %v1299, 4
        %v1302 = vshll.u32 %v895, 16
        %v1304 = vrot.slane %v1302, 5
        %v1305 = vsel %vm920, %v1300, %v1304
        %v1306 = vshrl.u32 %v895, 16
        %v1308 = vrot.slane %v1306, 4
        %v1309 = vor.u32 %v1308, %v1304
        %v1310 = vrot.slane %v1309, 4
        %v1312 = vshll.u32 %v896, 16
        %v1314 = vrot.slane %v1312, 5
        %v1315 = vsel %vm920, %v1310, %v1314
        %v1317 = vshrl.u32 %v900, 16
        %v1319 = vrot.slane %v1317, 4
        %v1320 = vshll.u32 %v900, 16
        %v1322 = vrot.slane %v1320, 5
        %v1323 = vor.u32 %v1319, %v1322
        %v1324 = vrot.slane %v1323, 4
        %v1326 = vshll.u32 %v901, 16
        %v1328 = vrot.slane %v1326, 5
        %v1329 = vsel %vm920, %v1324, %v1328
        %v1330 = vshrl.u32 %v901, 16
        %v1332 = vrot.slane %v1330, 4
        %v1333 = vor.u32 %v1332, %v1328
        %v1334 = vrot.slane %v1333, 4
        %v1336 = vshll.u32 %v902, 16
        %v1338 = vrot.slane %v1336, 5
        %v1339 = vsel %vm920, %v1334, %v1338
        %v1341 = vshrl.u32 %v906, 16
        %v1343 = vrot.slane %v1341, 4
        %v1344 = vshll.u32 %v906, 16
        %v1346 = vrot.slane %v1344, 5
        %v1347 = vor.u32 %v1343, %v1346
        %v1348 = vrot.slane %v1347, 4
        %v1350 = vshll.u32 %v907, 16
        %v1352 = vrot.slane %v1350, 5
        %v1353 = vsel %vm920, %v1348, %v1352
        %v1354 = vshrl.u32 %v907, 16
        %v1356 = vrot.slane %v1354, 4
        %v1357 = vor.u32 %v1356, %v1352
        %v1358 = vrot.slane %v1357, 4
        %v1360 = vshll.u32 %v908, 16
        %v1362 = vrot.slane %v1360, 5
        %v1363 = vsel %vm920, %v1358, %v1362
        %v1365 = vshrl.u32 %v912, 16
        %v1367 = vrot.slane %v1365, 4
        %v1368 = vshll.u32 %v912, 16
        %v1370 = vrot.slane %v1368, 5
        %v1371 = vor.u32 %v1367, %v1370
        %v1372 = vrot.slane %v1371, 4
        %v1374 = vshll.u32 %v913, 16
        %v1376 = vrot.slane %v1374, 5
        %v1377 = vsel %vm920, %v1372, %v1376
        %v1378 = vshrl.u32 %v913, 16
        %v1380 = vrot.slane %v1378, 4
        %v1381 = vor.u32 %v1380, %v1376
        %v1382 = vrot.slane %v1381, 4
        %v1384 = vshll.u32 %v914, 16
        %v1386 = vrot.slane %v1384, 5
        %v1387 = vsel %vm920, %v1382, %v1386
        %v1412 = vrot.slane %v870, 5
        %v1413 = vrot.slane %v1412, 4
        %v1414 = vrot.slane %v871, 5
        %v1415 = vsel %vm1139, %v1413, %v1414
        %v1416 = vrot.slane %v1414, 4
        %v1417 = vrot.slane %v872, 5
        %v1418 = vsel %vm1139, %v1416, %v1417
        %v1419 = vrot.slane %v876, 5
        %v1420 = vrot.slane %v1419, 4
        %v1421 = vrot.slane %v877, 5
        %v1422 = vsel %vm1139, %v1420, %v1421
        %v1423 = vrot.slane %v1421, 4
        %v1424 = vrot.slane %v878, 5
        %v1425 = vsel %vm1139, %v1423, %v1424
        %v1426 = vrot.slane %v882, 5
        %v1427 = vrot.slane %v1426, 4
        %v1428 = vrot.slane %v883, 5
        %v1429 = vsel %vm1139, %v1427, %v1428
        %v1430 = vrot.slane %v1428, 4
        %v1431 = vrot.slane %v884, 5
        %v1432 = vsel %vm1139, %v1430, %v1431
        %v1433 = vrot.slane %v888, 5
        %v1434 = vrot.slane %v1433, 4
        %v1435 = vrot.slane %v889, 5
        %v1436 = vsel %vm1139, %v1434, %v1435
        %v1437 = vrot.slane %v1435, 4
        %v1438 = vrot.slane %v890, 5
        %v1439 = vsel %vm1139, %v1437, %v1438
        %v1440 = vrot.slane %v894, 5
        %v1441 = vrot.slane %v1440, 4
        %v1442 = vrot.slane %v895, 5
        %v1443 = vsel %vm1139, %v1441, %v1442
        %v1444 = vrot.slane %v1442, 4
        %v1445 = vrot.slane %v896, 5
        %v1446 = vsel %vm1139, %v1444, %v1445
        %v1447 = vrot.slane %v900, 5
        %v1448 = vrot.slane %v1447, 4
        %v1449 = vrot.slane %v901, 5
        %v1450 = vsel %vm1139, %v1448, %v1449
        %v1451 = vrot.slane %v1449, 4
        %v1452 = vrot.slane %v902, 5
        %v1453 = vsel %vm1139, %v1451, %v1452
        %v1454 = vrot.slane %v906, 5
        %v1455 = vrot.slane %v1454, 4
        %v1456 = vrot.slane %v907, 5
        %v1457 = vsel %vm1139, %v1455, %v1456
        %v1458 = vrot.slane %v1456, 4
        %v1459 = vrot.slane %v908, 5
        %v1460 = vsel %vm1139, %v1458, %v1459
        %v1461 = vrot.slane %v912, 5
        %v1462 = vrot.slane %v1461, 4
        %v1463 = vrot.slane %v913, 5
        %v1464 = vsel %vm1139, %v1462, %v1463
        %v1465 = vrot.slane %v1463, 4
        %v1466 = vrot.slane %v914, 5
        %v1467 = vsel %vm1139, %v1465, %v1466
        %v1469 = vshrl.u32 %v915, 16
        %v1471 = vrot.slane %v1469, 4
        %v1472 = vshll.u32 %v915, 16
        %v1474 = vrot.slane %v1472, 5
        %v1475 = vor.u32 %v1471, %v1474
        %v1476 = vrot.slane %v1475, 4
        %v1478 = vshll.u32 %v916, 16
        %v1480 = vrot.slane %v1478, 5
        %v1481 = vsel %vm920, %v1476, %v1480
        %v1482 = vshrl.u32 %v916, 16
        %v1484 = vrot.slane %v1482, 4
        %v1485 = vor.u32 %v1484, %v1480
        %v1486 = vrot.slane %v1485, 4
        %v1488 = vshll.u32 %v917, 16
        %v1490 = vrot.slane %v1488, 5
        %v1491 = vsel %vm920, %v1486, %v1490
        %v1495 = vrot.slane %v915, 5
        %v1496 = vrot.slane %v1495, 4
        %v1497 = vrot.slane %v916, 5
        %v1498 = vsel %vm1139, %v1496, %v1497
        %v1499 = vrot.slane %v1497, 4
        %v1500 = vrot.slane %v917, 5
        %v1501 = vsel %vm1139, %v1499, %v1500
        %v1502 = vunpack.c.l.b16 %v867
        %v1503 = vunpack.c.l.b16 %v868
        %v1504 = vunpack.c.l.b16 %v873
        %v1505 = vunpack.c.l.b16 %v874
        %v1506 = vunpack.c.l.b16 %v879
        %v1507 = vunpack.c.l.b16 %v880
        %v1508 = vunpack.c.l.b16 %v885
        %v1509 = vunpack.c.l.b16 %v886
        %v1510 = vunpack.c.l.b16 %v891
        %v1511 = vunpack.c.l.b16 %v892
        %v1512 = vunpack.c.l.b16 %v897
        %v1513 = vunpack.c.l.b16 %v898
        %v1514 = vunpack.c.l.b16 %v903
        %v1515 = vunpack.c.l.b16 %v904
        %v1516 = vunpack.c.l.b16 %v909
        %v1517 = vunpack.c.l.b16 %v910
        %v1518 = vpack.c.b16 %v1503, %v1502
        %v1519 = vpack.c.b16 %v1505, %v1504
        %v1520 = vpack.c.b16 %v1507, %v1506
        %v1521 = vpack.c.b16 %v1509, %v1508
        %v1522 = vpack.c.b16 %v1511, %v1510
        %v1523 = vpack.c.b16 %v1513, %v1512
        %v1524 = vpack.c.b16 %v1515, %v1514
        %v1525 = vpack.c.b16 %v1517, %v1516
        %v1534 = vunpack.c.l.b16 %v934
        %v1535 = vunpack.c.l.b16 %v944
        %v1536 = vunpack.c.l.b16 %v958
        %v1537 = vunpack.c.l.b16 %v968
        %v1538 = vunpack.c.l.b16 %v982
        %v1539 = vunpack.c.l.b16 %v992
        %v1540 = vunpack.c.l.b16 %v1006
        %v1541 = vunpack.c.l.b16 %v1016
        %v1542 = vunpack.c.l.b16 %v1030
        %v1543 = vunpack.c.l.b16 %v1040
        %v1544 = vunpack.c.l.b16 %v1054
        %v1545 = vunpack.c.l.b16 %v1064
        %v1546 = vunpack.c.l.b16 %v1078
        %v1547 = vunpack.c.l.b16 %v1088
        %v1548 = vunpack.c.l.b16 %v1102
        %v1549 = vunpack.c.l.b16 %v1112
        %v1550 = vpack.c.b16 %v1535, %v1534
        %v1551 = vpack.c.b16 %v1537, %v1536
        %v1552 = vpack.c.b16 %v1539, %v1538
        %v1553 = vpack.c.b16 %v1541, %v1540
        %v1554 = vpack.c.b16 %v1543, %v1542
        %v1555 = vpack.c.b16 %v1545, %v1544
        %v1556 = vpack.c.b16 %v1547, %v1546
        %v1557 = vpack.c.b16 %v1549, %v1548
        %v1566 = vunpack.c.l.b16 %v1143
        %v1567 = vunpack.c.l.b16 %v1146
        %v1568 = vunpack.c.l.b16 %v1150
        %v1569 = vunpack.c.l.b16 %v1153
        %v1570 = vunpack.c.l.b16 %v1157
        %v1571 = vunpack.c.l.b16 %v1160
        %v1572 = vunpack.c.l.b16 %v1164
        %v1573 = vunpack.c.l.b16 %v1167
        %v1574 = vunpack.c.l.b16 %v1171
        %v1575 = vunpack.c.l.b16 %v1174
        %v1576 = vunpack.c.l.b16 %v1178
        %v1577 = vunpack.c.l.b16 %v1181
        %v1578 = vunpack.c.l.b16 %v1185
        %v1579 = vunpack.c.l.b16 %v1188
        %v1580 = vunpack.c.l.b16 %v1192
        %v1581 = vunpack.c.l.b16 %v1195
        %v1582 = vpack.c.b16 %v1567, %v1566
        %v1583 = vpack.c.b16 %v1569, %v1568
        %v1584 = vpack.c.b16 %v1571, %v1570
        %v1585 = vpack.c.b16 %v1573, %v1572
        %v1586 = vpack.c.b16 %v1575, %v1574
        %v1587 = vpack.c.b16 %v1577, %v1576
        %v1588 = vpack.c.b16 %v1579, %v1578
        %v1589 = vpack.c.b16 %v1581, %v1580
        %v1598 = vunpack.c.l.b16 %v870
        %v1599 = vunpack.c.l.b16 %v871
        %v1600 = vunpack.c.l.b16 %v876
        %v1601 = vunpack.c.l.b16 %v877
        %v1602 = vunpack.c.l.b16 %v882
        %v1603 = vunpack.c.l.b16 %v883
        %v1604 = vunpack.c.l.b16 %v888
        %v1605 = vunpack.c.l.b16 %v889
        %v1606 = vunpack.c.l.b16 %v894
        %v1607 = vunpack.c.l.b16 %v895
        %v1608 = vunpack.c.l.b16 %v900
        %v1609 = vunpack.c.l.b16 %v901
        %v1610 = vunpack.c.l.b16 %v906
        %v1611 = vunpack.c.l.b16 %v907
        %v1612 = vunpack.c.l.b16 %v912
        %v1613 = vunpack.c.l.b16 %v913
        %v1614 = vpack.c.b16 %v1599, %v1598
        %v1615 = vpack.c.b16 %v1601, %v1600
        %v1616 = vpack.c.b16 %v1603, %v1602
        %v1617 = vpack.c.b16 %v1605, %v1604
        %v1618 = vpack.c.b16 %v1607, %v1606
        %v1619 = vpack.c.b16 %v1609, %v1608
        %v1620 = vpack.c.b16 %v1611, %v1610
        %v1621 = vpack.c.b16 %v1613, %v1612
        %v1630 = vunpack.c.l.b16 %v1209
        %v1631 = vunpack.c.l.b16 %v1219
        %v1632 = vunpack.c.l.b16 %v1233
        %v1633 = vunpack.c.l.b16 %v1243
        %v1634 = vunpack.c.l.b16 %v1257
        %v1635 = vunpack.c.l.b16 %v1267
        %v1636 = vunpack.c.l.b16 %v1281
        %v1637 = vunpack.c.l.b16 %v1291
        %v1638 = vunpack.c.l.b16 %v1305
        %v1639 = vunpack.c.l.b16 %v1315
        %v1640 = vunpack.c.l.b16 %v1329
        %v1641 = vunpack.c.l.b16 %v1339
        %v1642 = vunpack.c.l.b16 %v1353
        %v1643 = vunpack.c.l.b16 %v1363
        %v1644 = vunpack.c.l.b16 %v1377
        %v1645 = vunpack.c.l.b16 %v1387
        %v1646 = vpack.c.b16 %v1631, %v1630
        %v1647 = vpack.c.b16 %v1633, %v1632
        %v1648 = vpack.c.b16 %v1635, %v1634
        %v1649 = vpack.c.b16 %v1637, %v1636
        %v1650 = vpack.c.b16 %v1639, %v1638
        %v1651 = vpack.c.b16 %v1641, %v1640
        %v1652 = vpack.c.b16 %v1643, %v1642
        %v1653 = vpack.c.b16 %v1645, %v1644
        %v1662 = vunpack.c.l.b16 %v1415
        %v1663 = vunpack.c.l.b16 %v1418
        %v1664 = vunpack.c.l.b16 %v1422
        %v1665 = vunpack.c.l.b16 %v1425
        %v1666 = vunpack.c.l.b16 %v1429
        %v1667 = vunpack.c.l.b16 %v1432
        %v1668 = vunpack.c.l.b16 %v1436
        %v1669 = vunpack.c.l.b16 %v1439
        %v1670 = vunpack.c.l.b16 %v1443
        %v1671 = vunpack.c.l.b16 %v1446
        %v1672 = vunpack.c.l.b16 %v1450
        %v1673 = vunpack.c.l.b16 %v1453
        %v1674 = vunpack.c.l.b16 %v1457
        %v1675 = vunpack.c.l.b16 %v1460
        %v1676 = vunpack.c.l.b16 %v1464
        %v1677 = vunpack.c.l.b16 %v1467
        %v1678 = vpack.c.b16 %v1663, %v1662
        %v1679 = vpack.c.b16 %v1665, %v1664
        %v1680 = vpack.c.b16 %v1667, %v1666
        %v1681 = vpack.c.b16 %v1669, %v1668
        %v1682 = vpack.c.b16 %v1671, %v1670
        %v1683 = vpack.c.b16 %v1673, %v1672
        %v1684 = vpack.c.b16 %v1675, %v1674
        %v1685 = vpack.c.b16 %v1677, %v1676
        %v1694 = vunpack.c.l.b16 %v915
        %v1695 = vunpack.c.l.b16 %v916
        %v1696 = vpack.c.b16 %v1695, %v1694
        %v1698 = vunpack.c.l.b16 %v1481
        %v1699 = vunpack.c.l.b16 %v1491
        %v1700 = vpack.c.b16 %v1699, %v1698
        %v1702 = vunpack.c.l.b16 %v1498
        %v1703 = vunpack.c.l.b16 %v1501
        %v1704 = vpack.c.b16 %v1703, %v1702
        %v1706 = vld [vmem:[#allocation3] sm:$0xf]
        %v1707 = vld [vmem:[#allocation3 + $0x4] sm:$0xf]
        %v1708 = vld [vmem:[#allocation3 + $0x8] sm:$0xf]
        %v1709 = vld [vmem:[#allocation3 + $0xc] sm:$0xf]
        %v1710 = vld [vmem:[#allocation3 + $0x10] sm:$0xf]
        %v1711 = vld [vmem:[#allocation3 + $0x14] sm:$0xf]
        %v1712 = vld [vmem:[#allocation3 + $0x18] sm:$0xf]
        %v1713 = vld [vmem:[#allocation3 + $0x1c] sm:$0xf]
        %v1714 = vld [vmem:[#allocation3 + $0x20] sm:$0xf]
        %v1715 = vld [vmem:[#allocation3 + $0x24] sm:$0xf]
        %v1716 = vld [vmem:[#allocation3 + $0x28] sm:$0xf]
        %v1717 = vld [vmem:[#allocation3 + $0x2c] sm:$0xf]
        %v1718 = vld [vmem:[#allocation3 + $0x30] sm:$0xf]
        %v1719 = vld [vmem:[#allocation3 + $0x34] sm:$0xf]
        %v1720 = vld [vmem:[#allocation3 + $0x38] sm:$0xf]
        %v1721 = vld [vmem:[#allocation3 + $0x3c] sm:$0xf]
        %v1722 = vld [vmem:[#allocation3 + $0x40] sm:$0xf]
        %v1723 = vld [vmem:[#allocation3 + $0x44] sm:$0xf]
        %v1724 = vld [vmem:[#allocation3 + $0x48] sm:$0xf]
        %v1725 = vld [vmem:[#allocation3 + $0x4c] sm:$0xf]
        %v1726 = vld [vmem:[#allocation3 + $0x50] sm:$0xf]
        %v1727 = vld [vmem:[#allocation3 + $0x54] sm:$0xf]
        %v1728 = vld [vmem:[#allocation3 + $0x58] sm:$0xf]
        %v1729 = vld [vmem:[#allocation3 + $0x5c] sm:$0xf]
        %v1730 = vld [vmem:[#allocation3 + $0x60] sm:$0xf]
        %v1731 = vld [vmem:[#allocation3 + $0x64] sm:$0xf]
        %v1732 = vld [vmem:[#allocation3 + $0x68] sm:$0xf]
        %v1733 = vld [vmem:[#allocation3 + $0x6c] sm:$0xf]
        %v1734 = vld [vmem:[#allocation3 + $0x70] sm:$0xf]
        %v1735 = vld [vmem:[#allocation3 + $0x74] sm:$0xf]
        %v1736 = vld [vmem:[#allocation3 + $0x78] sm:$0xf]
        %v1737 = vld [vmem:[#allocation3 + $0x7c] sm:$0xf]
        %v1738 = vld [vmem:[#allocation3 + $0x80] sm:$0xf]
        %v1739 = vld [vmem:[#allocation3 + $0x84] sm:$0xf]
        %v1740 = vld [vmem:[#allocation3 + $0x88] sm:$0xf]
        %v1741 = vld [vmem:[#allocation3 + $0x8c] sm:$0xf]
        %v1742 = vld [vmem:[#allocation3 + $0x90] sm:$0xf]
        %v1743 = vld [vmem:[#allocation3 + $0x94] sm:$0xf]
        %v1744 = vld [vmem:[#allocation3 + $0x98] sm:$0xf]
        %v1745 = vld [vmem:[#allocation3 + $0x9c] sm:$0xf]
        %v1746 = vld [vmem:[#allocation3 + $0xa0] sm:$0xf]
        %v1747 = vld [vmem:[#allocation3 + $0xa4] sm:$0xf]
        %v1748 = vld [vmem:[#allocation3 + $0xa8] sm:$0xf]
        %v1749 = vld [vmem:[#allocation3 + $0xac] sm:$0xf]
        %v1750 = vld [vmem:[#allocation3 + $0xb0] sm:$0xf]
        %v1751 = vld [vmem:[#allocation3 + $0xb4] sm:$0xf]
        %v1752 = vld [vmem:[#allocation3 + $0xb8] sm:$0xf]
        %v1753 = vld [vmem:[#allocation3 + $0xbc] sm:$0xf]
        %v1754 = vld [vmem:[#allocation3 + $0xc0] sm:$0xf]
        %v1755 = vld [vmem:[#allocation3 + $0xc4] sm:$0xf]
        %v1756 = vld [vmem:[#allocation3 + $0xc8] sm:$0xf]
        %v1757 = vld [vmem:[#allocation3 + $0xcc] sm:$0xf]
        %v1758 = vld [vmem:[#allocation3 + $0xd0] sm:$0xf]
        %v1759 = vld [vmem:[#allocation3 + $0xd4] sm:$0xf]
        %v1760 = vld [vmem:[#allocation3 + $0xd8] sm:$0xf]
        %v1761 = vld [vmem:[#allocation3 + $0xdc] sm:$0xf]
        %v1762 = vld [vmem:[#allocation3 + $0xe0] sm:$0xf]
        %v1763 = vld [vmem:[#allocation3 + $0xe4] sm:$0xf]
        %v1764 = vld [vmem:[#allocation3 + $0xe8] sm:$0xf]
        %v1765 = vld [vmem:[#allocation3 + $0xec] sm:$0xf]
        %v1766 = vld [vmem:[#allocation3 + $0xf0] sm:$0xf]
        %v1767 = vld [vmem:[#allocation3 + $0xf4] sm:$0xf]
        %v1768 = vld [vmem:[#allocation3 + $0xf8] sm:$0xf]
        %v1769 = vld [vmem:[#allocation3 + $0xfc] sm:$0xf]
        %v1770 = vld [vmem:[#allocation3 + $0x100] sm:$0xf]
        %v1771 = vld [vmem:[#allocation3 + $0x104] sm:$0xf]
        %v1772 = vld [vmem:[#allocation3 + $0x108] sm:$0xf]
        %v1773 = vld [vmem:[#allocation3 + $0x10c] sm:$0xf]
        %v1774 = vld [vmem:[#allocation3 + $0x110] sm:$0xf]
        %v1775 = vld [vmem:[#allocation3 + $0x114] sm:$0xf]
        %v1776 = vld [vmem:[#allocation3 + $0x118] sm:$0xf]
        %v1777 = vld [vmem:[#allocation3 + $0x11c] sm:$0xf]
        %v1778 = vld [vmem:[#allocation3 + $0x120] sm:$0xf]
        %v1779 = vld [vmem:[#allocation3 + $0x124] sm:$0xf]
        %v1780 = vld [vmem:[#allocation3 + $0x128] sm:$0xf]
        %v1781 = vld [vmem:[#allocation3 + $0x12c] sm:$0xf]
        %v1782 = vld [vmem:[#allocation3 + $0x130] sm:$0xf]
        %v1783 = vld [vmem:[#allocation3 + $0x134] sm:$0xf]
        %v1784 = vld [vmem:[#allocation3 + $0x138] sm:$0xf]
        %v1785 = vld [vmem:[#allocation3 + $0x13c] sm:$0xf]
        %v1786 = vld [vmem:[#allocation3 + $0x140] sm:$0xf]
        %v1787 = vld [vmem:[#allocation3 + $0x144] sm:$0xf]
        %v1788 = vld [vmem:[#allocation3 + $0x148] sm:$0xf]
        %v1789 = vld [vmem:[#allocation3 + $0x14c] sm:$0xf]
        %v1790 = vld [vmem:[#allocation3 + $0x150] sm:$0xf]
        %v1791 = vld [vmem:[#allocation3 + $0x154] sm:$0xf]
        %v1792 = vld [vmem:[#allocation3 + $0x158] sm:$0xf]
        %v1793 = vld [vmem:[#allocation3 + $0x15c] sm:$0xf]
        %v1794 = vld [vmem:[#allocation3 + $0x160] sm:$0xf]
        %v1795 = vld [vmem:[#allocation3 + $0x164] sm:$0xf]
        %v1796 = vld [vmem:[#allocation3 + $0x168] sm:$0xf]
        %v1797 = vld [vmem:[#allocation3 + $0x16c] sm:$0xf]
        %v1798 = vld [vmem:[#allocation3 + $0x170] sm:$0xf]
        %v1799 = vld [vmem:[#allocation3 + $0x174] sm:$0xf]
        %v1800 = vld [vmem:[#allocation3 + $0x178] sm:$0xf]
        %v1801 = vld [vmem:[#allocation3 + $0x17c] sm:$0xf]
        %v1802 = vld [vmem:[#allocation3 + $0x180] sm:$0xf]
        %v1803 = vld [vmem:[#allocation3 + $0x184] sm:$0xf]
        %v1804 = vld [vmem:[#allocation3 + $0x188] sm:$0xf]
        %v1805 = vld [vmem:[#allocation3 + $0x18c] sm:$0xf]
        %v1806 = vld [vmem:[#allocation3 + $0x190] sm:$0xf]
        %v1807 = vld [vmem:[#allocation3 + $0x194] sm:$0xf]
        %v1808 = vld [vmem:[#allocation3 + $0x198] sm:$0xf]
        %v1809 = vld [vmem:[#allocation3 + $0x19c] sm:$0xf]
        %v1810 = vld [vmem:[#allocation3 + $0x1a0] sm:$0xf]
        %v1811 = vld [vmem:[#allocation3 + $0x1a4] sm:$0xf]
        %v1812 = vld [vmem:[#allocation3 + $0x1a8] sm:$0xf]
        %v1813 = vld [vmem:[#allocation3 + $0x1ac] sm:$0xf]
        %v1814 = vld [vmem:[#allocation3 + $0x1b0] sm:$0xf]
        %v1815 = vld [vmem:[#allocation3 + $0x1b4] sm:$0xf]
        %v1816 = vld [vmem:[#allocation3 + $0x1b8] sm:$0xf]
        %v1817 = vld [vmem:[#allocation3 + $0x1bc] sm:$0xf]
        %v1818 = vld [vmem:[#allocation3 + $0x1c0] sm:$0xf]
        %v1819 = vld [vmem:[#allocation3 + $0x1c4] sm:$0xf]
        %v1820 = vld [vmem:[#allocation3 + $0x1c8] sm:$0xf]
        %v1821 = vld [vmem:[#allocation3 + $0x1cc] sm:$0xf]
        %v1822 = vld [vmem:[#allocation3 + $0x1d0] sm:$0xf]
        %v1823 = vld [vmem:[#allocation3 + $0x1d4] sm:$0xf]
        %v1824 = vld [vmem:[#allocation3 + $0x1d8] sm:$0xf]
        %v1825 = vld [vmem:[#allocation3 + $0x1dc] sm:$0xf]
        %v1826 = vld [vmem:[#allocation3 + $0x1e0] sm:$0xf]
        %v1827 = vld [vmem:[#allocation3 + $0x1e4] sm:$0xf]
        %v1828 = vld [vmem:[#allocation3 + $0x1e8] sm:$0xf]
        %v1829 = vld [vmem:[#allocation3 + $0x1ec] sm:$0xf]
        %v1830 = vld [vmem:[#allocation3 + $0x1f0] sm:$0xf]
        %v1831 = vld [vmem:[#allocation3 + $0x1f4] sm:$0xf]
        %v1832 = vld [vmem:[#allocation3 + $0x1f8] sm:$0xf]
        %v1833 = vld [vmem:[#allocation3 + $0x1fc] sm:$0xf]
        %v1834 = vld [vmem:[#allocation3 + $0x200] sm:$0xf]
        %v1835 = vld [vmem:[#allocation3 + $0x204] sm:$0xf]
        %v1836 = vld [vmem:[#allocation3 + $0x208] sm:$0xf]
        %v1837 = vld [vmem:[#allocation3 + $0x20c] sm:$0xf]
        %v1838 = vld [vmem:[#allocation3 + $0x210] sm:$0xf]
        %v1839 = vld [vmem:[#allocation3 + $0x214] sm:$0xf]
        %v1840 = vld [vmem:[#allocation3 + $0x218] sm:$0xf]
        %v1841 = vld [vmem:[#allocation3 + $0x21c] sm:$0xf]
        %v1842 = vld [vmem:[#allocation3 + $0x220] sm:$0xf]
        %v1843 = vld [vmem:[#allocation3 + $0x224] sm:$0xf]
        %v1844 = vld [vmem:[#allocation3 + $0x228] sm:$0xf]
        %v1845 = vld [vmem:[#allocation3 + $0x22c] sm:$0xf]
        %v1846 = vld [vmem:[#allocation3 + $0x230] sm:$0xf]
        %v1847 = vld [vmem:[#allocation3 + $0x234] sm:$0xf]
        %v1848 = vld [vmem:[#allocation3 + $0x238] sm:$0xf]
        %v1849 = vld [vmem:[#allocation3 + $0x23c] sm:$0xf]
        %v1994 = vunpack.c.l.b16 %v1706
        %v1995 = vunpack.c.l.b16 %v1707
        %v1996 = vunpack.c.l.b16 %v1708
        %v1997 = vunpack.c.l.b16 %v1709
        %v1998 = vunpack.c.l.b16 %v1710
        %v1999 = vunpack.c.l.b16 %v1711
        %v2000 = vunpack.c.l.b16 %v1712
        %v2001 = vunpack.c.l.b16 %v1713
        %v2002 = vunpack.c.l.b16 %v1714
        %v2003 = vunpack.c.l.b16 %v1715
        %v2004 = vunpack.c.l.b16 %v1716
        %v2005 = vunpack.c.l.b16 %v1717
        %v2006 = vunpack.c.l.b16 %v1718
        %v2007 = vunpack.c.l.b16 %v1719
        %v2008 = vunpack.c.l.b16 %v1720
        %v2009 = vunpack.c.l.b16 %v1721
        %v2010 = vunpack.c.l.b16 %v1722
        %v2011 = vunpack.c.l.b16 %v1723
        %v2012 = vunpack.c.l.b16 %v1724
        %v2013 = vunpack.c.l.b16 %v1725
        %v2014 = vunpack.c.l.b16 %v1726
        %v2015 = vunpack.c.l.b16 %v1727
        %v2016 = vunpack.c.l.b16 %v1728
        %v2017 = vunpack.c.l.b16 %v1729
        %v2018 = vunpack.c.l.b16 %v1730
        %v2019 = vunpack.c.l.b16 %v1731
        %v2020 = vunpack.c.l.b16 %v1732
        %v2021 = vunpack.c.l.b16 %v1733
        %v2022 = vunpack.c.l.b16 %v1734
        %v2023 = vunpack.c.l.b16 %v1735
        %v2024 = vunpack.c.l.b16 %v1736
        %v2025 = vunpack.c.l.b16 %v1737
        %v2026 = vunpack.c.l.b16 %v1738
        %v2027 = vunpack.c.l.b16 %v1739
        %v2028 = vunpack.c.l.b16 %v1740
        %v2029 = vunpack.c.l.b16 %v1741
        %v2030 = vunpack.c.l.b16 %v1742
        %v2031 = vunpack.c.l.b16 %v1743
        %v2032 = vunpack.c.l.b16 %v1744
        %v2033 = vunpack.c.l.b16 %v1745
        %v2034 = vunpack.c.l.b16 %v1746
        %v2035 = vunpack.c.l.b16 %v1747
        %v2036 = vunpack.c.l.b16 %v1748
        %v2037 = vunpack.c.l.b16 %v1749
        %v2038 = vunpack.c.l.b16 %v1750
        %v2039 = vunpack.c.l.b16 %v1751
        %v2040 = vunpack.c.l.b16 %v1752
        %v2041 = vunpack.c.l.b16 %v1753
        %v2042 = vunpack.c.l.b16 %v1754
        %v2043 = vunpack.c.l.b16 %v1755
        %v2044 = vunpack.c.l.b16 %v1756
        %v2045 = vunpack.c.l.b16 %v1757
        %v2046 = vunpack.c.l.b16 %v1758
        %v2047 = vunpack.c.l.b16 %v1759
        %v2048 = vunpack.c.l.b16 %v1760
        %v2049 = vunpack.c.l.b16 %v1761
        %v2050 = vunpack.c.l.b16 %v1762
        %v2051 = vunpack.c.l.b16 %v1763
        %v2052 = vunpack.c.l.b16 %v1764
        %v2053 = vunpack.c.l.b16 %v1765
        %v2054 = vunpack.c.l.b16 %v1766
        %v2055 = vunpack.c.l.b16 %v1767
        %v2056 = vunpack.c.l.b16 %v1768
        %v2057 = vunpack.c.l.b16 %v1769
        %v2058 = vunpack.c.l.b16 %v1770
        %v2059 = vunpack.c.l.b16 %v1771
        %v2060 = vunpack.c.l.b16 %v1772
        %v2061 = vunpack.c.l.b16 %v1773
        %v2062 = vunpack.c.l.b16 %v1774
        %v2063 = vunpack.c.l.b16 %v1775
        %v2064 = vunpack.c.l.b16 %v1776
        %v2065 = vunpack.c.l.b16 %v1777
        %v2066 = vunpack.c.l.b16 %v1778
        %v2067 = vunpack.c.l.b16 %v1779
        %v2068 = vunpack.c.l.b16 %v1780
        %v2069 = vunpack.c.l.b16 %v1781
        %v2070 = vunpack.c.l.b16 %v1782
        %v2071 = vunpack.c.l.b16 %v1783
        %v2072 = vunpack.c.l.b16 %v1784
        %v2073 = vunpack.c.l.b16 %v1785
        %v2074 = vunpack.c.l.b16 %v1786
        %v2075 = vunpack.c.l.b16 %v1787
        %v2076 = vunpack.c.l.b16 %v1788
        %v2077 = vunpack.c.l.b16 %v1789
        %v2078 = vunpack.c.l.b16 %v1790
        %v2079 = vunpack.c.l.b16 %v1791
        %v2080 = vunpack.c.l.b16 %v1792
        %v2081 = vunpack.c.l.b16 %v1793
        %v2082 = vunpack.c.l.b16 %v1794
        %v2083 = vunpack.c.l.b16 %v1795
        %v2084 = vunpack.c.l.b16 %v1796
        %v2085 = vunpack.c.l.b16 %v1797
        %v2086 = vunpack.c.l.b16 %v1798
        %v2087 = vunpack.c.l.b16 %v1799
        %v2088 = vunpack.c.l.b16 %v1800
        %v2089 = vunpack.c.l.b16 %v1801
        %v2090 = vunpack.c.l.b16 %v1802
        %v2091 = vunpack.c.l.b16 %v1803
        %v2092 = vunpack.c.l.b16 %v1804
        %v2093 = vunpack.c.l.b16 %v1805
        %v2094 = vunpack.c.l.b16 %v1806
        %v2095 = vunpack.c.l.b16 %v1807
        %v2096 = vunpack.c.l.b16 %v1808
        %v2097 = vunpack.c.l.b16 %v1809
        %v2098 = vunpack.c.l.b16 %v1810
        %v2099 = vunpack.c.l.b16 %v1811
        %v2100 = vunpack.c.l.b16 %v1812
        %v2101 = vunpack.c.l.b16 %v1813
        %v2102 = vunpack.c.l.b16 %v1814
        %v2103 = vunpack.c.l.b16 %v1815
        %v2104 = vunpack.c.l.b16 %v1816
        %v2105 = vunpack.c.l.b16 %v1817
        %v2106 = vunpack.c.l.b16 %v1818
        %v2107 = vunpack.c.l.b16 %v1819
        %v2108 = vunpack.c.l.b16 %v1820
        %v2109 = vunpack.c.l.b16 %v1821
        %v2110 = vunpack.c.l.b16 %v1822
        %v2111 = vunpack.c.l.b16 %v1823
        %v2112 = vunpack.c.l.b16 %v1824
        %v2113 = vunpack.c.l.b16 %v1825
        %v2114 = vunpack.c.l.b16 %v1826
        %v2115 = vunpack.c.l.b16 %v1827
        %v2116 = vunpack.c.l.b16 %v1828
        %v2117 = vunpack.c.l.b16 %v1829
        %v2118 = vunpack.c.l.b16 %v1830
        %v2119 = vunpack.c.l.b16 %v1831
        %v2120 = vunpack.c.l.b16 %v1832
        %v2121 = vunpack.c.l.b16 %v1833
        %v2122 = vunpack.c.l.b16 %v1834
        %v2123 = vunpack.c.l.b16 %v1835
        %v2124 = vunpack.c.l.b16 %v1836
        %v2125 = vunpack.c.l.b16 %v1837
        %v2126 = vunpack.c.l.b16 %v1838
        %v2127 = vunpack.c.l.b16 %v1839
        %v2128 = vunpack.c.l.b16 %v1840
        %v2129 = vunpack.c.l.b16 %v1841
        %v2130 = vunpack.c.l.b16 %v1842
        %v2131 = vunpack.c.l.b16 %v1843
        %v2132 = vunpack.c.l.b16 %v1844
        %v2133 = vunpack.c.l.b16 %v1845
        %v2134 = vunpack.c.l.b16 %v1846
        %v2135 = vunpack.c.l.b16 %v1847
        %v2136 = vunpack.c.l.b16 %v1848
        %v2137 = vunpack.c.l.b16 %v1849
        %v2138 = vpack.c.b16 %v1995, %v1994
        %v2139 = vpack.c.b16 %v1997, %v1996
        %v2140 = vpack.c.b16 %v1999, %v1998
        %v2141 = vpack.c.b16 %v2001, %v2000
        %v2142 = vpack.c.b16 %v2003, %v2002
        %v2143 = vpack.c.b16 %v2005, %v2004
        %v2144 = vpack.c.b16 %v2007, %v2006
        %v2145 = vpack.c.b16 %v2009, %v2008
        %v2146 = vpack.c.b16 %v2011, %v2010
        %v2147 = vpack.c.b16 %v2013, %v2012
        %v2148 = vpack.c.b16 %v2015, %v2014
        %v2149 = vpack.c.b16 %v2017, %v2016
        %v2150 = vpack.c.b16 %v2019, %v2018
        %v2151 = vpack.c.b16 %v2021, %v2020
        %v2152 = vpack.c.b16 %v2023, %v2022
        %v2153 = vpack.c.b16 %v2025, %v2024
        %v2154 = vpack.c.b16 %v2027, %v2026
        %v2155 = vpack.c.b16 %v2029, %v2028
        %v2156 = vpack.c.b16 %v2031, %v2030
        %v2157 = vpack.c.b16 %v2033, %v2032
        %v2158 = vpack.c.b16 %v2035, %v2034
        %v2159 = vpack.c.b16 %v2037, %v2036
        %v2160 = vpack.c.b16 %v2039, %v2038
        %v2161 = vpack.c.b16 %v2041, %v2040
        %v2162 = vpack.c.b16 %v2043, %v2042
        %v2163 = vpack.c.b16 %v2045, %v2044
        %v2164 = vpack.c.b16 %v2047, %v2046
        %v2165 = vpack.c.b16 %v2049, %v2048
        %v2166 = vpack.c.b16 %v2051, %v2050
        %v2167 = vpack.c.b16 %v2053, %v2052
        %v2168 = vpack.c.b16 %v2055, %v2054
        %v2169 = vpack.c.b16 %v2057, %v2056
        %v2170 = vpack.c.b16 %v2059, %v2058
        %v2171 = vpack.c.b16 %v2061, %v2060
        %v2172 = vpack.c.b16 %v2063, %v2062
        %v2173 = vpack.c.b16 %v2065, %v2064
        %v2174 = vpack.c.b16 %v2067, %v2066
        %v2175 = vpack.c.b16 %v2069, %v2068
        %v2176 = vpack.c.b16 %v2071, %v2070
        %v2177 = vpack.c.b16 %v2073, %v2072
        %v2178 = vpack.c.b16 %v2075, %v2074
        %v2179 = vpack.c.b16 %v2077, %v2076
        %v2180 = vpack.c.b16 %v2079, %v2078
        %v2181 = vpack.c.b16 %v2081, %v2080
        %v2182 = vpack.c.b16 %v2083, %v2082
        %v2183 = vpack.c.b16 %v2085, %v2084
        %v2184 = vpack.c.b16 %v2087, %v2086
        %v2185 = vpack.c.b16 %v2089, %v2088
        %v2186 = vpack.c.b16 %v2091, %v2090
        %v2187 = vpack.c.b16 %v2093, %v2092
        %v2188 = vpack.c.b16 %v2095, %v2094
        %v2189 = vpack.c.b16 %v2097, %v2096
        %v2190 = vpack.c.b16 %v2099, %v2098
        %v2191 = vpack.c.b16 %v2101, %v2100
        %v2192 = vpack.c.b16 %v2103, %v2102
        %v2193 = vpack.c.b16 %v2105, %v2104
        %v2194 = vpack.c.b16 %v2107, %v2106
        %v2195 = vpack.c.b16 %v2109, %v2108
        %v2196 = vpack.c.b16 %v2111, %v2110
        %v2197 = vpack.c.b16 %v2113, %v2112
        %v2198 = vpack.c.b16 %v2115, %v2114
        %v2199 = vpack.c.b16 %v2117, %v2116
        %v2200 = vpack.c.b16 %v2119, %v2118
        %v2201 = vpack.c.b16 %v2121, %v2120
        %v2202 = vpack.c.b16 %v2123, %v2122
        %v2203 = vpack.c.b16 %v2125, %v2124
        %v2204 = vpack.c.b16 %v2127, %v2126
        %v2205 = vpack.c.b16 %v2129, %v2128
        %v2206 = vpack.c.b16 %v2131, %v2130
        %v2207 = vpack.c.b16 %v2133, %v2132
        %v2208 = vpack.c.b16 %v2135, %v2134
        %v2209 = vpack.c.b16 %v2137, %v2136
        %2282 = vmatpush.bf16.msra.mxu0 %v2145
        %2283 = vmatpush.bf16.msra.mxu0 %v2144
        %2284 = vmatpush.bf16.msra.mxu0 %v2143
        %2285 = vmatpush.bf16.msra.mxu0 %v2142
        %2286 = vmatpush.bf16.msra.mxu0 %v2141
        %2287 = vmatpush.bf16.msra.mxu0 %v2140
        %2288 = vmatpush.bf16.msra.mxu0 %v2139
        %2289 = vmatpush.bf16.msra.mxu0 %v2138
        %2290 = vmatmul.bf16.gmra.mxu0 %v1518
        %v2291 = vpop.f32.mrf.mxu0
        %v2292 = vadd.f32 0.0, %v2291
        %v2293 = vpop.f32.mrf.mxu0
        %v2294 = vadd.f32 0.0, %v2293
        %2295 = vmatmul.bf16.gmra.mxu0 %v1519
        %v2296 = vpop.f32.mrf.mxu0
        %v2297 = vadd.f32 0.0, %v2296
        %v2298 = vpop.f32.mrf.mxu0
        %v2299 = vadd.f32 0.0, %v2298
        %2300 = vmatmul.bf16.gmra.mxu0 %v1520
        %v2301 = vpop.f32.mrf.mxu0
        %v2302 = vadd.f32 0.0, %v2301
        %v2303 = vpop.f32.mrf.mxu0
        %v2304 = vadd.f32 0.0, %v2303
        %2305 = vmatmul.bf16.gmra.mxu0 %v1521
        %v2306 = vpop.f32.mrf.mxu0
        %v2307 = vadd.f32 0.0, %v2306
        %v2308 = vpop.f32.mrf.mxu0
        %v2309 = vadd.f32 0.0, %v2308
        %2310 = vmatmul.bf16.gmra.mxu0 %v1522
        %v2311 = vpop.f32.mrf.mxu0
        %v2312 = vadd.f32 0.0, %v2311
        %v2313 = vpop.f32.mrf.mxu0
        %v2314 = vadd.f32 0.0, %v2313
        %2315 = vmatmul.bf16.gmra.mxu0 %v1523
        %v2316 = vpop.f32.mrf.mxu0
        %v2317 = vadd.f32 0.0, %v2316
        %v2318 = vpop.f32.mrf.mxu0
        %v2319 = vadd.f32 0.0, %v2318
        %2320 = vmatmul.bf16.gmra.mxu0 %v1524
        %v2321 = vpop.f32.mrf.mxu0
        %v2322 = vadd.f32 0.0, %v2321
        %v2323 = vpop.f32.mrf.mxu0
        %v2324 = vadd.f32 0.0, %v2323
        %2325 = vmatmul.bf16.gmra.mxu0 %v1525
        %v2326 = vpop.f32.mrf.mxu0
        %v2327 = vadd.f32 0.0, %v2326
        %v2328 = vpop.f32.mrf.mxu0
        %v2329 = vadd.f32 0.0, %v2328
        %2330 = vdwg.mxu0
        %2331 = vmatpush.bf16.msra.mxu0 %v2153
        %2332 = vmatpush.bf16.msra.mxu0 %v2152
        %2333 = vmatpush.bf16.msra.mxu0 %v2151
        %2334 = vmatpush.bf16.msra.mxu0 %v2150
        %2335 = vmatpush.bf16.msra.mxu0 %v2149
        %2336 = vmatpush.bf16.msra.mxu0 %v2148
        %2337 = vmatpush.bf16.msra.mxu0 %v2147
        %2338 = vmatpush.bf16.msra.mxu0 %v2146
        %2339 = vmatmul.bf16.gmra.mxu0 %v1550
        %v2340 = vpop.f32.mrf.mxu0
        %v2341 = vadd.f32 %v2292, %v2340
        %v2342 = vpop.f32.mrf.mxu0
        %v2343 = vadd.f32 %v2294, %v2342
        %2344 = vmatmul.bf16.gmra.mxu0 %v1551
        %v2345 = vpop.f32.mrf.mxu0
        %v2346 = vadd.f32 %v2297, %v2345
        %v2347 = vpop.f32.mrf.mxu0
        %v2348 = vadd.f32 %v2299, %v2347
        %2349 = vmatmul.bf16.gmra.mxu0 %v1552
        %v2350 = vpop.f32.mrf.mxu0
        %v2351 = vadd.f32 %v2302, %v2350
        %v2352 = vpop.f32.mrf.mxu0
        %v2353 = vadd.f32 %v2304, %v2352
        %2354 = vmatmul.bf16.gmra.mxu0 %v1553
        %v2355 = vpop.f32.mrf.mxu0
        %v2356 = vadd.f32 %v2307, %v2355
        %v2357 = vpop.f32.mrf.mxu0
        %v2358 = vadd.f32 %v2309, %v2357
        %2359 = vmatmul.bf16.gmra.mxu0 %v1554
        %v2360 = vpop.f32.mrf.mxu0
        %v2361 = vadd.f32 %v2312, %v2360
        %v2362 = vpop.f32.mrf.mxu0
        %v2363 = vadd.f32 %v2314, %v2362
        %2364 = vmatmul.bf16.gmra.mxu0 %v1555
        %v2365 = vpop.f32.mrf.mxu0
        %v2366 = vadd.f32 %v2317, %v2365
        %v2367 = vpop.f32.mrf.mxu0
        %v2368 = vadd.f32 %v2319, %v2367
        %2369 = vmatmul.bf16.gmra.mxu0 %v1556
        %v2370 = vpop.f32.mrf.mxu0
        %v2371 = vadd.f32 %v2322, %v2370
        %v2372 = vpop.f32.mrf.mxu0
        %v2373 = vadd.f32 %v2324, %v2372
        %2374 = vmatmul.bf16.gmra.mxu0 %v1557
        %v2375 = vpop.f32.mrf.mxu0
        %v2376 = vadd.f32 %v2327, %v2375
        %v2377 = vpop.f32.mrf.mxu0
        %v2378 = vadd.f32 %v2329, %v2377
        %2379 = vdwg.mxu0
        %2380 = vmatpush.bf16.msra.mxu0 %v2161
        %2381 = vmatpush.bf16.msra.mxu0 %v2160
        %2382 = vmatpush.bf16.msra.mxu0 %v2159
        %2383 = vmatpush.bf16.msra.mxu0 %v2158
        %2384 = vmatpush.bf16.msra.mxu0 %v2157
        %2385 = vmatpush.bf16.msra.mxu0 %v2156
        %2386 = vmatpush.bf16.msra.mxu0 %v2155
        %2387 = vmatpush.bf16.msra.mxu0 %v2154
        %2388 = vmatmul.bf16.gmra.mxu0 %v1582
        %v2389 = vpop.f32.mrf.mxu0
        %v2390 = vadd.f32 %v2341, %v2389
        %v2391 = vpop.f32.mrf.mxu0
        %v2392 = vadd.f32 %v2343, %v2391
        %2393 = vmatmul.bf16.gmra.mxu0 %v1583
        %v2394 = vpop.f32.mrf.mxu0
        %v2395 = vadd.f32 %v2346, %v2394
        %v2396 = vpop.f32.mrf.mxu0
        %v2397 = vadd.f32 %v2348, %v2396
        %2398 = vmatmul.bf16.gmra.mxu0 %v1584
        %v2399 = vpop.f32.mrf.mxu0
        %v2400 = vadd.f32 %v2351, %v2399
        %v2401 = vpop.f32.mrf.mxu0
        %v2402 = vadd.f32 %v2353, %v2401
        %2403 = vmatmul.bf16.gmra.mxu0 %v1585
        %v2404 = vpop.f32.mrf.mxu0
        %v2405 = vadd.f32 %v2356, %v2404
        %v2406 = vpop.f32.mrf.mxu0
        %v2407 = vadd.f32 %v2358, %v2406
        %2408 = vmatmul.bf16.gmra.mxu0 %v1586
        %v2409 = vpop.f32.mrf.mxu0
        %v2410 = vadd.f32 %v2361, %v2409
        %v2411 = vpop.f32.mrf.mxu0
        %v2412 = vadd.f32 %v2363, %v2411
        %2413 = vmatmul.bf16.gmra.mxu0 %v1587
        %v2414 = vpop.f32.mrf.mxu0
        %v2415 = vadd.f32 %v2366, %v2414
        %v2416 = vpop.f32.mrf.mxu0
        %v2417 = vadd.f32 %v2368, %v2416
        %2418 = vmatmul.bf16.gmra.mxu0 %v1588
        %v2419 = vpop.f32.mrf.mxu0
        %v2420 = vadd.f32 %v2371, %v2419
        %v2421 = vpop.f32.mrf.mxu0
        %v2422 = vadd.f32 %v2373, %v2421
        %2423 = vmatmul.bf16.gmra.mxu0 %v1589
        %v2424 = vpop.f32.mrf.mxu0
        %v2425 = vadd.f32 %v2376, %v2424
        %v2426 = vpop.f32.mrf.mxu0
        %v2427 = vadd.f32 %v2378, %v2426
        %2428 = vdwg.mxu0
        %2429 = vmatpush.bf16.msra.mxu0 %v2169
        %2430 = vmatpush.bf16.msra.mxu0 %v2168
        %2431 = vmatpush.bf16.msra.mxu0 %v2167
        %2432 = vmatpush.bf16.msra.mxu0 %v2166
        %2433 = vmatpush.bf16.msra.mxu0 %v2165
        %2434 = vmatpush.bf16.msra.mxu0 %v2164
        %2435 = vmatpush.bf16.msra.mxu0 %v2163
        %2436 = vmatpush.bf16.msra.mxu0 %v2162
        %2437 = vmatmul.bf16.gmra.mxu0 %v1614
        %v2438 = vpop.f32.mrf.mxu0
        %v2439 = vadd.f32 %v2390, %v2438
        %v2440 = vpop.f32.mrf.mxu0
        %v2441 = vadd.f32 %v2392, %v2440
        %2442 = vmatmul.bf16.gmra.mxu0 %v1615
        %v2443 = vpop.f32.mrf.mxu0
        %v2444 = vadd.f32 %v2395, %v2443
        %v2445 = vpop.f32.mrf.mxu0
        %v2446 = vadd.f32 %v2397, %v2445
        %2447 = vmatmul.bf16.gmra.mxu0 %v1616
        %v2448 = vpop.f32.mrf.mxu0
        %v2449 = vadd.f32 %v2400, %v2448
        %v2450 = vpop.f32.mrf.mxu0
        %v2451 = vadd.f32 %v2402, %v2450
        %2452 = vmatmul.bf16.gmra.mxu0 %v1617
        %v2453 = vpop.f32.mrf.mxu0
        %v2454 = vadd.f32 %v2405, %v2453
        %v2455 = vpop.f32.mrf.mxu0
        %v2456 = vadd.f32 %v2407, %v2455
        %2457 = vmatmul.bf16.gmra.mxu0 %v1618
        %v2458 = vpop.f32.mrf.mxu0
        %v2459 = vadd.f32 %v2410, %v2458
        %v2460 = vpop.f32.mrf.mxu0
        %v2461 = vadd.f32 %v2412, %v2460
        %2462 = vmatmul.bf16.gmra.mxu0 %v1619
        %v2463 = vpop.f32.mrf.mxu0
        %v2464 = vadd.f32 %v2415, %v2463
        %v2465 = vpop.f32.mrf.mxu0
        %v2466 = vadd.f32 %v2417, %v2465
        %2467 = vmatmul.bf16.gmra.mxu0 %v1620
        %v2468 = vpop.f32.mrf.mxu0
        %v2469 = vadd.f32 %v2420, %v2468
        %v2470 = vpop.f32.mrf.mxu0
        %v2471 = vadd.f32 %v2422, %v2470
        %2472 = vmatmul.bf16.gmra.mxu0 %v1621
        %v2473 = vpop.f32.mrf.mxu0
        %v2474 = vadd.f32 %v2425, %v2473
        %v2475 = vpop.f32.mrf.mxu0
        %v2476 = vadd.f32 %v2427, %v2475
        %2477 = vdwg.mxu0
        %2478 = vmatpush.bf16.msra.mxu0 %v2177
        %2479 = vmatpush.bf16.msra.mxu0 %v2176
        %2480 = vmatpush.bf16.msra.mxu0 %v2175
        %2481 = vmatpush.bf16.msra.mxu0 %v2174
        %2482 = vmatpush.bf16.msra.mxu0 %v2173
        %2483 = vmatpush.bf16.msra.mxu0 %v2172
        %2484 = vmatpush.bf16.msra.mxu0 %v2171
        %2485 = vmatpush.bf16.msra.mxu0 %v2170
        %2486 = vmatmul.bf16.gmra.mxu0 %v1646
        %v2487 = vpop.f32.mrf.mxu0
        %v2488 = vadd.f32 %v2439, %v2487
        %v2489 = vpop.f32.mrf.mxu0
        %v2490 = vadd.f32 %v2441, %v2489
        %2491 = vmatmul.bf16.gmra.mxu0 %v1647
        %v2492 = vpop.f32.mrf.mxu0
        %v2493 = vadd.f32 %v2444, %v2492
        %v2494 = vpop.f32.mrf.mxu0
        %v2495 = vadd.f32 %v2446, %v2494
        %2496 = vmatmul.bf16.gmra.mxu0 %v1648
        %v2497 = vpop.f32.mrf.mxu0
        %v2498 = vadd.f32 %v2449, %v2497
        %v2499 = vpop.f32.mrf.mxu0
        %v2500 = vadd.f32 %v2451, %v2499
        %2501 = vmatmul.bf16.gmra.mxu0 %v1649
        %v2502 = vpop.f32.mrf.mxu0
        %v2503 = vadd.f32 %v2454, %v2502
        %v2504 = vpop.f32.mrf.mxu0
        %v2505 = vadd.f32 %v2456, %v2504
        %2506 = vmatmul.bf16.gmra.mxu0 %v1650
        %v2507 = vpop.f32.mrf.mxu0
        %v2508 = vadd.f32 %v2459, %v2507
        %v2509 = vpop.f32.mrf.mxu0
        %v2510 = vadd.f32 %v2461, %v2509
        %2511 = vmatmul.bf16.gmra.mxu0 %v1651
        %v2512 = vpop.f32.mrf.mxu0
        %v2513 = vadd.f32 %v2464, %v2512
        %v2514 = vpop.f32.mrf.mxu0
        %v2515 = vadd.f32 %v2466, %v2514
        %2516 = vmatmul.bf16.gmra.mxu0 %v1652
        %v2517 = vpop.f32.mrf.mxu0
        %v2518 = vadd.f32 %v2469, %v2517
        %v2519 = vpop.f32.mrf.mxu0
        %v2520 = vadd.f32 %v2471, %v2519
        %2521 = vmatmul.bf16.gmra.mxu0 %v1653
        %v2522 = vpop.f32.mrf.mxu0
        %v2523 = vadd.f32 %v2474, %v2522
        %v2524 = vpop.f32.mrf.mxu0
        %v2525 = vadd.f32 %v2476, %v2524
        %2526 = vdwg.mxu0
        %2527 = vmatpush.bf16.msra.mxu0 %v2185
        %2528 = vmatpush.bf16.msra.mxu0 %v2184
        %2529 = vmatpush.bf16.msra.mxu0 %v2183
        %2530 = vmatpush.bf16.msra.mxu0 %v2182
        %2531 = vmatpush.bf16.msra.mxu0 %v2181
        %2532 = vmatpush.bf16.msra.mxu0 %v2180
        %2533 = vmatpush.bf16.msra.mxu0 %v2179
        %2534 = vmatpush.bf16.msra.mxu0 %v2178
        %2535 = vmatmul.bf16.gmra.mxu0 %v1678
        %v2536 = vpop.f32.mrf.mxu0
        %v2537 = vadd.f32 %v2488, %v2536
        %v2538 = vpop.f32.mrf.mxu0
        %v2539 = vadd.f32 %v2490, %v2538
        %2540 = vmatmul.bf16.gmra.mxu0 %v1679
        %v2541 = vpop.f32.mrf.mxu0
        %v2542 = vadd.f32 %v2493, %v2541
        %v2543 = vpop.f32.mrf.mxu0
        %v2544 = vadd.f32 %v2495, %v2543
        %2545 = vmatmul.bf16.gmra.mxu0 %v1680
        %v2546 = vpop.f32.mrf.mxu0
        %v2547 = vadd.f32 %v2498, %v2546
        %v2548 = vpop.f32.mrf.mxu0
        %v2549 = vadd.f32 %v2500, %v2548
        %2550 = vmatmul.bf16.gmra.mxu0 %v1681
        %v2551 = vpop.f32.mrf.mxu0
        %v2552 = vadd.f32 %v2503, %v2551
        %v2553 = vpop.f32.mrf.mxu0
        %v2554 = vadd.f32 %v2505, %v2553
        %2555 = vmatmul.bf16.gmra.mxu0 %v1682
        %v2556 = vpop.f32.mrf.mxu0
        %v2557 = vadd.f32 %v2508, %v2556
        %v2558 = vpop.f32.mrf.mxu0
        %v2559 = vadd.f32 %v2510, %v2558
        %2560 = vmatmul.bf16.gmra.mxu0 %v1683
        %v2561 = vpop.f32.mrf.mxu0
        %v2562 = vadd.f32 %v2513, %v2561
        %v2563 = vpop.f32.mrf.mxu0
        %v2564 = vadd.f32 %v2515, %v2563
        %2565 = vmatmul.bf16.gmra.mxu0 %v1684
        %v2566 = vpop.f32.mrf.mxu0
        %v2567 = vadd.f32 %v2518, %v2566
        %v2568 = vpop.f32.mrf.mxu0
        %v2569 = vadd.f32 %v2520, %v2568
        %2570 = vmatmul.bf16.gmra.mxu0 %v1685
        %v2571 = vpop.f32.mrf.mxu0
        %v2572 = vadd.f32 %v2523, %v2571
        %v2573 = vpop.f32.mrf.mxu0
        %v2574 = vadd.f32 %v2525, %v2573
        %2575 = vdwg.mxu0
        %2576 = vmatpush.bf16.msra.mxu0 %v2193
        %2577 = vmatpush.bf16.msra.mxu0 %v2192
        %2578 = vmatpush.bf16.msra.mxu0 %v2191
        %2579 = vmatpush.bf16.msra.mxu0 %v2190
        %2580 = vmatpush.bf16.msra.mxu0 %v2189
        %2581 = vmatpush.bf16.msra.mxu0 %v2188
        %2582 = vmatpush.bf16.msra.mxu0 %v2187
        %2583 = vmatpush.bf16.msra.mxu0 %v2186
        %2584 = vmatmul.bf16.gmra.mxu0 %v1519
        %v2585 = vpop.f32.mrf.mxu0
        %v2586 = vadd.f32 %v2537, %v2585
        %v2587 = vpop.f32.mrf.mxu0
        %v2588 = vadd.f32 %v2539, %v2587
        %2589 = vmatmul.bf16.gmra.mxu0 %v1520
        %v2590 = vpop.f32.mrf.mxu0
        %v2591 = vadd.f32 %v2542, %v2590
        %v2592 = vpop.f32.mrf.mxu0
        %v2593 = vadd.f32 %v2544, %v2592
        %2594 = vmatmul.bf16.gmra.mxu0 %v1521
        %v2595 = vpop.f32.mrf.mxu0
        %v2596 = vadd.f32 %v2547, %v2595
        %v2597 = vpop.f32.mrf.mxu0
        %v2598 = vadd.f32 %v2549, %v2597
        %2599 = vmatmul.bf16.gmra.mxu0 %v1522
        %v2600 = vpop.f32.mrf.mxu0
        %v2601 = vadd.f32 %v2552, %v2600
        %v2602 = vpop.f32.mrf.mxu0
        %v2603 = vadd.f32 %v2554, %v2602
        %2604 = vmatmul.bf16.gmra.mxu0 %v1523
        %v2605 = vpop.f32.mrf.mxu0
        %v2606 = vadd.f32 %v2557, %v2605
        %v2607 = vpop.f32.mrf.mxu0
        %v2608 = vadd.f32 %v2559, %v2607
        %2609 = vmatmul.bf16.gmra.mxu0 %v1524
        %v2610 = vpop.f32.mrf.mxu0
        %v2611 = vadd.f32 %v2562, %v2610
        %v2612 = vpop.f32.mrf.mxu0
        %v2613 = vadd.f32 %v2564, %v2612
        %2614 = vmatmul.bf16.gmra.mxu0 %v1525
        %v2615 = vpop.f32.mrf.mxu0
        %v2616 = vadd.f32 %v2567, %v2615
        %v2617 = vpop.f32.mrf.mxu0
        %v2618 = vadd.f32 %v2569, %v2617
        %2619 = vmatmul.bf16.gmra.mxu0 %v1696
        %v2620 = vpop.f32.mrf.mxu0
        %v2621 = vadd.f32 %v2572, %v2620
        %v2622 = vpop.f32.mrf.mxu0
        %v2623 = vadd.f32 %v2574, %v2622
        %2624 = vdwg.mxu0
        %2625 = vmatpush.bf16.msra.mxu0 %v2201
        %2626 = vmatpush.bf16.msra.mxu0 %v2200
        %2627 = vmatpush.bf16.msra.mxu0 %v2199
        %2628 = vmatpush.bf16.msra.mxu0 %v2198
        %2629 = vmatpush.bf16.msra.mxu0 %v2197
        %2630 = vmatpush.bf16.msra.mxu0 %v2196
        %2631 = vmatpush.bf16.msra.mxu0 %v2195
        %2632 = vmatpush.bf16.msra.mxu0 %v2194
        %2633 = vmatmul.bf16.gmra.mxu0 %v1551
        %v2634 = vpop.f32.mrf.mxu0
        %v2635 = vadd.f32 %v2586, %v2634
        %v2636 = vpop.f32.mrf.mxu0
        %v2637 = vadd.f32 %v2588, %v2636
        %2638 = vmatmul.bf16.gmra.mxu0 %v1552
        %v2639 = vpop.f32.mrf.mxu0
        %v2640 = vadd.f32 %v2591, %v2639
        %v2641 = vpop.f32.mrf.mxu0
        %v2642 = vadd.f32 %v2593, %v2641
        %2643 = vmatmul.bf16.gmra.mxu0 %v1553
        %v2644 = vpop.f32.mrf.mxu0
        %v2645 = vadd.f32 %v2596, %v2644
        %v2646 = vpop.f32.mrf.mxu0
        %v2647 = vadd.f32 %v2598, %v2646
        %2648 = vmatmul.bf16.gmra.mxu0 %v1554
        %v2649 = vpop.f32.mrf.mxu0
        %v2650 = vadd.f32 %v2601, %v2649
        %v2651 = vpop.f32.mrf.mxu0
        %v2652 = vadd.f32 %v2603, %v2651
        %2653 = vmatmul.bf16.gmra.mxu0 %v1555
        %v2654 = vpop.f32.mrf.mxu0
        %v2655 = vadd.f32 %v2606, %v2654
        %v2656 = vpop.f32.mrf.mxu0
        %v2657 = vadd.f32 %v2608, %v2656
        %2658 = vmatmul.bf16.gmra.mxu0 %v1556
        %v2659 = vpop.f32.mrf.mxu0
        %v2660 = vadd.f32 %v2611, %v2659
        %v2661 = vpop.f32.mrf.mxu0
        %v2662 = vadd.f32 %v2613, %v2661
        %2663 = vmatmul.bf16.gmra.mxu0 %v1557
        %v2664 = vpop.f32.mrf.mxu0
        %v2665 = vadd.f32 %v2616, %v2664
        %v2666 = vpop.f32.mrf.mxu0
        %v2667 = vadd.f32 %v2618, %v2666
        %2668 = vmatmul.bf16.gmra.mxu0 %v1700
        %v2669 = vpop.f32.mrf.mxu0
        %v2670 = vadd.f32 %v2621, %v2669
        %v2671 = vpop.f32.mrf.mxu0
        %v2672 = vadd.f32 %v2623, %v2671
        %2673 = vdwg.mxu0
        %2674 = vmatpush.bf16.msra.mxu0 %v2209
        %2675 = vmatpush.bf16.msra.mxu0 %v2208
        %2676 = vmatpush.bf16.msra.mxu0 %v2207
        %2677 = vmatpush.bf16.msra.mxu0 %v2206
        %2678 = vmatpush.bf16.msra.mxu0 %v2205
        %2679 = vmatpush.bf16.msra.mxu0 %v2204
        %2680 = vmatpush.bf16.msra.mxu0 %v2203
        %2681 = vmatpush.bf16.msra.mxu0 %v2202
        %2682 = vmatmul.bf16.gmra.mxu0 %v1583
        %v2683 = vpop.f32.mrf.mxu0
        %v2684 = vadd.f32 %v2635, %v2683
        %v2685 = vpop.f32.mrf.mxu0
        %v2686 = vadd.f32 %v2637, %v2685
        %2687 = vmatmul.bf16.gmra.mxu0 %v1584
        %v2688 = vpop.f32.mrf.mxu0
        %v2689 = vadd.f32 %v2640, %v2688
        %v2690 = vpop.f32.mrf.mxu0
        %v2691 = vadd.f32 %v2642, %v2690
        %2692 = vmatmul.bf16.gmra.mxu0 %v1585
        %v2693 = vpop.f32.mrf.mxu0
        %v2694 = vadd.f32 %v2645, %v2693
        %v2695 = vpop.f32.mrf.mxu0
        %v2696 = vadd.f32 %v2647, %v2695
        %2697 = vmatmul.bf16.gmra.mxu0 %v1586
        %v2698 = vpop.f32.mrf.mxu0
        %v2699 = vadd.f32 %v2650, %v2698
        %v2700 = vpop.f32.mrf.mxu0
        %v2701 = vadd.f32 %v2652, %v2700
        %2702 = vmatmul.bf16.gmra.mxu0 %v1587
        %v2703 = vpop.f32.mrf.mxu0
        %v2704 = vadd.f32 %v2655, %v2703
        %v2705 = vpop.f32.mrf.mxu0
        %v2706 = vadd.f32 %v2657, %v2705
        %2707 = vmatmul.bf16.gmra.mxu0 %v1588
        %v2708 = vpop.f32.mrf.mxu0
        %v2709 = vadd.f32 %v2660, %v2708
        %v2710 = vpop.f32.mrf.mxu0
        %v2711 = vadd.f32 %v2662, %v2710
        %2712 = vmatmul.bf16.gmra.mxu0 %v1589
        %v2713 = vpop.f32.mrf.mxu0
        %v2714 = vadd.f32 %v2665, %v2713
        %v2715 = vpop.f32.mrf.mxu0
        %v2716 = vadd.f32 %v2667, %v2715
        %2717 = vmatmul.bf16.gmra.mxu0 %v1704
        %v2718 = vpop.f32.mrf.mxu0
        %v2719 = vadd.f32 %v2670, %v2718
        %v2720 = vpop.f32.mrf.mxu0
        %v2721 = vadd.f32 %v2672, %v2720
        %2722 = vdwg.mxu0
        %v2723 = vld [vmem:[%s5] sm:$0xff]
        %v2724 = vld [vmem:[%s5 + $0x8] sm:$0xff]
        %v2725 = vld [vmem:[%s5 + $0x10] sm:$0xff]
        %v2726 = vld [vmem:[%s5 + $0x18] sm:$0xff]
        %v2727 = vld [vmem:[%s5 + $0x20] sm:$0xff]
        %v2728 = vld [vmem:[%s5 + $0x28] sm:$0xff]
        %v2729 = vld [vmem:[%s5 + $0x30] sm:$0xff]
        %v2730 = vld [vmem:[%s5 + $0x38] sm:$0xff]
        %vm2731 = vcmask 130048
        %v2733 = vsel %vm2731, %v2723, 0
        %2735 = vmatpush.msra.mxu0 0.0
        %2736 = vmatpush.msra.mxu0 0.0
        %2737 = vmatpush.msra.mxu0 0.0
        %2738 = vmatpush.msra.mxu0 0.0
        %2739 = vmatpush.msra.mxu0 0.0
        %2740 = vmatpush.msra.mxu0 0.0
        %2741 = vmatpush.msra.mxu0 0.0
        %2742 = vmatpush.msra.mxu0 0.0
        %2743 = vmatpush.msra.mxu0 0.0
        %2744 = vmatpush.msra.mxu0 0.0
        %2745 = vmatpush.msra.mxu0 0.0
        %2746 = vmatpush.msra.mxu0 0.0
        %2747 = vmatpush.msra.mxu0 0.0
        %2748 = vmatpush.msra.mxu0 0.0
        %2749 = vmatpush.msra.mxu0 %v2686
        %2750 = vmatpush.msra.mxu0 %v2684
        %2751 = vmatmul.f32.gmra.mxu0 %v2733
        %v2752 = vpop.f32.mrf.mxu0
        %v2753 = vadd.f32 0.0, %v2752
        %2754 = vdwg.mxu0
        %v2756 = vsel %vm2731, %v2724, 0
        %2758 = vmatpush.msra.mxu0 0.0
        %2759 = vmatpush.msra.mxu0 0.0
        %2760 = vmatpush.msra.mxu0 0.0
        %2761 = vmatpush.msra.mxu0 0.0
        %2762 = vmatpush.msra.mxu0 0.0
        %2763 = vmatpush.msra.mxu0 0.0
        %2764 = vmatpush.msra.mxu0 0.0
        %2765 = vmatpush.msra.mxu0 0.0
        %2766 = vmatpush.msra.mxu0 0.0
        %2767 = vmatpush.msra.mxu0 0.0
        %2768 = vmatpush.msra.mxu0 0.0
        %2769 = vmatpush.msra.mxu0 0.0
        %2770 = vmatpush.msra.mxu0 0.0
        %2771 = vmatpush.msra.mxu0 0.0
        %2772 = vmatpush.msra.mxu0 %v2691
        %2773 = vmatpush.msra.mxu0 %v2689
        %2774 = vmatmul.f32.gmra.mxu0 %v2756
        %v2775 = vpop.f32.mrf.mxu0
        %v2776 = vadd.f32 0.0, %v2775
        %2777 = vdwg.mxu0
        %v2779 = vsel %vm2731, %v2725, 0
        %2781 = vmatpush.msra.mxu0 0.0
        %2782 = vmatpush.msra.mxu0 0.0
        %2783 = vmatpush.msra.mxu0 0.0
        %2784 = vmatpush.msra.mxu0 0.0
        %2785 = vmatpush.msra.mxu0 0.0
        %2786 = vmatpush.msra.mxu0 0.0
        %2787 = vmatpush.msra.mxu0 0.0
        %2788 = vmatpush.msra.mxu0 0.0
        %2789 = vmatpush.msra.mxu0 0.0
        %2790 = vmatpush.msra.mxu0 0.0
        %2791 = vmatpush.msra.mxu0 0.0
        %2792 = vmatpush.msra.mxu0 0.0
        %2793 = vmatpush.msra.mxu0 0.0
        %2794 = vmatpush.msra.mxu0 0.0
        %2795 = vmatpush.msra.mxu0 %v2696
        %2796 = vmatpush.msra.mxu0 %v2694
        %2797 = vmatmul.f32.gmra.mxu0 %v2779
        %v2798 = vpop.f32.mrf.mxu0
        %v2799 = vadd.f32 0.0, %v2798
        %2800 = vdwg.mxu0
        %v2802 = vsel %vm2731, %v2726, 0
        %2804 = vmatpush.msra.mxu0 0.0
        %2805 = vmatpush.msra.mxu0 0.0
        %2806 = vmatpush.msra.mxu0 0.0
        %2807 = vmatpush.msra.mxu0 0.0
        %2808 = vmatpush.msra.mxu0 0.0
        %2809 = vmatpush.msra.mxu0 0.0
        %2810 = vmatpush.msra.mxu0 0.0
        %2811 = vmatpush.msra.mxu0 0.0
        %2812 = vmatpush.msra.mxu0 0.0
        %2813 = vmatpush.msra.mxu0 0.0
        %2814 = vmatpush.msra.mxu0 0.0
        %2815 = vmatpush.msra.mxu0 0.0
        %2816 = vmatpush.msra.mxu0 0.0
        %2817 = vmatpush.msra.mxu0 0.0
        %2818 = vmatpush.msra.mxu0 %v2701
        %2819 = vmatpush.msra.mxu0 %v2699
        %2820 = vmatmul.f32.gmra.mxu0 %v2802
        %v2821 = vpop.f32.mrf.mxu0
        %v2822 = vadd.f32 0.0, %v2821
        %2823 = vdwg.mxu0
        %v2825 = vsel %vm2731, %v2727, 0
        %2827 = vmatpush.msra.mxu0 0.0
        %2828 = vmatpush.msra.mxu0 0.0
        %2829 = vmatpush.msra.mxu0 0.0
        %2830 = vmatpush.msra.mxu0 0.0
        %2831 = vmatpush.msra.mxu0 0.0
        %2832 = vmatpush.msra.mxu0 0.0
        %2833 = vmatpush.msra.mxu0 0.0
        %2834 = vmatpush.msra.mxu0 0.0
        %2835 = vmatpush.msra.mxu0 0.0
        %2836 = vmatpush.msra.mxu0 0.0
        %2837 = vmatpush.msra.mxu0 0.0
        %2838 = vmatpush.msra.mxu0 0.0
        %2839 = vmatpush.msra.mxu0 0.0
        %2840 = vmatpush.msra.mxu0 0.0
        %2841 = vmatpush.msra.mxu0 %v2706
        %2842 = vmatpush.msra.mxu0 %v2704
        %2843 = vmatmul.f32.gmra.mxu0 %v2825
        %v2844 = vpop.f32.mrf.mxu0
        %v2845 = vadd.f32 0.0, %v2844
        %2846 = vdwg.mxu0
        %v2848 = vsel %vm2731, %v2728, 0
        %2850 = vmatpush.msra.mxu0 0.0
        %2851 = vmatpush.msra.mxu0 0.0
        %2852 = vmatpush.msra.mxu0 0.0
        %2853 = vmatpush.msra.mxu0 0.0
        %2854 = vmatpush.msra.mxu0 0.0
        %2855 = vmatpush.msra.mxu0 0.0
        %2856 = vmatpush.msra.mxu0 0.0
        %2857 = vmatpush.msra.mxu0 0.0
        %2858 = vmatpush.msra.mxu0 0.0
        %2859 = vmatpush.msra.mxu0 0.0
        %2860 = vmatpush.msra.mxu0 0.0
        %2861 = vmatpush.msra.mxu0 0.0
        %2862 = vmatpush.msra.mxu0 0.0
        %2863 = vmatpush.msra.mxu0 0.0
        %2864 = vmatpush.msra.mxu0 %v2711
        %2865 = vmatpush.msra.mxu0 %v2709
        %2866 = vmatmul.f32.gmra.mxu0 %v2848
        %v2867 = vpop.f32.mrf.mxu0
        %v2868 = vadd.f32 0.0, %v2867
        %2869 = vdwg.mxu0
        %v2871 = vsel %vm2731, %v2729, 0
        %2873 = vmatpush.msra.mxu0 0.0
        %2874 = vmatpush.msra.mxu0 0.0
        %2875 = vmatpush.msra.mxu0 0.0
        %2876 = vmatpush.msra.mxu0 0.0
        %2877 = vmatpush.msra.mxu0 0.0
        %2878 = vmatpush.msra.mxu0 0.0
        %2879 = vmatpush.msra.mxu0 0.0
        %2880 = vmatpush.msra.mxu0 0.0
        %2881 = vmatpush.msra.mxu0 0.0
        %2882 = vmatpush.msra.mxu0 0.0
        %2883 = vmatpush.msra.mxu0 0.0
        %2884 = vmatpush.msra.mxu0 0.0
        %2885 = vmatpush.msra.mxu0 0.0
        %2886 = vmatpush.msra.mxu0 0.0
        %2887 = vmatpush.msra.mxu0 %v2716
        %2888 = vmatpush.msra.mxu0 %v2714
        %2889 = vmatmul.f32.gmra.mxu0 %v2871
        %v2890 = vpop.f32.mrf.mxu0
        %v2891 = vadd.f32 0.0, %v2890
        %2892 = vdwg.mxu0
        %v2894 = vsel %vm2731, %v2730, 0
        %2896 = vmatpush.msra.mxu0 0.0
        %2897 = vmatpush.msra.mxu0 0.0
        %2898 = vmatpush.msra.mxu0 0.0
        %2899 = vmatpush.msra.mxu0 0.0
        %2900 = vmatpush.msra.mxu0 0.0
        %2901 = vmatpush.msra.mxu0 0.0
        %2902 = vmatpush.msra.mxu0 0.0
        %2903 = vmatpush.msra.mxu0 0.0
        %2904 = vmatpush.msra.mxu0 0.0
        %2905 = vmatpush.msra.mxu0 0.0
        %2906 = vmatpush.msra.mxu0 0.0
        %2907 = vmatpush.msra.mxu0 0.0
        %2908 = vmatpush.msra.mxu0 0.0
        %2909 = vmatpush.msra.mxu0 0.0
        %2910 = vmatpush.msra.mxu0 %v2721
        %2911 = vmatpush.msra.mxu0 %v2719
        %2912 = vmatmul.f32.gmra.mxu0 %v2894
        %v2913 = vpop.f32.mrf.mxu0
        %v2914 = vadd.f32 0.0, %v2913
        %2915 = vdwg.mxu0
        %v2916 = vadd.f32 %v2753, %v2776
        %v2917 = vadd.f32 %v2916, %v2799
        %v2918 = vadd.f32 %v2917, %v2822
        %v2919 = vadd.f32 %v2918, %v2845
        %v2920 = vadd.f32 %v2919, %v2868
        %v2921 = vadd.f32 %v2920, %v2891
        %v2922 = vadd.f32 %v2921, %v2914
        %v2923 = vrot.slane %v2922, 4
        %v2924 = vadd.f32 %v2922, %v2923
        %v2925 = vrot.slane %v2924, 2
        %v2926 = vadd.f32 %v2924, %v2925
        %v2927 = vrot.slane %v2926, 1
        %v2928 = vadd.f32 %v2926, %v2927
        %v2929 = vmul.f32 %v2928, 0.015625
        %v2930 = vsub.f32 %v2753, %v2929
        %v2931 = vsub.f32 %v2776, %v2929
        %v2932 = vsub.f32 %v2799, %v2929
        %v2933 = vsub.f32 %v2822, %v2929
        %v2934 = vsub.f32 %v2845, %v2929
        %v2935 = vsub.f32 %v2868, %v2929
        %v2936 = vsub.f32 %v2891, %v2929
        %v2937 = vsub.f32 %v2914, %v2929
        %v2938 = vmul.f32 %v2930, %v2930
        %v2939 = vmul.f32 %v2931, %v2931
        %v2940 = vmul.f32 %v2932, %v2932
        %v2941 = vmul.f32 %v2933, %v2933
        %v2942 = vmul.f32 %v2934, %v2934
        %v2943 = vmul.f32 %v2935, %v2935
        %v2944 = vmul.f32 %v2936, %v2936
        %v2945 = vmul.f32 %v2937, %v2937
        %v2946 = vadd.f32 %v2938, %v2939
        %v2947 = vadd.f32 %v2946, %v2940
        %v2948 = vadd.f32 %v2947, %v2941
        %v2949 = vadd.f32 %v2948, %v2942
        %v2950 = vadd.f32 %v2949, %v2943
        %v2951 = vadd.f32 %v2950, %v2944
        %v2952 = vadd.f32 %v2951, %v2945
        %v2953 = vrot.slane %v2952, 4
        %v2954 = vadd.f32 %v2952, %v2953
        %v2955 = vrot.slane %v2954, 2
        %v2956 = vadd.f32 %v2954, %v2955
        %v2957 = vrot.slane %v2956, 1
        %v2958 = vadd.f32 %v2956, %v2957
        %v2959 = vmul.f32 %v2958, 0.015625
        %v2960 = vadd.f32 %v2959, 1e-05
        %v2961 = vrsqrt.pop %v2960
        %v2962 = vmul.f32 %v2961, %v2960
        %v2963 = vmul.f32 %v2962, %v2961
        %v2964 = vmul.f32 0.5, %v2963
        %v2965 = vsub.f32 1.5, %v2964
        %v2966 = vmul.f32 %v2961, %v2965
        %vm2967 = vweird.f32 %v2960
        %vm2968 = vweird.f32 %v2961
        %vm2969 = vmor %vm2967, %vm2968
        %v2970 = vsel %vm2969, %v2961, %v2966
        %v2971 = vmul.f32 %v2930, %v2970
        %v2972 = vmul.f32 %v2931, %v2970
        %v2973 = vmul.f32 %v2932, %v2970
        %v2974 = vmul.f32 %v2933, %v2970
        %v2975 = vmul.f32 %v2934, %v2970
        %v2976 = vmul.f32 %v2935, %v2970
        %v2977 = vmul.f32 %v2936, %v2970
        %v2978 = vmul.f32 %v2937, %v2970
        %v2979 = vmax.f32 %v2971, 0.0
        %v2980 = vmax.f32 %v2972, 0.0
        %v2981 = vmax.f32 %v2973, 0.0
        %v2982 = vmax.f32 %v2974, 0.0
        %v2983 = vmax.f32 %v2975, 0.0
        %v2984 = vmax.f32 %v2976, 0.0
        %v2985 = vmax.f32 %v2977, 0.0
        %v2986 = vmax.f32 %v2978, 0.0
        %v2987 = vpack.c.bf16 %v2980, %v2979
        %v2988 = vpack.c.bf16 %v2982, %v2981
        %v2989 = vpack.c.bf16 %v2984, %v2983
        %v2990 = vpack.c.bf16 %v2986, %v2985
        %v2991 = vld [vmem:[%s3] sm:$0xf]
        %v2992 = vld [vmem:[%s3 + $0x4] sm:$0xf]
        %v2993 = vld [vmem:[%s3 + $0x8] sm:$0xf]
        %v2994 = vld [vmem:[%s3 + $0xc] sm:$0xf]
        %v2995 = vld [vmem:[%s3 + $0x10] sm:$0xf]
        %v2996 = vld [vmem:[%s3 + $0x14] sm:$0xf]
        %v2997 = vld [vmem:[%s3 + $0x18] sm:$0xf]
        %v2998 = vld [vmem:[%s3 + $0x1c] sm:$0xf]
        %v2999 = vld [vmem:[%s3 + $0x20] sm:$0xf]
        %v3000 = vld [vmem:[%s3 + $0x24] sm:$0xf]
        %v3001 = vld [vmem:[%s3 + $0x28] sm:$0xf]
        %v3002 = vld [vmem:[%s3 + $0x2c] sm:$0xf]
        %v3003 = vld [vmem:[%s3 + $0x30] sm:$0xf]
        %v3004 = vld [vmem:[%s3 + $0x34] sm:$0xf]
        %v3005 = vld [vmem:[%s3 + $0x38] sm:$0xf]
        %v3006 = vld [vmem:[%s3 + $0x3c] sm:$0xf]
        %v3023 = vunpack.c.l.b16 %v2991
        %v3024 = vunpack.c.l.b16 %v2992
        %v3025 = vunpack.c.l.b16 %v2993
        %v3026 = vunpack.c.l.b16 %v2994
        %v3027 = vunpack.c.l.b16 %v2995
        %v3028 = vunpack.c.l.b16 %v2996
        %v3029 = vunpack.c.l.b16 %v2997
        %v3030 = vunpack.c.l.b16 %v2998
        %v3031 = vunpack.c.l.b16 %v2999
        %v3032 = vunpack.c.l.b16 %v3000
        %v3033 = vunpack.c.l.b16 %v3001
        %v3034 = vunpack.c.l.b16 %v3002
        %v3035 = vunpack.c.l.b16 %v3003
        %v3036 = vunpack.c.l.b16 %v3004
        %v3037 = vunpack.c.l.b16 %v3005
        %v3038 = vunpack.c.l.b16 %v3006
        %v3039 = vpack.c.b16 %v3024, %v3023
        %v3040 = vpack.c.b16 %v3026, %v3025
        %v3041 = vpack.c.b16 %v3028, %v3027
        %v3042 = vpack.c.b16 %v3030, %v3029
        %v3043 = vpack.c.b16 %v3032, %v3031
        %v3044 = vpack.c.b16 %v3034, %v3033
        %v3045 = vpack.c.b16 %v3036, %v3035
        %v3046 = vpack.c.b16 %v3038, %v3037
        %3055 = vmatpush.bf16.msra.mxu0 %v3046
        %3056 = vmatpush.bf16.msra.mxu0 %v3045
        %3057 = vmatpush.bf16.msra.mxu0 %v3044
        %3058 = vmatpush.bf16.msra.mxu0 %v3043
        %3059 = vmatpush.bf16.msra.mxu0 %v3042
        %3060 = vmatpush.bf16.msra.mxu0 %v3041
        %3061 = vmatpush.bf16.msra.mxu0 %v3040
        %3062 = vmatpush.bf16.msra.mxu0 %v3039
        %3063 = vmatmul.bf16.gmra.mxu0 %v2987
        %v3064 = vpop.f32.mrf.mxu0
        %v3065 = vadd.f32 0.0, %v3064
        %v3066 = vpop.f32.mrf.mxu0
        %v3067 = vadd.f32 0.0, %v3066
        %3068 = vmatmul.bf16.gmra.mxu0 %v2988
        %v3069 = vpop.f32.mrf.mxu0
        %v3070 = vadd.f32 0.0, %v3069
        %v3071 = vpop.f32.mrf.mxu0
        %v3072 = vadd.f32 0.0, %v3071
        %3073 = vmatmul.bf16.gmra.mxu0 %v2989
        %v3074 = vpop.f32.mrf.mxu0
        %v3075 = vadd.f32 0.0, %v3074
        %v3076 = vpop.f32.mrf.mxu0
        %v3077 = vadd.f32 0.0, %v3076
        %3078 = vmatmul.bf16.gmra.mxu0 %v2990
        %v3079 = vpop.f32.mrf.mxu0
        %v3080 = vadd.f32 0.0, %v3079
        %v3081 = vpop.f32.mrf.mxu0
        %v3082 = vadd.f32 0.0, %v3081
        %3083 = vdwg.mxu0
        %v3084 = vadd.f32 %v3065, %v3067
        %v3085 = vadd.f32 %v3084, %v3070
        %v3086 = vadd.f32 %v3085, %v3072
        %v3087 = vadd.f32 %v3086, %v3075
        %v3088 = vadd.f32 %v3087, %v3077
        %v3089 = vadd.f32 %v3088, %v3080
        %v3090 = vadd.f32 %v3089, %v3082
        %v3091 = vrot.slane %v3090, 4
        %v3092 = vadd.f32 %v3090, %v3091
        %v3093 = vrot.slane %v3092, 2
        %v3094 = vadd.f32 %v3092, %v3093
        %v3095 = vrot.slane %v3094, 1
        %v3096 = vadd.f32 %v3094, %v3095
        %v3097 = vmul.f32 %v3096, 0.015625
        %v3098 = vsub.f32 %v3065, %v3097
        %v3099 = vsub.f32 %v3067, %v3097
        %v3100 = vsub.f32 %v3070, %v3097
        %v3101 = vsub.f32 %v3072, %v3097
        %v3102 = vsub.f32 %v3075, %v3097
        %v3103 = vsub.f32 %v3077, %v3097
        %v3104 = vsub.f32 %v3080, %v3097
        %v3105 = vsub.f32 %v3082, %v3097
        %v3106 = vmul.f32 %v3098, %v3098
        %v3107 = vmul.f32 %v3099, %v3099
        %v3108 = vmul.f32 %v3100, %v3100
        %v3109 = vmul.f32 %v3101, %v3101
        %v3110 = vmul.f32 %v3102, %v3102
        %v3111 = vmul.f32 %v3103, %v3103
        %v3112 = vmul.f32 %v3104, %v3104
        %v3113 = vmul.f32 %v3105, %v3105
        %v3114 = vadd.f32 %v3106, %v3107
        %v3115 = vadd.f32 %v3114, %v3108
        %v3116 = vadd.f32 %v3115, %v3109
        %v3117 = vadd.f32 %v3116, %v3110
        %v3118 = vadd.f32 %v3117, %v3111
        %v3119 = vadd.f32 %v3118, %v3112
        %v3120 = vadd.f32 %v3119, %v3113
        %v3121 = vrot.slane %v3120, 4
        %v3122 = vadd.f32 %v3120, %v3121
        %v3123 = vrot.slane %v3122, 2
        %v3124 = vadd.f32 %v3122, %v3123
        %v3125 = vrot.slane %v3124, 1
        %v3126 = vadd.f32 %v3124, %v3125
        %v3127 = vmul.f32 %v3126, 0.015625
        %v3128 = vadd.f32 %v3127, 1e-05
        %v3129 = vrsqrt.pop %v3128
        %v3130 = vmul.f32 %v3129, %v3128
        %v3131 = vmul.f32 %v3130, %v3129
        %v3132 = vmul.f32 0.5, %v3131
        %v3133 = vsub.f32 1.5, %v3132
        %v3134 = vmul.f32 %v3129, %v3133
        %vm3135 = vweird.f32 %v3128
        %vm3136 = vweird.f32 %v3129
        %vm3137 = vmor %vm3135, %vm3136
        %v3138 = vsel %vm3137, %v3129, %v3134
        %v3139 = vmul.f32 %v3098, %v3138
        %v3140 = vmul.f32 %v3099, %v3138
        %v3141 = vmul.f32 %v3100, %v3138
        %v3142 = vmul.f32 %v3101, %v3138
        %v3143 = vmul.f32 %v3102, %v3138
        %v3144 = vmul.f32 %v3103, %v3138
        %v3145 = vmul.f32 %v3104, %v3138
        %v3146 = vmul.f32 %v3105, %v3138
        %v3147 = vld [vmem:[%s4] sm:$0xf]
        %v3149 = vsel %vm397, %v3147, 0
        %3151 = vmatpush.msra.mxu0 0.0
        %3152 = vmatpush.msra.mxu0 0.0
        %3153 = vmatpush.msra.mxu0 0.0
        %3154 = vmatpush.msra.mxu0 0.0
        %3155 = vmatpush.msra.mxu0 0.0
        %3156 = vmatpush.msra.mxu0 0.0
        %3157 = vmatpush.msra.mxu0 0.0
        %3158 = vmatpush.msra.mxu0 0.0
        %3159 = vmatpush.msra.mxu0 0.0
        %3160 = vmatpush.msra.mxu0 0.0
        %3161 = vmatpush.msra.mxu0 0.0
        %3162 = vmatpush.msra.mxu0 0.0
        %3163 = vmatpush.msra.mxu0 0.0
        %3164 = vmatpush.msra.mxu0 0.0
        %3165 = vmatpush.msra.mxu0 0.0
        %3166 = vmatpush.msra.mxu0 %v3149
        %3167 = vmatmul.f32.gmra.mxu0 %v302
        %v3168 = vpop.f32.mrf.mxu0
        %v3169 = vadd.f32 0.0, %v3168
        %3170 = vmatmul.f32.gmra.mxu0 %v305
        %v3171 = vpop.f32.mrf.mxu0
        %v3172 = vadd.f32 0.0, %v3171
        %3173 = vmatmul.f32.gmra.mxu0 %v308
        %v3174 = vpop.f32.mrf.mxu0
        %3175 = vmatmul.f32.gmra.mxu0 %v311
        %v3176 = vpop.f32.mrf.mxu0
        %3177 = vmatmul.f32.gmra.mxu0 %v314
        %v3178 = vpop.f32.mrf.mxu0
        %v3179 = vadd.f32 0.0, %v3178
        %3180 = vmatmul.f32.gmra.mxu0 %v317
        %v3181 = vpop.f32.mrf.mxu0
        %v3182 = vadd.f32 0.0, %v3181
        %3183 = vmatmul.f32.gmra.mxu0 %v320
        %v3184 = vpop.f32.mrf.mxu0
        %3185 = vmatmul.f32.gmra.mxu0 %v323
        %v3186 = vpop.f32.mrf.mxu0
        %3187 = vmatmul.f32.gmra.mxu0 %v326
        %v3188 = vpop.f32.mrf.mxu0
        %v3189 = vadd.f32 0.0, %v3188
        %3190 = vmatmul.f32.gmra.mxu0 %v329
        %v3191 = vpop.f32.mrf.mxu0
        %v3192 = vadd.f32 0.0, %v3191
        %3193 = vmatmul.f32.gmra.mxu0 %v332
        %v3194 = vpop.f32.mrf.mxu0
        %3195 = vmatmul.f32.gmra.mxu0 %v335
        %v3196 = vpop.f32.mrf.mxu0
        %3197 = vmatmul.f32.gmra.mxu0 %v338
        %v3198 = vpop.f32.mrf.mxu0
        %v3199 = vadd.f32 0.0, %v3198
        %3200 = vmatmul.f32.gmra.mxu0 %v341
        %v3201 = vpop.f32.mrf.mxu0
        %v3202 = vadd.f32 0.0, %v3201
        %3203 = vmatmul.f32.gmra.mxu0 %v344
        %v3204 = vpop.f32.mrf.mxu0
        %3205 = vmatmul.f32.gmra.mxu0 %v347
        %v3206 = vpop.f32.mrf.mxu0
        %3207 = vmatmul.f32.gmra.mxu0 %v350
        %v3208 = vpop.f32.mrf.mxu0
        %v3209 = vadd.f32 0.0, %v3208
        %3210 = vmatmul.f32.gmra.mxu0 %v353
        %v3211 = vpop.f32.mrf.mxu0
        %v3212 = vadd.f32 0.0, %v3211
        %3213 = vmatmul.f32.gmra.mxu0 %v356
        %v3214 = vpop.f32.mrf.mxu0
        %3215 = vmatmul.f32.gmra.mxu0 %v359
        %v3216 = vpop.f32.mrf.mxu0
        %3217 = vmatmul.f32.gmra.mxu0 %v362
        %v3218 = vpop.f32.mrf.mxu0
        %v3219 = vadd.f32 0.0, %v3218
        %3220 = vmatmul.f32.gmra.mxu0 %v365
        %v3221 = vpop.f32.mrf.mxu0
        %v3222 = vadd.f32 0.0, %v3221
        %3223 = vmatmul.f32.gmra.mxu0 %v368
        %v3224 = vpop.f32.mrf.mxu0
        %3225 = vmatmul.f32.gmra.mxu0 %v371
        %v3226 = vpop.f32.mrf.mxu0
        %3227 = vmatmul.f32.gmra.mxu0 %v374
        %v3228 = vpop.f32.mrf.mxu0
        %v3229 = vadd.f32 0.0, %v3228
        %3230 = vmatmul.f32.gmra.mxu0 %v377
        %v3231 = vpop.f32.mrf.mxu0
        %v3232 = vadd.f32 0.0, %v3231
        %3233 = vmatmul.f32.gmra.mxu0 %v380
        %v3234 = vpop.f32.mrf.mxu0
        %3235 = vmatmul.f32.gmra.mxu0 %v383
        %v3236 = vpop.f32.mrf.mxu0
        %3237 = vmatmul.f32.gmra.mxu0 %v386
        %v3238 = vpop.f32.mrf.mxu0
        %v3239 = vadd.f32 0.0, %v3238
        %3240 = vmatmul.f32.gmra.mxu0 %v389
        %v3241 = vpop.f32.mrf.mxu0
        %v3242 = vadd.f32 0.0, %v3241
        %3243 = vmatmul.f32.gmra.mxu0 %v392
        %v3244 = vpop.f32.mrf.mxu0
        %3245 = vmatmul.f32.gmra.mxu0 %v395
        %v3246 = vpop.f32.mrf.mxu0
        %3247 = vdwg.mxu0
        %v3248 = vld [vmem:[%s5] sm:$0xff]
        %v3249 = vld [vmem:[%s5 + $0x8] sm:$0xff]
        %v3250 = vld [vmem:[%s5 + $0x10] sm:$0xff]
        %v3251 = vld [vmem:[%s5 + $0x18] sm:$0xff]
        %v3252 = vld [vmem:[%s5 + $0x20] sm:$0xff]
        %v3253 = vld [vmem:[%s5 + $0x28] sm:$0xff]
        %v3254 = vld [vmem:[%s5 + $0x30] sm:$0xff]
        %v3255 = vld [vmem:[%s5 + $0x38] sm:$0xff]
        %v3257 = vsel %vm2731, %v3248, 0
        %3259 = vmatpush.msra.mxu0 0.0
        %3260 = vmatpush.msra.mxu0 0.0
        %3261 = vmatpush.msra.mxu0 0.0
        %3262 = vmatpush.msra.mxu0 0.0
        %3263 = vmatpush.msra.mxu0 0.0
        %3264 = vmatpush.msra.mxu0 0.0
        %3265 = vmatpush.msra.mxu0 0.0
        %3266 = vmatpush.msra.mxu0 0.0
        %3267 = vmatpush.msra.mxu0 0.0
        %3268 = vmatpush.msra.mxu0 0.0
        %3269 = vmatpush.msra.mxu0 0.0
        %3270 = vmatpush.msra.mxu0 0.0
        %3271 = vmatpush.msra.mxu0 0.0
        %3272 = vmatpush.msra.mxu0 0.0
        %3273 = vmatpush.msra.mxu0 %v3172
        %3274 = vmatpush.msra.mxu0 %v3169
        %3275 = vmatmul.f32.gmra.mxu0 %v3257
        %v3276 = vpop.f32.mrf.mxu0
        %v3277 = vadd.f32 0.0, %v3276
        %3278 = vdwg.mxu0
        %v3280 = vsel %vm2731, %v3249, 0
        %3282 = vmatpush.msra.mxu0 0.0
        %3283 = vmatpush.msra.mxu0 0.0
        %3284 = vmatpush.msra.mxu0 0.0
        %3285 = vmatpush.msra.mxu0 0.0
        %3286 = vmatpush.msra.mxu0 0.0
        %3287 = vmatpush.msra.mxu0 0.0
        %3288 = vmatpush.msra.mxu0 0.0
        %3289 = vmatpush.msra.mxu0 0.0
        %3290 = vmatpush.msra.mxu0 0.0
        %3291 = vmatpush.msra.mxu0 0.0
        %3292 = vmatpush.msra.mxu0 0.0
        %3293 = vmatpush.msra.mxu0 0.0
        %3294 = vmatpush.msra.mxu0 0.0
        %3295 = vmatpush.msra.mxu0 0.0
        %3296 = vmatpush.msra.mxu0 %v3182
        %3297 = vmatpush.msra.mxu0 %v3179
        %3298 = vmatmul.f32.gmra.mxu0 %v3280
        %v3299 = vpop.f32.mrf.mxu0
        %v3300 = vadd.f32 0.0, %v3299
        %3301 = vdwg.mxu0
        %v3303 = vsel %vm2731, %v3250, 0
        %3305 = vmatpush.msra.mxu0 0.0
        %3306 = vmatpush.msra.mxu0 0.0
        %3307 = vmatpush.msra.mxu0 0.0
        %3308 = vmatpush.msra.mxu0 0.0
        %3309 = vmatpush.msra.mxu0 0.0
        %3310 = vmatpush.msra.mxu0 0.0
        %3311 = vmatpush.msra.mxu0 0.0
        %3312 = vmatpush.msra.mxu0 0.0
        %3313 = vmatpush.msra.mxu0 0.0
        %3314 = vmatpush.msra.mxu0 0.0
        %3315 = vmatpush.msra.mxu0 0.0
        %3316 = vmatpush.msra.mxu0 0.0
        %3317 = vmatpush.msra.mxu0 0.0
        %3318 = vmatpush.msra.mxu0 0.0
        %3319 = vmatpush.msra.mxu0 %v3192
        %3320 = vmatpush.msra.mxu0 %v3189
        %3321 = vmatmul.f32.gmra.mxu0 %v3303
        %v3322 = vpop.f32.mrf.mxu0
        %v3323 = vadd.f32 0.0, %v3322
        %3324 = vdwg.mxu0
        %v3326 = vsel %vm2731, %v3251, 0
        %3328 = vmatpush.msra.mxu0 0.0
        %3329 = vmatpush.msra.mxu0 0.0
        %3330 = vmatpush.msra.mxu0 0.0
        %3331 = vmatpush.msra.mxu0 0.0
        %3332 = vmatpush.msra.mxu0 0.0
        %3333 = vmatpush.msra.mxu0 0.0
        %3334 = vmatpush.msra.mxu0 0.0
        %3335 = vmatpush.msra.mxu0 0.0
        %3336 = vmatpush.msra.mxu0 0.0
        %3337 = vmatpush.msra.mxu0 0.0
        %3338 = vmatpush.msra.mxu0 0.0
        %3339 = vmatpush.msra.mxu0 0.0
        %3340 = vmatpush.msra.mxu0 0.0
        %3341 = vmatpush.msra.mxu0 0.0
        %3342 = vmatpush.msra.mxu0 %v3202
        %3343 = vmatpush.msra.mxu0 %v3199
        %3344 = vmatmul.f32.gmra.mxu0 %v3326
        %v3345 = vpop.f32.mrf.mxu0
        %v3346 = vadd.f32 0.0, %v3345
        %3347 = vdwg.mxu0
        %v3349 = vsel %vm2731, %v3252, 0
        %3351 = vmatpush.msra.mxu0 0.0
        %3352 = vmatpush.msra.mxu0 0.0
        %3353 = vmatpush.msra.mxu0 0.0
        %3354 = vmatpush.msra.mxu0 0.0
        %3355 = vmatpush.msra.mxu0 0.0
        %3356 = vmatpush.msra.mxu0 0.0
        %3357 = vmatpush.msra.mxu0 0.0
        %3358 = vmatpush.msra.mxu0 0.0
        %3359 = vmatpush.msra.mxu0 0.0
        %3360 = vmatpush.msra.mxu0 0.0
        %3361 = vmatpush.msra.mxu0 0.0
        %3362 = vmatpush.msra.mxu0 0.0
        %3363 = vmatpush.msra.mxu0 0.0
        %3364 = vmatpush.msra.mxu0 0.0
        %3365 = vmatpush.msra.mxu0 %v3212
        %3366 = vmatpush.msra.mxu0 %v3209
        %3367 = vmatmul.f32.gmra.mxu0 %v3349
        %v3368 = vpop.f32.mrf.mxu0
        %v3369 = vadd.f32 0.0, %v3368
        %3370 = vdwg.mxu0
        %v3372 = vsel %vm2731, %v3253, 0
        %3374 = vmatpush.msra.mxu0 0.0
        %3375 = vmatpush.msra.mxu0 0.0
        %3376 = vmatpush.msra.mxu0 0.0
        %3377 = vmatpush.msra.mxu0 0.0
        %3378 = vmatpush.msra.mxu0 0.0
        %3379 = vmatpush.msra.mxu0 0.0
        %3380 = vmatpush.msra.mxu0 0.0
        %3381 = vmatpush.msra.mxu0 0.0
        %3382 = vmatpush.msra.mxu0 0.0
        %3383 = vmatpush.msra.mxu0 0.0
        %3384 = vmatpush.msra.mxu0 0.0
        %3385 = vmatpush.msra.mxu0 0.0
        %3386 = vmatpush.msra.mxu0 0.0
        %3387 = vmatpush.msra.mxu0 0.0
        %3388 = vmatpush.msra.mxu0 %v3222
        %3389 = vmatpush.msra.mxu0 %v3219
        %3390 = vmatmul.f32.gmra.mxu0 %v3372
        %v3391 = vpop.f32.mrf.mxu0
        %v3392 = vadd.f32 0.0, %v3391
        %3393 = vdwg.mxu0
        %v3395 = vsel %vm2731, %v3254, 0
        %3397 = vmatpush.msra.mxu0 0.0
        %3398 = vmatpush.msra.mxu0 0.0
        %3399 = vmatpush.msra.mxu0 0.0
        %3400 = vmatpush.msra.mxu0 0.0
        %3401 = vmatpush.msra.mxu0 0.0
        %3402 = vmatpush.msra.mxu0 0.0
        %3403 = vmatpush.msra.mxu0 0.0
        %3404 = vmatpush.msra.mxu0 0.0
        %3405 = vmatpush.msra.mxu0 0.0
        %3406 = vmatpush.msra.mxu0 0.0
        %3407 = vmatpush.msra.mxu0 0.0
        %3408 = vmatpush.msra.mxu0 0.0
        %3409 = vmatpush.msra.mxu0 0.0
        %3410 = vmatpush.msra.mxu0 0.0
        %3411 = vmatpush.msra.mxu0 %v3232
        %3412 = vmatpush.msra.mxu0 %v3229
        %3413 = vmatmul.f32.gmra.mxu0 %v3395
        %v3414 = vpop.f32.mrf.mxu0
        %v3415 = vadd.f32 0.0, %v3414
        %3416 = vdwg.mxu0
        %v3418 = vsel %vm2731, %v3255, 0
        %3420 = vmatpush.msra.mxu0 0.0
        %3421 = vmatpush.msra.mxu0 0.0
        %3422 = vmatpush.msra.mxu0 0.0
        %3423 = vmatpush.msra.mxu0 0.0
        %3424 = vmatpush.msra.mxu0 0.0
        %3425 = vmatpush.msra.mxu0 0.0
        %3426 = vmatpush.msra.mxu0 0.0
        %3427 = vmatpush.msra.mxu0 0.0
        %3428 = vmatpush.msra.mxu0 0.0
        %3429 = vmatpush.msra.mxu0 0.0
        %3430 = vmatpush.msra.mxu0 0.0
        %3431 = vmatpush.msra.mxu0 0.0
        %3432 = vmatpush.msra.mxu0 0.0
        %3433 = vmatpush.msra.mxu0 0.0
        %3434 = vmatpush.msra.mxu0 %v3242
        %3435 = vmatpush.msra.mxu0 %v3239
        %3436 = vmatmul.f32.gmra.mxu0 %v3418
        %v3437 = vpop.f32.mrf.mxu0
        %v3438 = vadd.f32 0.0, %v3437
        %3439 = vdwg.mxu0
        %v3440 = vadd.f32 %v3277, %v3300
        %v3441 = vadd.f32 %v3440, %v3323
        %v3442 = vadd.f32 %v3441, %v3346
        %v3443 = vadd.f32 %v3442, %v3369
        %v3444 = vadd.f32 %v3443, %v3392
        %v3445 = vadd.f32 %v3444, %v3415
        %v3446 = vadd.f32 %v3445, %v3438
        %v3447 = vrot.slane %v3446, 4
        %v3448 = vadd.f32 %v3446, %v3447
        %v3449 = vrot.slane %v3448, 2
        %v3450 = vadd.f32 %v3448, %v3449
        %v3451 = vrot.slane %v3450, 1
        %v3452 = vadd.f32 %v3450, %v3451
        %v3453 = vmul.f32 %v3452, 0.015625
        %v3454 = vsub.f32 %v3277, %v3453
        %v3455 = vsub.f32 %v3300, %v3453
        %v3456 = vsub.f32 %v3323, %v3453
        %v3457 = vsub.f32 %v3346, %v3453
        %v3458 = vsub.f32 %v3369, %v3453
        %v3459 = vsub.f32 %v3392, %v3453
        %v3460 = vsub.f32 %v3415, %v3453
        %v3461 = vsub.f32 %v3438, %v3453
        %v3462 = vmul.f32 %v3454, %v3454
        %v3463 = vmul.f32 %v3455, %v3455
        %v3464 = vmul.f32 %v3456, %v3456
        %v3465 = vmul.f32 %v3457, %v3457
        %v3466 = vmul.f32 %v3458, %v3458
        %v3467 = vmul.f32 %v3459, %v3459
        %v3468 = vmul.f32 %v3460, %v3460
        %v3469 = vmul.f32 %v3461, %v3461
        %v3470 = vadd.f32 %v3462, %v3463
        %v3471 = vadd.f32 %v3470, %v3464
        %v3472 = vadd.f32 %v3471, %v3465
        %v3473 = vadd.f32 %v3472, %v3466
        %v3474 = vadd.f32 %v3473, %v3467
        %v3475 = vadd.f32 %v3474, %v3468
        %v3476 = vadd.f32 %v3475, %v3469
        %v3477 = vrot.slane %v3476, 4
        %v3478 = vadd.f32 %v3476, %v3477
        %v3479 = vrot.slane %v3478, 2
        %v3480 = vadd.f32 %v3478, %v3479
        %v3481 = vrot.slane %v3480, 1
        %v3482 = vadd.f32 %v3480, %v3481
        %v3483 = vmul.f32 %v3482, 0.015625
        %v3484 = vadd.f32 %v3483, 1e-05
        %v3485 = vrsqrt.pop %v3484
        %v3486 = vmul.f32 %v3485, %v3484
        %v3487 = vmul.f32 %v3486, %v3485
        %v3488 = vmul.f32 0.5, %v3487
        %v3489 = vsub.f32 1.5, %v3488
        %v3490 = vmul.f32 %v3485, %v3489
        %vm3491 = vweird.f32 %v3484
        %vm3492 = vweird.f32 %v3485
        %vm3493 = vmor %vm3491, %vm3492
        %v3494 = vsel %vm3493, %v3485, %v3490
        %v3495 = vmul.f32 %v3454, %v3494
        %v3496 = vmul.f32 %v3455, %v3494
        %v3497 = vmul.f32 %v3456, %v3494
        %v3498 = vmul.f32 %v3457, %v3494
        %v3499 = vmul.f32 %v3458, %v3494
        %v3500 = vmul.f32 %v3459, %v3494
        %v3501 = vmul.f32 %v3460, %v3494
        %v3502 = vmul.f32 %v3461, %v3494
        %v3503 = vadd.f32 %v3139, %v3495
        %v3504 = vadd.f32 %v3140, %v3496
        %v3505 = vadd.f32 %v3141, %v3497
        %v3506 = vadd.f32 %v3142, %v3498
        %v3507 = vadd.f32 %v3143, %v3499
        %v3508 = vadd.f32 %v3144, %v3500
        %v3509 = vadd.f32 %v3145, %v3501
        %v3510 = vadd.f32 %v3146, %v3502
        %v3511 = vmax.f32 %v3503, 0.0
        %v3512 = vmax.f32 %v3504, 0.0
        %v3513 = vmax.f32 %v3505, 0.0
        %v3514 = vmax.f32 %v3506, 0.0
        %v3515 = vmax.f32 %v3507, 0.0
        %v3516 = vmax.f32 %v3508, 0.0
        %v3517 = vmax.f32 %v3509, 0.0
        %v3518 = vmax.f32 %v3510, 0.0
        %3519 = vst [vmem:[%s261] sm:$0xff] %v3511
        %3520 = vst [vmem:[%s261 + $0x8] sm:$0xff] %v3512
        %3521 = vst [vmem:[%s261 + $0x10] sm:$0xff] %v3513
        %3522 = vst [vmem:[%s261 + $0x18] sm:$0xff] %v3514
        %3523 = vst [vmem:[%s261 + $0x20] sm:$0xff] %v3515
        %3524 = vst [vmem:[%s261 + $0x28] sm:$0xff] %v3516
        %3525 = vst [vmem:[%s261 + $0x30] sm:$0xff] %v3517
        %3526 = vst [vmem:[%s261 + $0x38] sm:$0xff] %v3518
        %s3527 = sand.u32 %s160, 1
        %s3528 = scalar_lea.sflag [#allocation5], %s3527
        %s3529 = sand.u32 %s160, 1
        %s3530 = smul.addr %s3529, 64
        %s3531 = scalar_lea.vmem [#allocation6], %s3530
        // Predicated region
        $region49: #{tpu_custom_call.1} parent=43 // pred_check
          %p3532 = pneg %p170
        $region50: #{tpu_custom_call.1} parent=43 // pred_check_branch
          %3534 = sbr.rel (%p3532) target = $region52
        $region51: #{tpu_custom_call.1} parent=43 // pred_region
          %3536 = vsyncadd %s3528, 0
          %s3537 = smul.addr %s21, 8
          %s3538 = smul.addr %s3537, 8
          %s3539 = scalar_lea.hbm %s6, %s3538
          %s3540 = sshll.u32 %s3531, 4
          %s3541 = int_to_ptr.vmem [resolvable:$true] %s3540
          %s3542 = sshll.u32 %s3539, 4
          %s3543 = int_to_ptr.hbm [resolvable:$true] %s3542
          %3548 = dma.vmem_to_hbm [thread:$0]  %s3541, 1024, %s3543, %s3528, 128, 128, 8
        $region52: #{tpu_custom_call.1} parent=43 // pred_fallthru
          _
      $region44: #{tpu_custom_call.1} parent=5 // pred_fallthru
        _
      %p3549 = scmp.le.s32.totalorder 2, %s16
      // Predicated region
      $region53: #{tpu_custom_call.1} parent=5 // pred_check
        %p3550 = pneg %p3549
      $region54: #{tpu_custom_call.1} parent=5 // pred_check_branch
        %3552 = sbr.rel (%p3550) target = $region56
      $region55: #{tpu_custom_call.1} parent=5 // pred_region
        %s3553 = ssub.s32 %s16, 2
        // Predicated region
        $region57: #{tpu_custom_call.1} parent=55 // pred_check
          %p3554 = pneg %p176
        $region58: #{tpu_custom_call.1} parent=55 // pred_check_branch
          %3556 = sbr.rel (%p3554) target = $region60
        $region59: #{tpu_custom_call.1} parent=55 // pred_region
          %s3557 = sand.u32 %s161, 1
          %s3558 = scalar_lea.sflag [#allocation5], %s3557
          %s3559 = sand.u32 %s161, 1
          %s3560 = smul.addr %s3559, 64
          %s3561 = scalar_lea.vmem [#allocation6], %s3560
          %3563 = dma.done %s3558, 1024
        $region60: #{tpu_custom_call.1} parent=55 // pred_fallthru
          _
      $region56: #{tpu_custom_call.1} parent=5 // pred_fallthru
        _
    $region6: #{tpu_custom_call.1} parent=1 // loop_footer
      %s20 = sadd.s32 1, %s16
    $region7: #{tpu_custom_call.1} parent=1 // loop_footer_branch
      %15 = sbr.rel target = $region3
    $region8: #{tpu_custom_call.1} parent=1 // loop_exit
      _
    %3564 = vsyncpa [#allocation4], 1
    %s3565 = scalar_lea.sflag [#allocation4], 1
    %3566 = vsyncpa %s3565, 1
    %3567 = vsyncpa [#allocation5], 1
    %s3568 = scalar_lea.sflag [#allocation5], 1
    %3569 = vsyncpa %s3568, 1

</llo_original>
